<compile_context>
chip_gen: v7x
topology: tpu7x:2x2x1
jax: 0.10.0
libtpu: 0.0.40
codegen_flags: <defaults>
</compile_context>

<pallas_src>
import jax
import jax.numpy as jnp
from jax import lax
from jax.experimental import pallas as pl
from jax.experimental.pallas import tpu as pltpu

MXU_DTYPE = jnp.bfloat16            # matmul operand dtype (f32 accumulate); jnp.float32 = exact ref
VMEM_SPEC = pl.BlockSpec(memory_space=pltpu.MemorySpace.VMEM)

_PT_GATE_ORDER = (0, 1, 3, 2)       # PyTorch row blocks [i, f, g, o] -> kernel order [i, f, o, g]


def _r8(n):
    return (n + 7) // 8 * 8


def packed_layout(D, H, hidden, C):
    """Row offsets of the packed parameter slabs (shared by packer and kernel)."""
    d_feat, d1, d2, d3 = 4 * H, 3 * hidden, 2 * hidden, hidden
    rnn_off, o = [], 0
    for r in (D, 2 * H, 2 * H, 2 * H):           # wi1, whh1, wi2, whh2
        rnn_off.append(o)
        o += _r8(r)
    rnn_total = o
    cls_off, o = [], 0
    for r in (d_feat, d1, d2, d3):               # w1, w2, w3, w4 (rows = input dim)
        cls_off.append(o)
        o += _r8(r)
    cls_total = o
    return dict(d_feat=d_feat, d1=d1, d2=d2, d3=d3,
                rnn_off=rnn_off, rnn_total=rnn_total,
                cls_off=cls_off, cls_total=cls_total,
                cls_width=max(d1, d2, d3, C),
                vec_width=max(8 * H, d1))


# ------------------------------ fully fused forward kernel ------------------------------
def make_visual_classifier_kernel(B, T, D, H, C, lay):
    f32 = jnp.float32
    cdt = MXU_DTYPE
    H2, H6, H8 = 2 * H, 6 * H, 8 * H
    d_feat, d1, d2, d3 = lay["d_feat"], lay["d1"], lay["d2"], lay["d3"]
    ro, co = lay["rnn_off"], lay["cls_off"]

    def kernel(x_ref, len_ref, rnn_w_ref, vec_ref, cls_w_ref,
               out_ref, feat_ref, hseq_scr):
        x = x_ref[...]                                     # (T, B, D) time-major, f32
        lens = len_ref[...].reshape(1, B, 1)               # (B,1) int32 -> (1,B,1)
        vec = vec_ref[...]                                 # (8, VW) f32 — all biases + LN params

        # ---- per-step validity masks, precomputed once (pack_padded_sequence semantics) ----
        # state lanes: [fwd H | bwd H]; at recurrence step t the fwd half consumes time t,
        # the bwd half consumes time T-1-t.
        t_io = lax.broadcasted_iota(jnp.int32, (T, B, H2), 0)
        lane2 = lax.broadcasted_iota(jnp.int32, (T, B, H2), 2)
        t_eff = jnp.where(lane2 < H, t_io, (T - 1) - t_io)
        step_mask = t_eff < lens                            # (T, B, 2H) bool

        # gate lane layout: [i_f, i_b, f_f, f_b, o_f, o_b, g_f, g_b] (H lanes each)
        lane8 = lax.broadcasted_iota(jnp.int32, (B, H8), 1)
        fwd_gate_lane = (lane8 % H2) < H                    # (B, 8H) bool, True on fwd blocks

        b1 = vec[0:1, 0:H8]
        b2 = vec[1:2, 0:H8]
        ln_g = vec[2:3, 0:H2].reshape(1, 1, H2)
        ln_b = vec[3:4, 0:H2].reshape(1, 1, H2)
        mb1 = vec[4:5, 0:d1]
        mb2 = vec[5:6, 0:d2]
        mb3 = vec[6:7, 0:d3]
        mb4 = vec[7:8, 0:C]

        wi1 = rnn_w_ref[ro[0]:ro[0] + D, :]                 # (D, 8H)   bf16
        whh1 = rnn_w_ref[ro[1]:ro[1] + H2, :]               # (2H, 8H)  block-diag fwd/bwd
        wi2 = rnn_w_ref[ro[2]:ro[2] + H2, :]                # (2H, 8H)
        whh2 = rnn_w_ref[ro[3]:ro[3] + H2, :]               # (2H, 8H)

        def run_bilstm(gates, whh, store_seq):
            # gates: (T, B, 8H) f32 input projections (+bias) per TIMESTEP.
            # Assemble per-RECURRENCE-STEP pre-activations off the serial chain:
            # fwd gate lanes come from time t, bwd gate lanes from time T-1-t.
            g_step = [jnp.where(fwd_gate_lane, gates[t], gates[T - 1 - t]) for t in range(T)]
            h = jnp.zeros((B, H2), f32)
            c = jnp.zeros((B, H2), f32)
            # T is small & static -> fully unrolled; only the single fused (B,2H)@(2H,8H)
            # matmul and the select/update ops sit on the serial dependency chain.
            for t in range(T):
                g = g_step[t] + jnp.dot(h.astype(cdt), whh, preferred_element_type=f32)
                sg = jax.nn.sigmoid(g[:, 0:H6])             # i,f,o of BOTH dirs — one EUP slab
                gg = jnp.tanh(g[:, H6:H8])                  # g of both dirs
                i_g = sg[:, 0:H2]
                f_g = sg[:, H2:2 * H2]
                o_g = sg[:, 2 * H2:3 * H2]
                c_new = f_g * c + i_g * gg
                h_new = o_g * jnp.tanh(c_new)
                m = step_mask[t]
                if store_seq:
                    # pad_packed_sequence: padded timesteps emit zeros (not the frozen state)
                    h_out = jnp.where(m, h_new, 0.0)
                    hseq_scr[t, :, 0:H] = h_out[:, 0:H]              # fwd output at time t
                    hseq_scr[T - 1 - t, :, H:H2] = h_out[:, H:H2]    # bwd output at time T-1-t
                h = jnp.where(m, h_new, h)                  # fwd: freeze after len; bwd: start at len-1
                c = jnp.where(m, c_new, c)
            return h                                        # (B, 2H) = [h_fwd_final | h_bwd_final]

        # ---- rnn1: hoisted, lane-dense input projection (T*B, D) @ (D, 8H=128) ----
        gates1 = (jnp.dot(x.reshape(T * B, D).astype(cdt), wi1,
                          preferred_element_type=f32) + b1).reshape(T, B, H8)
        h1 = run_bilstm(gates1, whh1, store_seq=True)

        # ---- LayerNorm over the padded rnn1 output sequence (normalize last dim 2H) ----
        hseq = hseq_scr[...]                                # (T, B, 2H) f32, read in place
        mu = jnp.mean(hseq, axis=-1, keepdims=True)
        var = jnp.mean(jnp.square(hseq - mu), axis=-1, keepdims=True)
        normed = (hseq - mu) * lax.rsqrt(var + 1e-5) * ln_g + ln_b

        # ---- rnn2: hoisted input projection on the normalized sequence ----
        gates2 = (jnp.dot(normed.reshape(T * B, H2).astype(cdt), wi2,
                          preferred_element_type=f32) + b2).reshape(T, B, H8)
        h2 = run_bilstm(gates2, whh2, store_seq=False)

        # features = cat(final_h1, final_h2, dim=2).permute(1,0,2).view(B,-1)
        feats = jnp.concatenate([h1[:, 0:H], h2[:, 0:H], h1[:, H:H2], h2[:, H:H2]], axis=-1)
        feat_ref[...] = feats

        # ---- classifier MLP (dropout = identity at inference, activation = ReLU) ----
        w1 = cls_w_ref[co[0]:co[0] + d_feat, 0:d1]
        w2 = cls_w_ref[co[1]:co[1] + d1, 0:d2]
        w3 = cls_w_ref[co[2]:co[2] + d2, 0:d3]
        w4 = cls_w_ref[co[3]:co[3] + d3, 0:C]
        a = jnp.maximum(jnp.dot(feats.astype(cdt), w1, preferred_element_type=f32) + mb1, 0.0)
        a = jnp.maximum(jnp.dot(a.astype(cdt), w2, preferred_element_type=f32) + mb2, 0.0)
        a = jnp.maximum(jnp.dot(a.astype(cdt), w3, preferred_element_type=f32) + mb3, 0.0)
        out_ref[...] = jnp.dot(a.astype(cdt), w4, preferred_element_type=f32) + mb4

    return kernel


def visual_classifier_forward(video, lengths, packed, H, hidden, num_classes):
    B, T, D = video.shape
    lay = packed["layout"]
    x_tm = jnp.transpose(video, (1, 0, 2))       # time-major once, outside the recurrence
    kernel = make_visual_classifier_kernel(B, T, D, H, num_classes, lay)
    out, feats = pl.pallas_call(
        kernel,
        out_shape=(jax.ShapeDtypeStruct((B, num_classes), jnp.float32),
                   jax.ShapeDtypeStruct((B, 4 * H), jnp.float32)),
        in_specs=[VMEM_SPEC] * 5,
        out_specs=(VMEM_SPEC, VMEM_SPEC),
        scratch_shapes=[pltpu.VMEM((T, B, 2 * H), jnp.float32)],
        compiler_params=pltpu.CompilerParams(vmem_limit_bytes=8 * 1024 * 1024),
    )(x_tm, lengths, packed["rnn_w"], packed["vec"], packed["cls_w"])
    return out, feats


# --------------------------------------- params -----------------------------------------
def init_raw_params(key, D, H, hidden, C):
    """Raw parameters in PyTorch LSTM convention (for a documented import path)."""
    ks = iter(jax.random.split(key, 32))

    def nrm(shape, scale=0.1):
        return (scale * jax.random.normal(next(ks), shape)).astype(jnp.float32)

    def lstm_dir(in_dim):
        # (4H, in)/(4H, H) weights, gate row order [i, f, g, o], two bias vectors.
        return dict(w_ih=nrm((4 * H, in_dim)), w_hh=nrm((4 * H, H)),
                    b_ih=nrm((4 * H,)), b_hh=nrm((4 * H,)))

    return dict(
        rnn1=dict(f=lstm_dir(D), b=lstm_dir(D)),
        rnn2=dict(f=lstm_dir(2 * H), b=lstm_dir(2 * H)),
        ln_g=jnp.ones((2 * H,), jnp.float32) + nrm((2 * H,), 0.01),
        ln_b=nrm((2 * H,), 0.01),
        cls=dict(w1=nrm((4 * H, hidden * 3)), b1=nrm((hidden * 3,)),
                 w2=nrm((hidden * 3, hidden * 2)), b2=nrm((hidden * 2,)),
                 w3=nrm((hidden * 2, hidden)), b3=nrm((hidden,)),
                 w4=nrm((hidden, C)), b4=nrm((C,))),
    )


def _pack_bilstm(dir_f, dir_b, H):
    """PyTorch per-direction LSTM weights -> kernel layout:
    gate lanes [i_f,i_b,f_f,f_b,o_f,o_b,g_f,g_b], state lanes [fwd|bwd],
    block-diagonal Whh (2H, 8H), fused bias b_ih + b_hh (1, 8H)."""
    def blk(v, g):
        return v[g * H:(g + 1) * H]

    b_f = dir_f["b_ih"] + dir_f["b_hh"]
    b_b = dir_b["b_ih"] + dir_b["b_hh"]
    zH = jnp.zeros((H, H), jnp.float32)
    wi_cols, wh_top, wh_bot, bias = [], [], [], []
    for g in _PT_GATE_ORDER:
        wi_cols += [blk(dir_f["w_ih"], g).T, blk(dir_b["w_ih"], g).T]
        wh_top += [blk(dir_f["w_hh"], g).T, zH]          # rows 0:H  multiply h_fwd
        wh_bot += [zH, blk(dir_b["w_hh"], g).T]          # rows H:2H multiply h_bwd
        bias += [blk(b_f, g), blk(b_b, g)]
    wi = jnp.concatenate(wi_cols, axis=1)                # (in, 8H)
    whh = jnp.concatenate([jnp.concatenate(wh_top, axis=1),
                           jnp.concatenate(wh_bot, axis=1)], axis=0)   # (2H, 8H)
    b = jnp.concatenate(bias).reshape(1, 8 * H)
    return wi, whh, b


def pack_params(raw, D, H, hidden, C):
    lay = packed_layout(D, H, hidden, C)
    wi1, whh1, b1 = _pack_bilstm(raw["rnn1"]["f"], raw["rnn1"]["b"], H)
    wi2, whh2, b2 = _pack_bilstm(raw["rnn2"]["f"], raw["rnn2"]["b"], H)

    # --- all RNN weight matrices: one (rows, 8H=128) slab, 8-aligned row offsets ---
    rnn_w = jnp.zeros((lay["rnn_total"], 8 * H), jnp.float32)
    for off, w in zip(lay["rnn_off"], (wi1, whh1, wi2, whh2)):
        rnn_w = rnn_w.at[off:off + w.shape[0], :].set(w)

    # --- all biases + LayerNorm params: one (8, vec_width) f32 slab (single VMEM tile) ---
    vec = jnp.zeros((8, lay["vec_width"]), jnp.float32)
    for r, v in enumerate([b1[0], b2[0], raw["ln_g"], raw["ln_b"],
                           raw["cls"]["b1"], raw["cls"]["b2"],
                           raw["cls"]["b3"], raw["cls"]["b4"]]):
        vec = vec.at[r, 0:v.shape[0]].set(v)

    # --- all classifier weights: one (rows, cls_width) slab ---
    cls_w = jnp.zeros((lay["cls_total"], lay["cls_width"]), jnp.float32)
    for off, w in zip(lay["cls_off"], (raw["cls"]["w1"], raw["cls"]["w2"],
                                       raw["cls"]["w3"], raw["cls"]["w4"])):
        cls_w = cls_w.at[off:off + w.shape[0], 0:w.shape[1]].set(w)

    return dict(layout=lay,
                rnn_w=rnn_w.astype(MXU_DTYPE),
                vec=vec,
                cls_w=cls_w.astype(MXU_DTYPE))


if __name__ == "__main__":
    # config: visual_size=16, hidden_size=32, num_classes=4, rnncell='lstm', activation=ReLU
    B, T, D = 2, 8, 16
    H = D                    # LSTM hidden == visual_size
    HIDDEN = 32              # config.hidden_size (classifier width)
    NUM_CLASSES = 4

    key = jax.random.PRNGKey(0)
    k_x, k_p = jax.random.split(key)
    video = jax.random.normal(k_x, (B, T, D), dtype=jnp.float32)
    lengths = jnp.array([[T], [T - 2]], dtype=jnp.int32)   # sorted-decreasing valid lengths
    assert int(lengths.min()) >= 1, "pack_padded_sequence requires lengths >= 1"

    raw = init_raw_params(k_p, D, H, HIDDEN, NUM_CLASSES)
    packed = pack_params(raw, D, H, HIDDEN, NUM_CLASSES)

    out, features = visual_classifier_forward(video, lengths, packed, H, HIDDEN, NUM_CLASSES)
    out = jax.block_until_ready(out)
    features = jax.block_until_ready(features)

    assert out.shape == (B, NUM_CLASSES), out.shape
    assert features.shape == (B, 4 * H), features.shape
    assert bool(jnp.all(jnp.isfinite(out))) and bool(jnp.all(jnp.isfinite(features)))
    print("KERNEL_OK")
</pallas_src>

<mosaic_0001>
module attributes {stable_mosaic.version = 11 : i64} {
  func.func @kernel(%arg0: memref<8x2x16xf32, #tpu.memory_space<vmem>>, %arg1: memref<2x1xi32, #tpu.memory_space<vmem>>, %arg2: memref<112x128xbf16, #tpu.memory_space<vmem>>, %arg3: memref<8x128xf32, #tpu.memory_space<vmem>>, %arg4: memref<256x96xbf16, #tpu.memory_space<vmem>>, %arg5: memref<2x4xf32, #tpu.memory_space<vmem>>, %arg6: memref<2x64xf32, #tpu.memory_space<vmem>>, %arg7: memref<8x2x32xf32, #tpu.memory_space<vmem>>) attributes {dimension_semantics = [], scalar_prefetch = 0 : i64, scratch_operands = 1 : i64, tpu.core_type = #tpu.core_type<tc>} {
    %c0 = arith.constant 0 : index
    %c0_0 = arith.constant 0 : index
    %c0_1 = arith.constant 0 : index
    %0 = vector.load %arg0[%c0, %c0_0, %c0_1] : memref<8x2x16xf32, #tpu.memory_space<vmem>>, vector<8x2x16xf32>
    %c0_2 = arith.constant 0 : index
    %c0_3 = arith.constant 0 : index
    %1 = vector.load %arg1[%c0_2, %c0_3] : memref<2x1xi32, #tpu.memory_space<vmem>>, vector<2x1xi32>
    %2 = vector.shape_cast %1 : vector<2x1xi32> to vector<1x2x1xi32>
    %c0_4 = arith.constant 0 : index
    %c0_5 = arith.constant 0 : index
    %3 = vector.load %arg3[%c0_4, %c0_5] : memref<8x128xf32, #tpu.memory_space<vmem>>, vector<8x128xf32>
    %4 = tpu.iota {dimensions = array<i32: 0>} : vector<8x2x32xi32>
    %5 = tpu.iota {dimensions = array<i32: 2>} : vector<8x2x32xi32>
    %c16_i32 = arith.constant 16 : i32
    %6 = vector.broadcast %c16_i32 : i32 to vector<8x2x32xi32>
    %7 = arith.cmpi slt, %5, %6 : vector<8x2x32xi32>
    %c7_i32 = arith.constant 7 : i32
    %8 = vector.broadcast %c7_i32 : i32 to vector<8x2x32xi32>
    %9 = arith.subi %8, %4 : vector<8x2x32xi32>
    %10 = arith.select %7, %4, %9 : vector<8x2x32xi1>, vector<8x2x32xi32>
    %11 = vector.broadcast %2 : vector<1x2x1xi32> to vector<8x2x32xi32>
    %12 = arith.cmpi slt, %10, %11 : vector<8x2x32xi32>
    %13 = tpu.iota {dimensions = array<i32: 1>} : vector<2x128xi32>
    %c32_i32 = arith.constant 32 : i32
    %c0_i32 = arith.constant 0 : i32
    %14 = arith.cmpi eq, %c32_i32, %c0_i32 : i32
    %c1_i32 = arith.constant 1 : i32
    %15 = arith.select %14, %c1_i32, %c32_i32 : i32
    %16 = vector.broadcast %15 : i32 to vector<2x128xi32>
    %17 = arith.remsi %13, %16 : vector<2x128xi32>
    %c0_i32_6 = arith.constant 0 : i32
    %18 = vector.broadcast %c0_i32_6 : i32 to vector<2x128xi32>
    %19 = arith.cmpi ne, %17, %18 : vector<2x128xi32>
    %c0_i32_7 = arith.constant 0 : i32
    %20 = vector.broadcast %c0_i32_7 : i32 to vector<2x128xi32>
    %21 = arith.cmpi slt, %17, %20 : vector<2x128xi32>
    %c0_i32_8 = arith.constant 0 : i32
    %22 = arith.cmpi slt, %15, %c0_i32_8 : i32
    %23 = vector.broadcast %22 : i1 to vector<2x128xi1>
    %24 = vector.broadcast %23 : vector<2x128xi1> to vector<2x128xi1>
    %25 = arith.xori %21, %24 : vector<2x128xi1>
    %26 = arith.andi %25, %19 : vector<2x128xi1>
    %27 = vector.broadcast %15 : i32 to vector<2x128xi32>
    %28 = arith.addi %17, %27 : vector<2x128xi32>
    %29 = arith.select %26, %28, %17 : vector<2x128xi1>, vector<2x128xi32>
    %c16_i32_9 = arith.constant 16 : i32
    %30 = vector.broadcast %c16_i32_9 : i32 to vector<2x128xi32>
    %31 = arith.cmpi slt, %29, %30 : vector<2x128xi32>
    %32 = vector.extract_strided_slice %3 {offsets = [0, 0], sizes = [1, 128], strides = [1, 1]} : vector<8x128xf32> to vector<1x128xf32>
    %33 = vector.extract_strided_slice %3 {offsets = [1, 0], sizes = [1, 128], strides = [1, 1]} : vector<8x128xf32> to vector<1x128xf32>
    %34 = vector.extract_strided_slice %3 {offsets = [2, 0], sizes = [1, 32], strides = [1, 1]} : vector<8x128xf32> to vector<1x32xf32>
    %35 = vector.shape_cast %34 : vector<1x32xf32> to vector<1x1x32xf32>
    %36 = vector.extract_strided_slice %3 {offsets = [3, 0], sizes = [1, 32], strides = [1, 1]} : vector<8x128xf32> to vector<1x32xf32>
    %37 = vector.shape_cast %36 : vector<1x32xf32> to vector<1x1x32xf32>
    %38 = vector.extract_strided_slice %3 {offsets = [4, 0], sizes = [1, 96], strides = [1, 1]} : vector<8x128xf32> to vector<1x96xf32>
    %39 = vector.extract_strided_slice %3 {offsets = [5, 0], sizes = [1, 64], strides = [1, 1]} : vector<8x128xf32> to vector<1x64xf32>
    %40 = vector.extract_strided_slice %3 {offsets = [6, 0], sizes = [1, 32], strides = [1, 1]} : vector<8x128xf32> to vector<1x32xf32>
    %41 = vector.extract_strided_slice %3 {offsets = [7, 0], sizes = [1, 4], strides = [1, 1]} : vector<8x128xf32> to vector<1x4xf32>
    %c0_10 = arith.constant 0 : index
    %c0_11 = arith.constant 0 : index
    %42 = vector.load %arg2[%c0_10, %c0_11] : memref<112x128xbf16, #tpu.memory_space<vmem>>, vector<16x128xbf16>
    %c16 = arith.constant 16 : index
    %c0_12 = arith.constant 0 : index
    %43 = vector.load %arg2[%c16, %c0_12] : memref<112x128xbf16, #tpu.memory_space<vmem>>, vector<32x128xbf16>
    %c48 = arith.constant 48 : index
    %c0_13 = arith.constant 0 : index
    %44 = vector.load %arg2[%c48, %c0_13] : memref<112x128xbf16, #tpu.memory_space<vmem>>, vector<32x128xbf16>
    %c80 = arith.constant 80 : index
    %c0_14 = arith.constant 0 : index
    %45 = vector.load %arg2[%c80, %c0_14] : memref<112x128xbf16, #tpu.memory_space<vmem>>, vector<32x128xbf16>
    %46 = vector.shape_cast %0 : vector<8x2x16xf32> to vector<16x16xf32>
    %47 = arith.truncf %46 : vector<16x16xf32> to vector<16x16xbf16>
    %cst = arith.constant dense<0.000000e+00> : vector<16x128xf32>
    %48 = tpu.matmul %47, %42, %cst {dimension_numbers = #tpu.dot_dimension_numbers<[1], [0], [0], [1], [0, 0, 1, 1], [], []>} : vector<16x16xbf16>, vector<16x128xbf16>, vector<16x128xf32> -> vector<16x128xf32>
    %49 = vector.broadcast %32 : vector<1x128xf32> to vector<16x128xf32>
    %50 = arith.addf %48, %49 : vector<16x128xf32>
    %51 = vector.shape_cast %50 : vector<16x128xf32> to vector<8x2x128xf32>
    %52 = vector.extract_strided_slice %51 {offsets = [0, 0, 0], sizes = [1, 2, 128], strides = [1, 1, 1]} : vector<8x2x128xf32> to vector<1x2x128xf32>
    %53 = vector.shape_cast %52 : vector<1x2x128xf32> to vector<2x128xf32>
    %54 = vector.extract_strided_slice %51 {offsets = [7, 0, 0], sizes = [1, 2, 128], strides = [1, 1, 1]} : vector<8x2x128xf32> to vector<1x2x128xf32>
    %55 = vector.shape_cast %54 : vector<1x2x128xf32> to vector<2x128xf32>
    %56 = arith.select %31, %53, %55 : vector<2x128xi1>, vector<2x128xf32>
    %57 = vector.extract_strided_slice %51 {offsets = [1, 0, 0], sizes = [1, 2, 128], strides = [1, 1, 1]} : vector<8x2x128xf32> to vector<1x2x128xf32>
    %58 = vector.shape_cast %57 : vector<1x2x128xf32> to vector<2x128xf32>
    %59 = vector.extract_strided_slice %51 {offsets = [6, 0, 0], sizes = [1, 2, 128], strides = [1, 1, 1]} : vector<8x2x128xf32> to vector<1x2x128xf32>
    %60 = vector.shape_cast %59 : vector<1x2x128xf32> to vector<2x128xf32>
    %61 = arith.select %31, %58, %60 : vector<2x128xi1>, vector<2x128xf32>
    %62 = vector.extract_strided_slice %51 {offsets = [2, 0, 0], sizes = [1, 2, 128], strides = [1, 1, 1]} : vector<8x2x128xf32> to vector<1x2x128xf32>
    %63 = vector.shape_cast %62 : vector<1x2x128xf32> to vector<2x128xf32>
    %64 = vector.extract_strided_slice %51 {offsets = [5, 0, 0], sizes = [1, 2, 128], strides = [1, 1, 1]} : vector<8x2x128xf32> to vector<1x2x128xf32>
    %65 = vector.shape_cast %64 : vector<1x2x128xf32> to vector<2x128xf32>
    %66 = arith.select %31, %63, %65 : vector<2x128xi1>, vector<2x128xf32>
    %67 = vector.extract_strided_slice %51 {offsets = [3, 0, 0], sizes = [1, 2, 128], strides = [1, 1, 1]} : vector<8x2x128xf32> to vector<1x2x128xf32>
    %68 = vector.shape_cast %67 : vector<1x2x128xf32> to vector<2x128xf32>
    %69 = vector.extract_strided_slice %51 {offsets = [4, 0, 0], sizes = [1, 2, 128], strides = [1, 1, 1]} : vector<8x2x128xf32> to vector<1x2x128xf32>
    %70 = vector.shape_cast %69 : vector<1x2x128xf32> to vector<2x128xf32>
    %71 = arith.select %31, %68, %70 : vector<2x128xi1>, vector<2x128xf32>
    %72 = vector.extract_strided_slice %51 {offsets = [4, 0, 0], sizes = [1, 2, 128], strides = [1, 1, 1]} : vector<8x2x128xf32> to vector<1x2x128xf32>
    %73 = vector.shape_cast %72 : vector<1x2x128xf32> to vector<2x128xf32>
    %74 = vector.extract_strided_slice %51 {offsets = [3, 0, 0], sizes = [1, 2, 128], strides = [1, 1, 1]} : vector<8x2x128xf32> to vector<1x2x128xf32>
    %75 = vector.shape_cast %74 : vector<1x2x128xf32> to vector<2x128xf32>
    %76 = arith.select %31, %73, %75 : vector<2x128xi1>, vector<2x128xf32>
    %77 = vector.extract_strided_slice %51 {offsets = [5, 0, 0], sizes = [1, 2, 128], strides = [1, 1, 1]} : vector<8x2x128xf32> to vector<1x2x128xf32>
    %78 = vector.shape_cast %77 : vector<1x2x128xf32> to vector<2x128xf32>
    %79 = vector.extract_strided_slice %51 {offsets = [2, 0, 0], sizes = [1, 2, 128], strides = [1, 1, 1]} : vector<8x2x128xf32> to vector<1x2x128xf32>
    %80 = vector.shape_cast %79 : vector<1x2x128xf32> to vector<2x128xf32>
    %81 = arith.select %31, %78, %80 : vector<2x128xi1>, vector<2x128xf32>
    %82 = vector.extract_strided_slice %51 {offsets = [6, 0, 0], sizes = [1, 2, 128], strides = [1, 1, 1]} : vector<8x2x128xf32> to vector<1x2x128xf32>
    %83 = vector.shape_cast %82 : vector<1x2x128xf32> to vector<2x128xf32>
    %84 = vector.extract_strided_slice %51 {offsets = [1, 0, 0], sizes = [1, 2, 128], strides = [1, 1, 1]} : vector<8x2x128xf32> to vector<1x2x128xf32>
    %85 = vector.shape_cast %84 : vector<1x2x128xf32> to vector<2x128xf32>
    %86 = arith.select %31, %83, %85 : vector<2x128xi1>, vector<2x128xf32>
    %87 = vector.extract_strided_slice %51 {offsets = [7, 0, 0], sizes = [1, 2, 128], strides = [1, 1, 1]} : vector<8x2x128xf32> to vector<1x2x128xf32>
    %88 = vector.shape_cast %87 : vector<1x2x128xf32> to vector<2x128xf32>
    %89 = vector.extract_strided_slice %51 {offsets = [0, 0, 0], sizes = [1, 2, 128], strides = [1, 1, 1]} : vector<8x2x128xf32> to vector<1x2x128xf32>
    %90 = vector.shape_cast %89 : vector<1x2x128xf32> to vector<2x128xf32>
    %91 = arith.select %31, %88, %90 : vector<2x128xi1>, vector<2x128xf32>
    %cst_15 = arith.constant 0.000000e+00 : f32
    %92 = vector.broadcast %cst_15 : f32 to vector<2x32xf32>
    %cst_16 = arith.constant 0.000000e+00 : f32
    %93 = vector.broadcast %cst_16 : f32 to vector<2x32xf32>
    %94 = arith.truncf %92 : vector<2x32xf32> to vector<2x32xbf16>
    %cst_17 = arith.constant dense<0.000000e+00> : vector<2x128xf32>
    %95 = tpu.matmul %94, %43, %cst_17 {dimension_numbers = #tpu.dot_dimension_numbers<[1], [0], [0], [1], [0, 0, 1, 1], [], []>} : vector<2x32xbf16>, vector<32x128xbf16>, vector<2x128xf32> -> vector<2x128xf32>
    %96 = arith.addf %56, %95 : vector<2x128xf32>
    %97 = vector.extract_strided_slice %96 {offsets = [0, 0], sizes = [2, 96], strides = [1, 1]} : vector<2x128xf32> to vector<2x96xf32>
    %98 = arith.negf %97 : vector<2x96xf32>
    %99 = math.exp %98 : vector<2x96xf32>
    %cst_18 = arith.constant 1.000000e+00 : f32
    %100 = vector.broadcast %cst_18 : f32 to vector<2x96xf32>
    %101 = arith.addf %100, %99 : vector<2x96xf32>
    %102 = arith.divf %100, %101 : vector<2x96xf32>
    %103 = vector.extract_strided_slice %96 {offsets = [0, 96], sizes = [2, 32], strides = [1, 1]} : vector<2x128xf32> to vector<2x32xf32>
    %104 = math.tanh %103 : vector<2x32xf32>
    %105 = vector.extract_strided_slice %102 {offsets = [0, 0], sizes = [2, 32], strides = [1, 1]} : vector<2x96xf32> to vector<2x32xf32>
    %106 = vector.extract_strided_slice %102 {offsets = [0, 32], sizes = [2, 32], strides = [1, 1]} : vector<2x96xf32> to vector<2x32xf32>
    %107 = vector.extract_strided_slice %102 {offsets = [0, 64], sizes = [2, 32], strides = [1, 1]} : vector<2x96xf32> to vector<2x32xf32>
    %108 = arith.mulf %106, %93 : vector<2x32xf32>
    %109 = arith.mulf %105, %104 : vector<2x32xf32>
    %110 = arith.addf %108, %109 : vector<2x32xf32>
    %111 = math.tanh %110 : vector<2x32xf32>
    %112 = arith.mulf %107, %111 : vector<2x32xf32>
    %113 = vector.extract_strided_slice %12 {offsets = [0, 0, 0], sizes = [1, 2, 32], strides = [1, 1, 1]} : vector<8x2x32xi1> to vector<1x2x32xi1>
    %114 = vector.shape_cast %113 : vector<1x2x32xi1> to vector<2x32xi1>
    %cst_19 = arith.constant 0.000000e+00 : f32
    %115 = vector.broadcast %cst_19 : f32 to vector<2x32xf32>
    %116 = arith.select %114, %112, %115 : vector<2x32xi1>, vector<2x32xf32>
    %117 = vector.extract_strided_slice %116 {offsets = [0, 0], sizes = [2, 16], strides = [1, 1]} : vector<2x32xf32> to vector<2x16xf32>
    %c0_20 = arith.constant 0 : index
    %c0_21 = arith.constant 0 : index
    %c0_22 = arith.constant 0 : index
    %118 = vector.load %arg7[%c0_20, %c0_21, %c0_22] : memref<8x2x32xf32, #tpu.memory_space<vmem>>, vector<1x2x16xf32>
    %119 = vector.shape_cast %118 : vector<1x2x16xf32> to vector<2x16xf32>
    %120 = vector.shape_cast %117 : vector<2x16xf32> to vector<1x2x16xf32>
    tpu.vector_store %arg7[%c0_20, %c0_21, %c0_22], %120 {strides = array<i32>} : memref<8x2x32xf32, #tpu.memory_space<vmem>>, vector<1x2x16xf32>,
    %121 = vector.extract_strided_slice %116 {offsets = [0, 16], sizes = [2, 16], strides = [1, 1]} : vector<2x32xf32> to vector<2x16xf32>
    %c7 = arith.constant 7 : index
    %c0_23 = arith.constant 0 : index
    %c16_24 = arith.constant 16 : index
    %122 = vector.load %arg7[%c7, %c0_23, %c16_24] : memref<8x2x32xf32, #tpu.memory_space<vmem>>, vector<1x2x16xf32>
    %123 = vector.shape_cast %122 : vector<1x2x16xf32> to vector<2x16xf32>
    %124 = vector.shape_cast %121 : vector<2x16xf32> to vector<1x2x16xf32>
    tpu.vector_store %arg7[%c7, %c0_23, %c16_24], %124 {strides = array<i32>} : memref<8x2x32xf32, #tpu.memory_space<vmem>>, vector<1x2x16xf32>,
    %125 = arith.select %114, %112, %92 : vector<2x32xi1>, vector<2x32xf32>
    %126 = arith.select %114, %110, %93 : vector<2x32xi1>, vector<2x32xf32>
    %127 = arith.truncf %125 : vector<2x32xf32> to vector<2x32xbf16>
    %cst_25 = arith.constant dense<0.000000e+00> : vector<2x128xf32>
    %128 = tpu.matmul %127, %43, %cst_25 {dimension_numbers = #tpu.dot_dimension_numbers<[1], [0], [0], [1], [0, 0, 1, 1], [], []>} : vector<2x32xbf16>, vector<32x128xbf16>, vector<2x128xf32> -> vector<2x128xf32>
    %129 = arith.addf %61, %128 : vector<2x128xf32>
    %130 = vector.extract_strided_slice %129 {offsets = [0, 0], sizes = [2, 96], strides = [1, 1]} : vector<2x128xf32> to vector<2x96xf32>
    %131 = arith.negf %130 : vector<2x96xf32>
    %132 = math.exp %131 : vector<2x96xf32>
    %cst_26 = arith.constant 1.000000e+00 : f32
    %133 = vector.broadcast %cst_26 : f32 to vector<2x96xf32>
    %134 = arith.addf %133, %132 : vector<2x96xf32>
    %135 = arith.divf %133, %134 : vector<2x96xf32>
    %136 = vector.extract_strided_slice %129 {offsets = [0, 96], sizes = [2, 32], strides = [1, 1]} : vector<2x128xf32> to vector<2x32xf32>
    %137 = math.tanh %136 : vector<2x32xf32>
    %138 = vector.extract_strided_slice %135 {offsets = [0, 0], sizes = [2, 32], strides = [1, 1]} : vector<2x96xf32> to vector<2x32xf32>
    %139 = vector.extract_strided_slice %135 {offsets = [0, 32], sizes = [2, 32], strides = [1, 1]} : vector<2x96xf32> to vector<2x32xf32>
    %140 = vector.extract_strided_slice %135 {offsets = [0, 64], sizes = [2, 32], strides = [1, 1]} : vector<2x96xf32> to vector<2x32xf32>
    %141 = arith.mulf %139, %126 : vector<2x32xf32>
    %142 = arith.mulf %138, %137 : vector<2x32xf32>
    %143 = arith.addf %141, %142 : vector<2x32xf32>
    %144 = math.tanh %143 : vector<2x32xf32>
    %145 = arith.mulf %140, %144 : vector<2x32xf32>
    %146 = vector.extract_strided_slice %12 {offsets = [1, 0, 0], sizes = [1, 2, 32], strides = [1, 1, 1]} : vector<8x2x32xi1> to vector<1x2x32xi1>
    %147 = vector.shape_cast %146 : vector<1x2x32xi1> to vector<2x32xi1>
    %cst_27 = arith.constant 0.000000e+00 : f32
    %148 = vector.broadcast %cst_27 : f32 to vector<2x32xf32>
    %149 = arith.select %147, %145, %148 : vector<2x32xi1>, vector<2x32xf32>
    %150 = vector.extract_strided_slice %149 {offsets = [0, 0], sizes = [2, 16], strides = [1, 1]} : vector<2x32xf32> to vector<2x16xf32>
    %c1 = arith.constant 1 : index
    %c0_28 = arith.constant 0 : index
    %c0_29 = arith.constant 0 : index
    %151 = vector.load %arg7[%c1, %c0_28, %c0_29] : memref<8x2x32xf32, #tpu.memory_space<vmem>>, vector<1x2x16xf32>
    %152 = vector.shape_cast %151 : vector<1x2x16xf32> to vector<2x16xf32>
    %153 = vector.shape_cast %150 : vector<2x16xf32> to vector<1x2x16xf32>
    tpu.vector_store %arg7[%c1, %c0_28, %c0_29], %153 {strides = array<i32>} : memref<8x2x32xf32, #tpu.memory_space<vmem>>, vector<1x2x16xf32>,
    %154 = vector.extract_strided_slice %149 {offsets = [0, 16], sizes = [2, 16], strides = [1, 1]} : vector<2x32xf32> to vector<2x16xf32>
    %c6 = arith.constant 6 : index
    %c0_30 = arith.constant 0 : index
    %c16_31 = arith.constant 16 : index
    %155 = vector.load %arg7[%c6, %c0_30, %c16_31] : memref<8x2x32xf32, #tpu.memory_space<vmem>>, vector<1x2x16xf32>
    %156 = vector.shape_cast %155 : vector<1x2x16xf32> to vector<2x16xf32>
    %157 = vector.shape_cast %154 : vector<2x16xf32> to vector<1x2x16xf32>
    tpu.vector_store %arg7[%c6, %c0_30, %c16_31], %157 {strides = array<i32>} : memref<8x2x32xf32, #tpu.memory_space<vmem>>, vector<1x2x16xf32>,
    %158 = arith.select %147, %145, %125 : vector<2x32xi1>, vector<2x32xf32>
    %159 = arith.select %147, %143, %126 : vector<2x32xi1>, vector<2x32xf32>
    %160 = arith.truncf %158 : vector<2x32xf32> to vector<2x32xbf16>
    %cst_32 = arith.constant dense<0.000000e+00> : vector<2x128xf32>
    %161 = tpu.matmul %160, %43, %cst_32 {dimension_numbers = #tpu.dot_dimension_numbers<[1], [0], [0], [1], [0, 0, 1, 1], [], []>} : vector<2x32xbf16>, vector<32x128xbf16>, vector<2x128xf32> -> vector<2x128xf32>
    %162 = arith.addf %66, %161 : vector<2x128xf32>
    %163 = vector.extract_strided_slice %162 {offsets = [0, 0], sizes = [2, 96], strides = [1, 1]} : vector<2x128xf32> to vector<2x96xf32>
    %164 = arith.negf %163 : vector<2x96xf32>
    %165 = math.exp %164 : vector<2x96xf32>
    %cst_33 = arith.constant 1.000000e+00 : f32
    %166 = vector.broadcast %cst_33 : f32 to vector<2x96xf32>
    %167 = arith.addf %166, %165 : vector<2x96xf32>
    %168 = arith.divf %166, %167 : vector<2x96xf32>
    %169 = vector.extract_strided_slice %162 {offsets = [0, 96], sizes = [2, 32], strides = [1, 1]} : vector<2x128xf32> to vector<2x32xf32>
    %170 = math.tanh %169 : vector<2x32xf32>
    %171 = vector.extract_strided_slice %168 {offsets = [0, 0], sizes = [2, 32], strides = [1, 1]} : vector<2x96xf32> to vector<2x32xf32>
    %172 = vector.extract_strided_slice %168 {offsets = [0, 32], sizes = [2, 32], strides = [1, 1]} : vector<2x96xf32> to vector<2x32xf32>
    %173 = vector.extract_strided_slice %168 {offsets = [0, 64], sizes = [2, 32], strides = [1, 1]} : vector<2x96xf32> to vector<2x32xf32>
    %174 = arith.mulf %172, %159 : vector<2x32xf32>
    %175 = arith.mulf %171, %170 : vector<2x32xf32>
    %176 = arith.addf %174, %175 : vector<2x32xf32>
    %177 = math.tanh %176 : vector<2x32xf32>
    %178 = arith.mulf %173, %177 : vector<2x32xf32>
    %179 = vector.extract_strided_slice %12 {offsets = [2, 0, 0], sizes = [1, 2, 32], strides = [1, 1, 1]} : vector<8x2x32xi1> to vector<1x2x32xi1>
    %180 = vector.shape_cast %179 : vector<1x2x32xi1> to vector<2x32xi1>
    %cst_34 = arith.constant 0.000000e+00 : f32
    %181 = vector.broadcast %cst_34 : f32 to vector<2x32xf32>
    %182 = arith.select %180, %178, %181 : vector<2x32xi1>, vector<2x32xf32>
    %183 = vector.extract_strided_slice %182 {offsets = [0, 0], sizes = [2, 16], strides = [1, 1]} : vector<2x32xf32> to vector<2x16xf32>
    %c2 = arith.constant 2 : index
    %c0_35 = arith.constant 0 : index
    %c0_36 = arith.constant 0 : index
    %184 = vector.load %arg7[%c2, %c0_35, %c0_36] : memref<8x2x32xf32, #tpu.memory_space<vmem>>, vector<1x2x16xf32>
    %185 = vector.shape_cast %184 : vector<1x2x16xf32> to vector<2x16xf32>
    %186 = vector.shape_cast %183 : vector<2x16xf32> to vector<1x2x16xf32>
    tpu.vector_store %arg7[%c2, %c0_35, %c0_36], %186 {strides = array<i32>} : memref<8x2x32xf32, #tpu.memory_space<vmem>>, vector<1x2x16xf32>,
    %187 = vector.extract_strided_slice %182 {offsets = [0, 16], sizes = [2, 16], strides = [1, 1]} : vector<2x32xf32> to vector<2x16xf32>
    %c5 = arith.constant 5 : index
    %c0_37 = arith.constant 0 : index
    %c16_38 = arith.constant 16 : index
    %188 = vector.load %arg7[%c5, %c0_37, %c16_38] : memref<8x2x32xf32, #tpu.memory_space<vmem>>, vector<1x2x16xf32>
    %189 = vector.shape_cast %188 : vector<1x2x16xf32> to vector<2x16xf32>
    %190 = vector.shape_cast %187 : vector<2x16xf32> to vector<1x2x16xf32>
    tpu.vector_store %arg7[%c5, %c0_37, %c16_38], %190 {strides = array<i32>} : memref<8x2x32xf32, #tpu.memory_space<vmem>>, vector<1x2x16xf32>,
    %191 = arith.select %180, %178, %158 : vector<2x32xi1>, vector<2x32xf32>
    %192 = arith.select %180, %176, %159 : vector<2x32xi1>, vector<2x32xf32>
    %193 = arith.truncf %191 : vector<2x32xf32> to vector<2x32xbf16>
    %cst_39 = arith.constant dense<0.000000e+00> : vector<2x128xf32>
    %194 = tpu.matmul %193, %43, %cst_39 {dimension_numbers = #tpu.dot_dimension_numbers<[1], [0], [0], [1], [0, 0, 1, 1], [], []>} : vector<2x32xbf16>, vector<32x128xbf16>, vector<2x128xf32> -> vector<2x128xf32>
    %195 = arith.addf %71, %194 : vector<2x128xf32>
    %196 = vector.extract_strided_slice %195 {offsets = [0, 0], sizes = [2, 96], strides = [1, 1]} : vector<2x128xf32> to vector<2x96xf32>
    %197 = arith.negf %196 : vector<2x96xf32>
    %198 = math.exp %197 : vector<2x96xf32>
    %cst_40 = arith.constant 1.000000e+00 : f32
    %199 = vector.broadcast %cst_40 : f32 to vector<2x96xf32>
    %200 = arith.addf %199, %198 : vector<2x96xf32>
    %201 = arith.divf %199, %200 : vector<2x96xf32>
    %202 = vector.extract_strided_slice %195 {offsets = [0, 96], sizes = [2, 32], strides = [1, 1]} : vector<2x128xf32> to vector<2x32xf32>
    %203 = math.tanh %202 : vector<2x32xf32>
    %204 = vector.extract_strided_slice %201 {offsets = [0, 0], sizes = [2, 32], strides = [1, 1]} : vector<2x96xf32> to vector<2x32xf32>
    %205 = vector.extract_strided_slice %201 {offsets = [0, 32], sizes = [2, 32], strides = [1, 1]} : vector<2x96xf32> to vector<2x32xf32>
    %206 = vector.extract_strided_slice %201 {offsets = [0, 64], sizes = [2, 32], strides = [1, 1]} : vector<2x96xf32> to vector<2x32xf32>
    %207 = arith.mulf %205, %192 : vector<2x32xf32>
    %208 = arith.mulf %204, %203 : vector<2x32xf32>
    %209 = arith.addf %207, %208 : vector<2x32xf32>
    %210 = math.tanh %209 : vector<2x32xf32>
    %211 = arith.mulf %206, %210 : vector<2x32xf32>
    %212 = vector.extract_strided_slice %12 {offsets = [3, 0, 0], sizes = [1, 2, 32], strides = [1, 1, 1]} : vector<8x2x32xi1> to vector<1x2x32xi1>
    %213 = vector.shape_cast %212 : vector<1x2x32xi1> to vector<2x32xi1>
    %cst_41 = arith.constant 0.000000e+00 : f32
    %214 = vector.broadcast %cst_41 : f32 to vector<2x32xf32>
    %215 = arith.select %213, %211, %214 : vector<2x32xi1>, vector<2x32xf32>
    %216 = vector.extract_strided_slice %215 {offsets = [0, 0], sizes = [2, 16], strides = [1, 1]} : vector<2x32xf32> to vector<2x16xf32>
    %c3 = arith.constant 3 : index
    %c0_42 = arith.constant 0 : index
    %c0_43 = arith.constant 0 : index
    %217 = vector.load %arg7[%c3, %c0_42, %c0_43] : memref<8x2x32xf32, #tpu.memory_space<vmem>>, vector<1x2x16xf32>
    %218 = vector.shape_cast %217 : vector<1x2x16xf32> to vector<2x16xf32>
    %219 = vector.shape_cast %216 : vector<2x16xf32> to vector<1x2x16xf32>
    tpu.vector_store %arg7[%c3, %c0_42, %c0_43], %219 {strides = array<i32>} : memref<8x2x32xf32, #tpu.memory_space<vmem>>, vector<1x2x16xf32>,
    %220 = vector.extract_strided_slice %215 {offsets = [0, 16], sizes = [2, 16], strides = [1, 1]} : vector<2x32xf32> to vector<2x16xf32>
    %c4 = arith.constant 4 : index
    %c0_44 = arith.constant 0 : index
    %c16_45 = arith.constant 16 : index
    %221 = vector.load %arg7[%c4, %c0_44, %c16_45] : memref<8x2x32xf32, #tpu.memory_space<vmem>>, vector<1x2x16xf32>
    %222 = vector.shape_cast %221 : vector<1x2x16xf32> to vector<2x16xf32>
    %223 = vector.shape_cast %220 : vector<2x16xf32> to vector<1x2x16xf32>
    tpu.vector_store %arg7[%c4, %c0_44, %c16_45], %223 {strides = array<i32>} : memref<8x2x32xf32, #tpu.memory_space<vmem>>, vector<1x2x16xf32>,
    %224 = arith.select %213, %211, %191 : vector<2x32xi1>, vector<2x32xf32>
    %225 = arith.select %213, %209, %192 : vector<2x32xi1>, vector<2x32xf32>
    %226 = arith.truncf %224 : vector<2x32xf32> to vector<2x32xbf16>
    %cst_46 = arith.constant dense<0.000000e+00> : vector<2x128xf32>
    %227 = tpu.matmul %226, %43, %cst_46 {dimension_numbers = #tpu.dot_dimension_numbers<[1], [0], [0], [1], [0, 0, 1, 1], [], []>} : vector<2x32xbf16>, vector<32x128xbf16>, vector<2x128xf32> -> vector<2x128xf32>
    %228 = arith.addf %76, %227 : vector<2x128xf32>
    %229 = vector.extract_strided_slice %228 {offsets = [0, 0], sizes = [2, 96], strides = [1, 1]} : vector<2x128xf32> to vector<2x96xf32>
    %230 = arith.negf %229 : vector<2x96xf32>
    %231 = math.exp %230 : vector<2x96xf32>
    %cst_47 = arith.constant 1.000000e+00 : f32
    %232 = vector.broadcast %cst_47 : f32 to vector<2x96xf32>
    %233 = arith.addf %232, %231 : vector<2x96xf32>
    %234 = arith.divf %232, %233 : vector<2x96xf32>
    %235 = vector.extract_strided_slice %228 {offsets = [0, 96], sizes = [2, 32], strides = [1, 1]} : vector<2x128xf32> to vector<2x32xf32>
    %236 = math.tanh %235 : vector<2x32xf32>
    %237 = vector.extract_strided_slice %234 {offsets = [0, 0], sizes = [2, 32], strides = [1, 1]} : vector<2x96xf32> to vector<2x32xf32>
    %238 = vector.extract_strided_slice %234 {offsets = [0, 32], sizes = [2, 32], strides = [1, 1]} : vector<2x96xf32> to vector<2x32xf32>
    %239 = vector.extract_strided_slice %234 {offsets = [0, 64], sizes = [2, 32], strides = [1, 1]} : vector<2x96xf32> to vector<2x32xf32>
    %240 = arith.mulf %238, %225 : vector<2x32xf32>
    %241 = arith.mulf %237, %236 : vector<2x32xf32>
    %242 = arith.addf %240, %241 : vector<2x32xf32>
    %243 = math.tanh %242 : vector<2x32xf32>
    %244 = arith.mulf %239, %243 : vector<2x32xf32>
    %245 = vector.extract_strided_slice %12 {offsets = [4, 0, 0], sizes = [1, 2, 32], strides = [1, 1, 1]} : vector<8x2x32xi1> to vector<1x2x32xi1>
    %246 = vector.shape_cast %245 : vector<1x2x32xi1> to vector<2x32xi1>
    %cst_48 = arith.constant 0.000000e+00 : f32
    %247 = vector.broadcast %cst_48 : f32 to vector<2x32xf32>
    %248 = arith.select %246, %244, %247 : vector<2x32xi1>, vector<2x32xf32>
    %249 = vector.extract_strided_slice %248 {offsets = [0, 0], sizes = [2, 16], strides = [1, 1]} : vector<2x32xf32> to vector<2x16xf32>
    %c4_49 = arith.constant 4 : index
    %c0_50 = arith.constant 0 : index
    %c0_51 = arith.constant 0 : index
    %250 = vector.load %arg7[%c4_49, %c0_50, %c0_51] : memref<8x2x32xf32, #tpu.memory_space<vmem>>, vector<1x2x16xf32>
    %251 = vector.shape_cast %250 : vector<1x2x16xf32> to vector<2x16xf32>
    %252 = vector.shape_cast %249 : vector<2x16xf32> to vector<1x2x16xf32>
    tpu.vector_store %arg7[%c4_49, %c0_50, %c0_51], %252 {strides = array<i32>} : memref<8x2x32xf32, #tpu.memory_space<vmem>>, vector<1x2x16xf32>,
    %253 = vector.extract_strided_slice %248 {offsets = [0, 16], sizes = [2, 16], strides = [1, 1]} : vector<2x32xf32> to vector<2x16xf32>
    %c3_52 = arith.constant 3 : index
    %c0_53 = arith.constant 0 : index
    %c16_54 = arith.constant 16 : index
    %254 = vector.load %arg7[%c3_52, %c0_53, %c16_54] : memref<8x2x32xf32, #tpu.memory_space<vmem>>, vector<1x2x16xf32>
    %255 = vector.shape_cast %254 : vector<1x2x16xf32> to vector<2x16xf32>
    %256 = vector.shape_cast %253 : vector<2x16xf32> to vector<1x2x16xf32>
    tpu.vector_store %arg7[%c3_52, %c0_53, %c16_54], %256 {strides = array<i32>} : memref<8x2x32xf32, #tpu.memory_space<vmem>>, vector<1x2x16xf32>,
    %257 = arith.select %246, %244, %224 : vector<2x32xi1>, vector<2x32xf32>
    %258 = arith.select %246, %242, %225 : vector<2x32xi1>, vector<2x32xf32>
    %259 = arith.truncf %257 : vector<2x32xf32> to vector<2x32xbf16>
    %cst_55 = arith.constant dense<0.000000e+00> : vector<2x128xf32>
    %260 = tpu.matmul %259, %43, %cst_55 {dimension_numbers = #tpu.dot_dimension_numbers<[1], [0], [0], [1], [0, 0, 1, 1], [], []>} : vector<2x32xbf16>, vector<32x128xbf16>, vector<2x128xf32> -> vector<2x128xf32>
    %261 = arith.addf %81, %260 : vector<2x128xf32>
    %262 = vector.extract_strided_slice %261 {offsets = [0, 0], sizes = [2, 96], strides = [1, 1]} : vector<2x128xf32> to vector<2x96xf32>
    %263 = arith.negf %262 : vector<2x96xf32>
    %264 = math.exp %263 : vector<2x96xf32>
    %cst_56 = arith.constant 1.000000e+00 : f32
    %265 = vector.broadcast %cst_56 : f32 to vector<2x96xf32>
    %266 = arith.addf %265, %264 : vector<2x96xf32>
    %267 = arith.divf %265, %266 : vector<2x96xf32>
    %268 = vector.extract_strided_slice %261 {offsets = [0, 96], sizes = [2, 32], strides = [1, 1]} : vector<2x128xf32> to vector<2x32xf32>
    %269 = math.tanh %268 : vector<2x32xf32>
    %270 = vector.extract_strided_slice %267 {offsets = [0, 0], sizes = [2, 32], strides = [1, 1]} : vector<2x96xf32> to vector<2x32xf32>
    %271 = vector.extract_strided_slice %267 {offsets = [0, 32], sizes = [2, 32], strides = [1, 1]} : vector<2x96xf32> to vector<2x32xf32>
    %272 = vector.extract_strided_slice %267 {offsets = [0, 64], sizes = [2, 32], strides = [1, 1]} : vector<2x96xf32> to vector<2x32xf32>
    %273 = arith.mulf %271, %258 : vector<2x32xf32>
    %274 = arith.mulf %270, %269 : vector<2x32xf32>
    %275 = arith.addf %273, %274 : vector<2x32xf32>
    %276 = math.tanh %275 : vector<2x32xf32>
    %277 = arith.mulf %272, %276 : vector<2x32xf32>
    %278 = vector.extract_strided_slice %12 {offsets = [5, 0, 0], sizes = [1, 2, 32], strides = [1, 1, 1]} : vector<8x2x32xi1> to vector<1x2x32xi1>
    %279 = vector.shape_cast %278 : vector<1x2x32xi1> to vector<2x32xi1>
    %cst_57 = arith.constant 0.000000e+00 : f32
    %280 = vector.broadcast %cst_57 : f32 to vector<2x32xf32>
    %281 = arith.select %279, %277, %280 : vector<2x32xi1>, vector<2x32xf32>
    %282 = vector.extract_strided_slice %281 {offsets = [0, 0], sizes = [2, 16], strides = [1, 1]} : vector<2x32xf32> to vector<2x16xf32>
    %c5_58 = arith.constant 5 : index
    %c0_59 = arith.constant 0 : index
    %c0_60 = arith.constant 0 : index
    %283 = vector.load %arg7[%c5_58, %c0_59, %c0_60] : memref<8x2x32xf32, #tpu.memory_space<vmem>>, vector<1x2x16xf32>
    %284 = vector.shape_cast %283 : vector<1x2x16xf32> to vector<2x16xf32>
    %285 = vector.shape_cast %282 : vector<2x16xf32> to vector<1x2x16xf32>
    tpu.vector_store %arg7[%c5_58, %c0_59, %c0_60], %285 {strides = array<i32>} : memref<8x2x32xf32, #tpu.memory_space<vmem>>, vector<1x2x16xf32>,
    %286 = vector.extract_strided_slice %281 {offsets = [0, 16], sizes = [2, 16], strides = [1, 1]} : vector<2x32xf32> to vector<2x16xf32>
    %c2_61 = arith.constant 2 : index
    %c0_62 = arith.constant 0 : index
    %c16_63 = arith.constant 16 : index
    %287 = vector.load %arg7[%c2_61, %c0_62, %c16_63] : memref<8x2x32xf32, #tpu.memory_space<vmem>>, vector<1x2x16xf32>
    %288 = vector.shape_cast %287 : vector<1x2x16xf32> to vector<2x16xf32>
    %289 = vector.shape_cast %286 : vector<2x16xf32> to vector<1x2x16xf32>
    tpu.vector_store %arg7[%c2_61, %c0_62, %c16_63], %289 {strides = array<i32>} : memref<8x2x32xf32, #tpu.memory_space<vmem>>, vector<1x2x16xf32>,
    %290 = arith.select %279, %277, %257 : vector<2x32xi1>, vector<2x32xf32>
    %291 = arith.select %279, %275, %258 : vector<2x32xi1>, vector<2x32xf32>
    %292 = arith.truncf %290 : vector<2x32xf32> to vector<2x32xbf16>
    %cst_64 = arith.constant dense<0.000000e+00> : vector<2x128xf32>
    %293 = tpu.matmul %292, %43, %cst_64 {dimension_numbers = #tpu.dot_dimension_numbers<[1], [0], [0], [1], [0, 0, 1, 1], [], []>} : vector<2x32xbf16>, vector<32x128xbf16>, vector<2x128xf32> -> vector<2x128xf32>
    %294 = arith.addf %86, %293 : vector<2x128xf32>
    %295 = vector.extract_strided_slice %294 {offsets = [0, 0], sizes = [2, 96], strides = [1, 1]} : vector<2x128xf32> to vector<2x96xf32>
    %296 = arith.negf %295 : vector<2x96xf32>
    %297 = math.exp %296 : vector<2x96xf32>
    %cst_65 = arith.constant 1.000000e+00 : f32
    %298 = vector.broadcast %cst_65 : f32 to vector<2x96xf32>
    %299 = arith.addf %298, %297 : vector<2x96xf32>
    %300 = arith.divf %298, %299 : vector<2x96xf32>
    %301 = vector.extract_strided_slice %294 {offsets = [0, 96], sizes = [2, 32], strides = [1, 1]} : vector<2x128xf32> to vector<2x32xf32>
    %302 = math.tanh %301 : vector<2x32xf32>
    %303 = vector.extract_strided_slice %300 {offsets = [0, 0], sizes = [2, 32], strides = [1, 1]} : vector<2x96xf32> to vector<2x32xf32>
    %304 = vector.extract_strided_slice %300 {offsets = [0, 32], sizes = [2, 32], strides = [1, 1]} : vector<2x96xf32> to vector<2x32xf32>
    %305 = vector.extract_strided_slice %300 {offsets = [0, 64], sizes = [2, 32], strides = [1, 1]} : vector<2x96xf32> to vector<2x32xf32>
    %306 = arith.mulf %304, %291 : vector<2x32xf32>
    %307 = arith.mulf %303, %302 : vector<2x32xf32>
    %308 = arith.addf %306, %307 : vector<2x32xf32>
    %309 = math.tanh %308 : vector<2x32xf32>
    %310 = arith.mulf %305, %309 : vector<2x32xf32>
    %311 = vector.extract_strided_slice %12 {offsets = [6, 0, 0], sizes = [1, 2, 32], strides = [1, 1, 1]} : vector<8x2x32xi1> to vector<1x2x32xi1>
    %312 = vector.shape_cast %311 : vector<1x2x32xi1> to vector<2x32xi1>
    %cst_66 = arith.constant 0.000000e+00 : f32
    %313 = vector.broadcast %cst_66 : f32 to vector<2x32xf32>
    %314 = arith.select %312, %310, %313 : vector<2x32xi1>, vector<2x32xf32>
    %315 = vector.extract_strided_slice %314 {offsets = [0, 0], sizes = [2, 16], strides = [1, 1]} : vector<2x32xf32> to vector<2x16xf32>
    %c6_67 = arith.constant 6 : index
    %c0_68 = arith.constant 0 : index
    %c0_69 = arith.constant 0 : index
    %316 = vector.load %arg7[%c6_67, %c0_68, %c0_69] : memref<8x2x32xf32, #tpu.memory_space<vmem>>, vector<1x2x16xf32>
    %317 = vector.shape_cast %316 : vector<1x2x16xf32> to vector<2x16xf32>
    %318 = vector.shape_cast %315 : vector<2x16xf32> to vector<1x2x16xf32>
    tpu.vector_store %arg7[%c6_67, %c0_68, %c0_69], %318 {strides = array<i32>} : memref<8x2x32xf32, #tpu.memory_space<vmem>>, vector<1x2x16xf32>,
    %319 = vector.extract_strided_slice %314 {offsets = [0, 16], sizes = [2, 16], strides = [1, 1]} : vector<2x32xf32> to vector<2x16xf32>
    %c1_70 = arith.constant 1 : index
    %c0_71 = arith.constant 0 : index
    %c16_72 = arith.constant 16 : index
    %320 = vector.load %arg7[%c1_70, %c0_71, %c16_72] : memref<8x2x32xf32, #tpu.memory_space<vmem>>, vector<1x2x16xf32>
    %321 = vector.shape_cast %320 : vector<1x2x16xf32> to vector<2x16xf32>
    %322 = vector.shape_cast %319 : vector<2x16xf32> to vector<1x2x16xf32>
    tpu.vector_store %arg7[%c1_70, %c0_71, %c16_72], %322 {strides = array<i32>} : memref<8x2x32xf32, #tpu.memory_space<vmem>>, vector<1x2x16xf32>,
    %323 = arith.select %312, %310, %290 : vector<2x32xi1>, vector<2x32xf32>
    %324 = arith.select %312, %308, %291 : vector<2x32xi1>, vector<2x32xf32>
    %325 = arith.truncf %323 : vector<2x32xf32> to vector<2x32xbf16>
    %cst_73 = arith.constant dense<0.000000e+00> : vector<2x128xf32>
    %326 = tpu.matmul %325, %43, %cst_73 {dimension_numbers = #tpu.dot_dimension_numbers<[1], [0], [0], [1], [0, 0, 1, 1], [], []>} : vector<2x32xbf16>, vector<32x128xbf16>, vector<2x128xf32> -> vector<2x128xf32>
    %327 = arith.addf %91, %326 : vector<2x128xf32>
    %328 = vector.extract_strided_slice %327 {offsets = [0, 0], sizes = [2, 96], strides = [1, 1]} : vector<2x128xf32> to vector<2x96xf32>
    %329 = arith.negf %328 : vector<2x96xf32>
    %330 = math.exp %329 : vector<2x96xf32>
    %cst_74 = arith.constant 1.000000e+00 : f32
    %331 = vector.broadcast %cst_74 : f32 to vector<2x96xf32>
    %332 = arith.addf %331, %330 : vector<2x96xf32>
    %333 = arith.divf %331, %332 : vector<2x96xf32>
    %334 = vector.extract_strided_slice %327 {offsets = [0, 96], sizes = [2, 32], strides = [1, 1]} : vector<2x128xf32> to vector<2x32xf32>
    %335 = math.tanh %334 : vector<2x32xf32>
    %336 = vector.extract_strided_slice %333 {offsets = [0, 0], sizes = [2, 32], strides = [1, 1]} : vector<2x96xf32> to vector<2x32xf32>
    %337 = vector.extract_strided_slice %333 {offsets = [0, 32], sizes = [2, 32], strides = [1, 1]} : vector<2x96xf32> to vector<2x32xf32>
    %338 = vector.extract_strided_slice %333 {offsets = [0, 64], sizes = [2, 32], strides = [1, 1]} : vector<2x96xf32> to vector<2x32xf32>
    %339 = arith.mulf %337, %324 : vector<2x32xf32>
    %340 = arith.mulf %336, %335 : vector<2x32xf32>
    %341 = arith.addf %339, %340 : vector<2x32xf32>
    %342 = math.tanh %341 : vector<2x32xf32>
    %343 = arith.mulf %338, %342 : vector<2x32xf32>
    %344 = vector.extract_strided_slice %12 {offsets = [7, 0, 0], sizes = [1, 2, 32], strides = [1, 1, 1]} : vector<8x2x32xi1> to vector<1x2x32xi1>
    %345 = vector.shape_cast %344 : vector<1x2x32xi1> to vector<2x32xi1>
    %cst_75 = arith.constant 0.000000e+00 : f32
    %346 = vector.broadcast %cst_75 : f32 to vector<2x32xf32>
    %347 = arith.select %345, %343, %346 : vector<2x32xi1>, vector<2x32xf32>
    %348 = vector.extract_strided_slice %347 {offsets = [0, 0], sizes = [2, 16], strides = [1, 1]} : vector<2x32xf32> to vector<2x16xf32>
    %c7_76 = arith.constant 7 : index
    %c0_77 = arith.constant 0 : index
    %c0_78 = arith.constant 0 : index
    %349 = vector.load %arg7[%c7_76, %c0_77, %c0_78] : memref<8x2x32xf32, #tpu.memory_space<vmem>>, vector<1x2x16xf32>
    %350 = vector.shape_cast %349 : vector<1x2x16xf32> to vector<2x16xf32>
    %351 = vector.shape_cast %348 : vector<2x16xf32> to vector<1x2x16xf32>
    tpu.vector_store %arg7[%c7_76, %c0_77, %c0_78], %351 {strides = array<i32>} : memref<8x2x32xf32, #tpu.memory_space<vmem>>, vector<1x2x16xf32>,
    %352 = vector.extract_strided_slice %347 {offsets = [0, 16], sizes = [2, 16], strides = [1, 1]} : vector<2x32xf32> to vector<2x16xf32>
    %c0_79 = arith.constant 0 : index
    %c0_80 = arith.constant 0 : index
    %c16_81 = arith.constant 16 : index
    %353 = vector.load %arg7[%c0_79, %c0_80, %c16_81] : memref<8x2x32xf32, #tpu.memory_space<vmem>>, vector<1x2x16xf32>
    %354 = vector.shape_cast %353 : vector<1x2x16xf32> to vector<2x16xf32>
    %355 = vector.shape_cast %352 : vector<2x16xf32> to vector<1x2x16xf32>
    tpu.vector_store %arg7[%c0_79, %c0_80, %c16_81], %355 {strides = array<i32>} : memref<8x2x32xf32, #tpu.memory_space<vmem>>, vector<1x2x16xf32>,
    %356 = arith.select %345, %343, %323 : vector<2x32xi1>, vector<2x32xf32>
    %c0_82 = arith.constant 0 : index
    %c0_83 = arith.constant 0 : index
    %c0_84 = arith.constant 0 : index
    %357 = vector.load %arg7[%c0_82, %c0_83, %c0_84] : memref<8x2x32xf32, #tpu.memory_space<vmem>>, vector<8x2x32xf32>
    %cst_85 = arith.constant dense<0.000000e+00> : vector<8x2xf32>
    %358 = vector.multi_reduction <add>, %357, %cst_85 [2] : vector<8x2x32xf32> to vector<8x2xf32>
    %359 = vector.shape_cast %358 : vector<8x2xf32> to vector<8x2x1xf32>
    %cst_86 = arith.constant 3.200000e+01 : f32
    %360 = vector.broadcast %cst_86 : f32 to vector<8x2x1xf32>
    %361 = arith.divf %359, %360 : vector<8x2x1xf32>
    %362 = vector.broadcast %361 : vector<8x2x1xf32> to vector<8x2x32xf32>
    %363 = arith.subf %357, %362 : vector<8x2x32xf32>
    %364 = arith.mulf %363, %363 : vector<8x2x32xf32>
    %cst_87 = arith.constant dense<0.000000e+00> : vector<8x2xf32>
    %365 = vector.multi_reduction <add>, %364, %cst_87 [2] : vector<8x2x32xf32> to vector<8x2xf32>
    %366 = vector.shape_cast %365 : vector<8x2xf32> to vector<8x2x1xf32>
    %cst_88 = arith.constant 3.200000e+01 : f32
    %367 = vector.broadcast %cst_88 : f32 to vector<8x2x1xf32>
    %368 = arith.divf %366, %367 : vector<8x2x1xf32>
    %369 = vector.broadcast %361 : vector<8x2x1xf32> to vector<8x2x32xf32>
    %370 = arith.subf %357, %369 : vector<8x2x32xf32>
    %cst_89 = arith.constant 9.99999974E-6 : f32
    %371 = vector.broadcast %cst_89 : f32 to vector<8x2x1xf32>
    %372 = arith.addf %368, %371 : vector<8x2x1xf32>
    %373 = math.rsqrt %372 : vector<8x2x1xf32>
    %374 = vector.broadcast %373 : vector<8x2x1xf32> to vector<8x2x32xf32>
    %375 = arith.mulf %370, %374 : vector<8x2x32xf32>
    %376 = vector.broadcast %35 : vector<1x1x32xf32> to vector<8x2x32xf32>
    %377 = arith.mulf %375, %376 : vector<8x2x32xf32>
    %378 = vector.broadcast %37 : vector<1x1x32xf32> to vector<8x2x32xf32>
    %379 = arith.addf %377, %378 : vector<8x2x32xf32>
    %380 = vector.shape_cast %379 : vector<8x2x32xf32> to vector<16x32xf32>
    %381 = arith.truncf %380 : vector<16x32xf32> to vector<16x32xbf16>
    %cst_90 = arith.constant dense<0.000000e+00> : vector<16x128xf32>
    %382 = tpu.matmul %381, %44, %cst_90 {dimension_numbers = #tpu.dot_dimension_numbers<[1], [0], [0], [1], [0, 0, 1, 1], [], []>} : vector<16x32xbf16>, vector<32x128xbf16>, vector<16x128xf32> -> vector<16x128xf32>
    %383 = vector.broadcast %33 : vector<1x128xf32> to vector<16x128xf32>
    %384 = arith.addf %382, %383 : vector<16x128xf32>
    %385 = vector.shape_cast %384 : vector<16x128xf32> to vector<8x2x128xf32>
    %386 = vector.extract_strided_slice %385 {offsets = [0, 0, 0], sizes = [1, 2, 128], strides = [1, 1, 1]} : vector<8x2x128xf32> to vector<1x2x128xf32>
    %387 = vector.shape_cast %386 : vector<1x2x128xf32> to vector<2x128xf32>
    %388 = vector.extract_strided_slice %385 {offsets = [7, 0, 0], sizes = [1, 2, 128], strides = [1, 1, 1]} : vector<8x2x128xf32> to vector<1x2x128xf32>
    %389 = vector.shape_cast %388 : vector<1x2x128xf32> to vector<2x128xf32>
    %390 = arith.select %31, %387, %389 : vector<2x128xi1>, vector<2x128xf32>
    %391 = vector.extract_strided_slice %385 {offsets = [1, 0, 0], sizes = [1, 2, 128], strides = [1, 1, 1]} : vector<8x2x128xf32> to vector<1x2x128xf32>
    %392 = vector.shape_cast %391 : vector<1x2x128xf32> to vector<2x128xf32>
    %393 = vector.extract_strided_slice %385 {offsets = [6, 0, 0], sizes = [1, 2, 128], strides = [1, 1, 1]} : vector<8x2x128xf32> to vector<1x2x128xf32>
    %394 = vector.shape_cast %393 : vector<1x2x128xf32> to vector<2x128xf32>
    %395 = arith.select %31, %392, %394 : vector<2x128xi1>, vector<2x128xf32>
    %396 = vector.extract_strided_slice %385 {offsets = [2, 0, 0], sizes = [1, 2, 128], strides = [1, 1, 1]} : vector<8x2x128xf32> to vector<1x2x128xf32>
    %397 = vector.shape_cast %396 : vector<1x2x128xf32> to vector<2x128xf32>
    %398 = vector.extract_strided_slice %385 {offsets = [5, 0, 0], sizes = [1, 2, 128], strides = [1, 1, 1]} : vector<8x2x128xf32> to vector<1x2x128xf32>
    %399 = vector.shape_cast %398 : vector<1x2x128xf32> to vector<2x128xf32>
    %400 = arith.select %31, %397, %399 : vector<2x128xi1>, vector<2x128xf32>
    %401 = vector.extract_strided_slice %385 {offsets = [3, 0, 0], sizes = [1, 2, 128], strides = [1, 1, 1]} : vector<8x2x128xf32> to vector<1x2x128xf32>
    %402 = vector.shape_cast %401 : vector<1x2x128xf32> to vector<2x128xf32>
    %403 = vector.extract_strided_slice %385 {offsets = [4, 0, 0], sizes = [1, 2, 128], strides = [1, 1, 1]} : vector<8x2x128xf32> to vector<1x2x128xf32>
    %404 = vector.shape_cast %403 : vector<1x2x128xf32> to vector<2x128xf32>
    %405 = arith.select %31, %402, %404 : vector<2x128xi1>, vector<2x128xf32>
    %406 = vector.extract_strided_slice %385 {offsets = [4, 0, 0], sizes = [1, 2, 128], strides = [1, 1, 1]} : vector<8x2x128xf32> to vector<1x2x128xf32>
    %407 = vector.shape_cast %406 : vector<1x2x128xf32> to vector<2x128xf32>
    %408 = vector.extract_strided_slice %385 {offsets = [3, 0, 0], sizes = [1, 2, 128], strides = [1, 1, 1]} : vector<8x2x128xf32> to vector<1x2x128xf32>
    %409 = vector.shape_cast %408 : vector<1x2x128xf32> to vector<2x128xf32>
    %410 = arith.select %31, %407, %409 : vector<2x128xi1>, vector<2x128xf32>
    %411 = vector.extract_strided_slice %385 {offsets = [5, 0, 0], sizes = [1, 2, 128], strides = [1, 1, 1]} : vector<8x2x128xf32> to vector<1x2x128xf32>
    %412 = vector.shape_cast %411 : vector<1x2x128xf32> to vector<2x128xf32>
    %413 = vector.extract_strided_slice %385 {offsets = [2, 0, 0], sizes = [1, 2, 128], strides = [1, 1, 1]} : vector<8x2x128xf32> to vector<1x2x128xf32>
    %414 = vector.shape_cast %413 : vector<1x2x128xf32> to vector<2x128xf32>
    %415 = arith.select %31, %412, %414 : vector<2x128xi1>, vector<2x128xf32>
    %416 = vector.extract_strided_slice %385 {offsets = [6, 0, 0], sizes = [1, 2, 128], strides = [1, 1, 1]} : vector<8x2x128xf32> to vector<1x2x128xf32>
    %417 = vector.shape_cast %416 : vector<1x2x128xf32> to vector<2x128xf32>
    %418 = vector.extract_strided_slice %385 {offsets = [1, 0, 0], sizes = [1, 2, 128], strides = [1, 1, 1]} : vector<8x2x128xf32> to vector<1x2x128xf32>
    %419 = vector.shape_cast %418 : vector<1x2x128xf32> to vector<2x128xf32>
    %420 = arith.select %31, %417, %419 : vector<2x128xi1>, vector<2x128xf32>
    %421 = vector.extract_strided_slice %385 {offsets = [7, 0, 0], sizes = [1, 2, 128], strides = [1, 1, 1]} : vector<8x2x128xf32> to vector<1x2x128xf32>
    %422 = vector.shape_cast %421 : vector<1x2x128xf32> to vector<2x128xf32>
    %423 = vector.extract_strided_slice %385 {offsets = [0, 0, 0], sizes = [1, 2, 128], strides = [1, 1, 1]} : vector<8x2x128xf32> to vector<1x2x128xf32>
    %424 = vector.shape_cast %423 : vector<1x2x128xf32> to vector<2x128xf32>
    %425 = arith.select %31, %422, %424 : vector<2x128xi1>, vector<2x128xf32>
    %cst_91 = arith.constant 0.000000e+00 : f32
    %426 = vector.broadcast %cst_91 : f32 to vector<2x32xf32>
    %cst_92 = arith.constant 0.000000e+00 : f32
    %427 = vector.broadcast %cst_92 : f32 to vector<2x32xf32>
    %428 = arith.truncf %426 : vector<2x32xf32> to vector<2x32xbf16>
    %cst_93 = arith.constant dense<0.000000e+00> : vector<2x128xf32>
    %429 = tpu.matmul %428, %45, %cst_93 {dimension_numbers = #tpu.dot_dimension_numbers<[1], [0], [0], [1], [0, 0, 1, 1], [], []>} : vector<2x32xbf16>, vector<32x128xbf16>, vector<2x128xf32> -> vector<2x128xf32>
    %430 = arith.addf %390, %429 : vector<2x128xf32>
    %431 = vector.extract_strided_slice %430 {offsets = [0, 0], sizes = [2, 96], strides = [1, 1]} : vector<2x128xf32> to vector<2x96xf32>
    %432 = arith.negf %431 : vector<2x96xf32>
    %433 = math.exp %432 : vector<2x96xf32>
    %cst_94 = arith.constant 1.000000e+00 : f32
    %434 = vector.broadcast %cst_94 : f32 to vector<2x96xf32>
    %435 = arith.addf %434, %433 : vector<2x96xf32>
    %436 = arith.divf %434, %435 : vector<2x96xf32>
    %437 = vector.extract_strided_slice %430 {offsets = [0, 96], sizes = [2, 32], strides = [1, 1]} : vector<2x128xf32> to vector<2x32xf32>
    %438 = math.tanh %437 : vector<2x32xf32>
    %439 = vector.extract_strided_slice %436 {offsets = [0, 0], sizes = [2, 32], strides = [1, 1]} : vector<2x96xf32> to vector<2x32xf32>
    %440 = vector.extract_strided_slice %436 {offsets = [0, 32], sizes = [2, 32], strides = [1, 1]} : vector<2x96xf32> to vector<2x32xf32>
    %441 = vector.extract_strided_slice %436 {offsets = [0, 64], sizes = [2, 32], strides = [1, 1]} : vector<2x96xf32> to vector<2x32xf32>
    %442 = arith.mulf %440, %427 : vector<2x32xf32>
    %443 = arith.mulf %439, %438 : vector<2x32xf32>
    %444 = arith.addf %442, %443 : vector<2x32xf32>
    %445 = math.tanh %444 : vector<2x32xf32>
    %446 = arith.mulf %441, %445 : vector<2x32xf32>
    %447 = vector.extract_strided_slice %12 {offsets = [0, 0, 0], sizes = [1, 2, 32], strides = [1, 1, 1]} : vector<8x2x32xi1> to vector<1x2x32xi1>
    %448 = vector.shape_cast %447 : vector<1x2x32xi1> to vector<2x32xi1>
    %449 = arith.select %448, %446, %426 : vector<2x32xi1>, vector<2x32xf32>
    %450 = arith.select %448, %444, %427 : vector<2x32xi1>, vector<2x32xf32>
    %451 = arith.truncf %449 : vector<2x32xf32> to vector<2x32xbf16>
    %cst_95 = arith.constant dense<0.000000e+00> : vector<2x128xf32>
    %452 = tpu.matmul %451, %45, %cst_95 {dimension_numbers = #tpu.dot_dimension_numbers<[1], [0], [0], [1], [0, 0, 1, 1], [], []>} : vector<2x32xbf16>, vector<32x128xbf16>, vector<2x128xf32> -> vector<2x128xf32>
    %453 = arith.addf %395, %452 : vector<2x128xf32>
    %454 = vector.extract_strided_slice %453 {offsets = [0, 0], sizes = [2, 96], strides = [1, 1]} : vector<2x128xf32> to vector<2x96xf32>
    %455 = arith.negf %454 : vector<2x96xf32>
    %456 = math.exp %455 : vector<2x96xf32>
    %cst_96 = arith.constant 1.000000e+00 : f32
    %457 = vector.broadcast %cst_96 : f32 to vector<2x96xf32>
    %458 = arith.addf %457, %456 : vector<2x96xf32>
    %459 = arith.divf %457, %458 : vector<2x96xf32>
    %460 = vector.extract_strided_slice %453 {offsets = [0, 96], sizes = [2, 32], strides = [1, 1]} : vector<2x128xf32> to vector<2x32xf32>
    %461 = math.tanh %460 : vector<2x32xf32>
    %462 = vector.extract_strided_slice %459 {offsets = [0, 0], sizes = [2, 32], strides = [1, 1]} : vector<2x96xf32> to vector<2x32xf32>
    %463 = vector.extract_strided_slice %459 {offsets = [0, 32], sizes = [2, 32], strides = [1, 1]} : vector<2x96xf32> to vector<2x32xf32>
    %464 = vector.extract_strided_slice %459 {offsets = [0, 64], sizes = [2, 32], strides = [1, 1]} : vector<2x96xf32> to vector<2x32xf32>
    %465 = arith.mulf %463, %450 : vector<2x32xf32>
    %466 = arith.mulf %462, %461 : vector<2x32xf32>
    %467 = arith.addf %465, %466 : vector<2x32xf32>
    %468 = math.tanh %467 : vector<2x32xf32>
    %469 = arith.mulf %464, %468 : vector<2x32xf32>
    %470 = vector.extract_strided_slice %12 {offsets = [1, 0, 0], sizes = [1, 2, 32], strides = [1, 1, 1]} : vector<8x2x32xi1> to vector<1x2x32xi1>
    %471 = vector.shape_cast %470 : vector<1x2x32xi1> to vector<2x32xi1>
    %472 = arith.select %471, %469, %449 : vector<2x32xi1>, vector<2x32xf32>
    %473 = arith.select %471, %467, %450 : vector<2x32xi1>, vector<2x32xf32>
    %474 = arith.truncf %472 : vector<2x32xf32> to vector<2x32xbf16>
    %cst_97 = arith.constant dense<0.000000e+00> : vector<2x128xf32>
    %475 = tpu.matmul %474, %45, %cst_97 {dimension_numbers = #tpu.dot_dimension_numbers<[1], [0], [0], [1], [0, 0, 1, 1], [], []>} : vector<2x32xbf16>, vector<32x128xbf16>, vector<2x128xf32> -> vector<2x128xf32>
    %476 = arith.addf %400, %475 : vector<2x128xf32>
    %477 = vector.extract_strided_slice %476 {offsets = [0, 0], sizes = [2, 96], strides = [1, 1]} : vector<2x128xf32> to vector<2x96xf32>
    %478 = arith.negf %477 : vector<2x96xf32>
    %479 = math.exp %478 : vector<2x96xf32>
    %cst_98 = arith.constant 1.000000e+00 : f32
    %480 = vector.broadcast %cst_98 : f32 to vector<2x96xf32>
    %481 = arith.addf %480, %479 : vector<2x96xf32>
    %482 = arith.divf %480, %481 : vector<2x96xf32>
    %483 = vector.extract_strided_slice %476 {offsets = [0, 96], sizes = [2, 32], strides = [1, 1]} : vector<2x128xf32> to vector<2x32xf32>
    %484 = math.tanh %483 : vector<2x32xf32>
    %485 = vector.extract_strided_slice %482 {offsets = [0, 0], sizes = [2, 32], strides = [1, 1]} : vector<2x96xf32> to vector<2x32xf32>
    %486 = vector.extract_strided_slice %482 {offsets = [0, 32], sizes = [2, 32], strides = [1, 1]} : vector<2x96xf32> to vector<2x32xf32>
    %487 = vector.extract_strided_slice %482 {offsets = [0, 64], sizes = [2, 32], strides = [1, 1]} : vector<2x96xf32> to vector<2x32xf32>
    %488 = arith.mulf %486, %473 : vector<2x32xf32>
    %489 = arith.mulf %485, %484 : vector<2x32xf32>
    %490 = arith.addf %488, %489 : vector<2x32xf32>
    %491 = math.tanh %490 : vector<2x32xf32>
    %492 = arith.mulf %487, %491 : vector<2x32xf32>
    %493 = vector.extract_strided_slice %12 {offsets = [2, 0, 0], sizes = [1, 2, 32], strides = [1, 1, 1]} : vector<8x2x32xi1> to vector<1x2x32xi1>
    %494 = vector.shape_cast %493 : vector<1x2x32xi1> to vector<2x32xi1>
    %495 = arith.select %494, %492, %472 : vector<2x32xi1>, vector<2x32xf32>
    %496 = arith.select %494, %490, %473 : vector<2x32xi1>, vector<2x32xf32>
    %497 = arith.truncf %495 : vector<2x32xf32> to vector<2x32xbf16>
    %cst_99 = arith.constant dense<0.000000e+00> : vector<2x128xf32>
    %498 = tpu.matmul %497, %45, %cst_99 {dimension_numbers = #tpu.dot_dimension_numbers<[1], [0], [0], [1], [0, 0, 1, 1], [], []>} : vector<2x32xbf16>, vector<32x128xbf16>, vector<2x128xf32> -> vector<2x128xf32>
    %499 = arith.addf %405, %498 : vector<2x128xf32>
    %500 = vector.extract_strided_slice %499 {offsets = [0, 0], sizes = [2, 96], strides = [1, 1]} : vector<2x128xf32> to vector<2x96xf32>
    %501 = arith.negf %500 : vector<2x96xf32>
    %502 = math.exp %501 : vector<2x96xf32>
    %cst_100 = arith.constant 1.000000e+00 : f32
    %503 = vector.broadcast %cst_100 : f32 to vector<2x96xf32>
    %504 = arith.addf %503, %502 : vector<2x96xf32>
    %505 = arith.divf %503, %504 : vector<2x96xf32>
    %506 = vector.extract_strided_slice %499 {offsets = [0, 96], sizes = [2, 32], strides = [1, 1]} : vector<2x128xf32> to vector<2x32xf32>
    %507 = math.tanh %506 : vector<2x32xf32>
    %508 = vector.extract_strided_slice %505 {offsets = [0, 0], sizes = [2, 32], strides = [1, 1]} : vector<2x96xf32> to vector<2x32xf32>
    %509 = vector.extract_strided_slice %505 {offsets = [0, 32], sizes = [2, 32], strides = [1, 1]} : vector<2x96xf32> to vector<2x32xf32>
    %510 = vector.extract_strided_slice %505 {offsets = [0, 64], sizes = [2, 32], strides = [1, 1]} : vector<2x96xf32> to vector<2x32xf32>
    %511 = arith.mulf %509, %496 : vector<2x32xf32>
    %512 = arith.mulf %508, %507 : vector<2x32xf32>
    %513 = arith.addf %511, %512 : vector<2x32xf32>
    %514 = math.tanh %513 : vector<2x32xf32>
    %515 = arith.mulf %510, %514 : vector<2x32xf32>
    %516 = vector.extract_strided_slice %12 {offsets = [3, 0, 0], sizes = [1, 2, 32], strides = [1, 1, 1]} : vector<8x2x32xi1> to vector<1x2x32xi1>
    %517 = vector.shape_cast %516 : vector<1x2x32xi1> to vector<2x32xi1>
    %518 = arith.select %517, %515, %495 : vector<2x32xi1>, vector<2x32xf32>
    %519 = arith.select %517, %513, %496 : vector<2x32xi1>, vector<2x32xf32>
    %520 = arith.truncf %518 : vector<2x32xf32> to vector<2x32xbf16>
    %cst_101 = arith.constant dense<0.000000e+00> : vector<2x128xf32>
    %521 = tpu.matmul %520, %45, %cst_101 {dimension_numbers = #tpu.dot_dimension_numbers<[1], [0], [0], [1], [0, 0, 1, 1], [], []>} : vector<2x32xbf16>, vector<32x128xbf16>, vector<2x128xf32> -> vector<2x128xf32>
    %522 = arith.addf %410, %521 : vector<2x128xf32>
    %523 = vector.extract_strided_slice %522 {offsets = [0, 0], sizes = [2, 96], strides = [1, 1]} : vector<2x128xf32> to vector<2x96xf32>
    %524 = arith.negf %523 : vector<2x96xf32>
    %525 = math.exp %524 : vector<2x96xf32>
    %cst_102 = arith.constant 1.000000e+00 : f32
    %526 = vector.broadcast %cst_102 : f32 to vector<2x96xf32>
    %527 = arith.addf %526, %525 : vector<2x96xf32>
    %528 = arith.divf %526, %527 : vector<2x96xf32>
    %529 = vector.extract_strided_slice %522 {offsets = [0, 96], sizes = [2, 32], strides = [1, 1]} : vector<2x128xf32> to vector<2x32xf32>
    %530 = math.tanh %529 : vector<2x32xf32>
    %531 = vector.extract_strided_slice %528 {offsets = [0, 0], sizes = [2, 32], strides = [1, 1]} : vector<2x96xf32> to vector<2x32xf32>
    %532 = vector.extract_strided_slice %528 {offsets = [0, 32], sizes = [2, 32], strides = [1, 1]} : vector<2x96xf32> to vector<2x32xf32>
    %533 = vector.extract_strided_slice %528 {offsets = [0, 64], sizes = [2, 32], strides = [1, 1]} : vector<2x96xf32> to vector<2x32xf32>
    %534 = arith.mulf %532, %519 : vector<2x32xf32>
    %535 = arith.mulf %531, %530 : vector<2x32xf32>
    %536 = arith.addf %534, %535 : vector<2x32xf32>
    %537 = math.tanh %536 : vector<2x32xf32>
    %538 = arith.mulf %533, %537 : vector<2x32xf32>
    %539 = vector.extract_strided_slice %12 {offsets = [4, 0, 0], sizes = [1, 2, 32], strides = [1, 1, 1]} : vector<8x2x32xi1> to vector<1x2x32xi1>
    %540 = vector.shape_cast %539 : vector<1x2x32xi1> to vector<2x32xi1>
    %541 = arith.select %540, %538, %518 : vector<2x32xi1>, vector<2x32xf32>
    %542 = arith.select %540, %536, %519 : vector<2x32xi1>, vector<2x32xf32>
    %543 = arith.truncf %541 : vector<2x32xf32> to vector<2x32xbf16>
    %cst_103 = arith.constant dense<0.000000e+00> : vector<2x128xf32>
    %544 = tpu.matmul %543, %45, %cst_103 {dimension_numbers = #tpu.dot_dimension_numbers<[1], [0], [0], [1], [0, 0, 1, 1], [], []>} : vector<2x32xbf16>, vector<32x128xbf16>, vector<2x128xf32> -> vector<2x128xf32>
    %545 = arith.addf %415, %544 : vector<2x128xf32>
    %546 = vector.extract_strided_slice %545 {offsets = [0, 0], sizes = [2, 96], strides = [1, 1]} : vector<2x128xf32> to vector<2x96xf32>
    %547 = arith.negf %546 : vector<2x96xf32>
    %548 = math.exp %547 : vector<2x96xf32>
    %cst_104 = arith.constant 1.000000e+00 : f32
    %549 = vector.broadcast %cst_104 : f32 to vector<2x96xf32>
    %550 = arith.addf %549, %548 : vector<2x96xf32>
    %551 = arith.divf %549, %550 : vector<2x96xf32>
    %552 = vector.extract_strided_slice %545 {offsets = [0, 96], sizes = [2, 32], strides = [1, 1]} : vector<2x128xf32> to vector<2x32xf32>
    %553 = math.tanh %552 : vector<2x32xf32>
    %554 = vector.extract_strided_slice %551 {offsets = [0, 0], sizes = [2, 32], strides = [1, 1]} : vector<2x96xf32> to vector<2x32xf32>
    %555 = vector.extract_strided_slice %551 {offsets = [0, 32], sizes = [2, 32], strides = [1, 1]} : vector<2x96xf32> to vector<2x32xf32>
    %556 = vector.extract_strided_slice %551 {offsets = [0, 64], sizes = [2, 32], strides = [1, 1]} : vector<2x96xf32> to vector<2x32xf32>
    %557 = arith.mulf %555, %542 : vector<2x32xf32>
    %558 = arith.mulf %554, %553 : vector<2x32xf32>
    %559 = arith.addf %557, %558 : vector<2x32xf32>
    %560 = math.tanh %559 : vector<2x32xf32>
    %561 = arith.mulf %556, %560 : vector<2x32xf32>
    %562 = vector.extract_strided_slice %12 {offsets = [5, 0, 0], sizes = [1, 2, 32], strides = [1, 1, 1]} : vector<8x2x32xi1> to vector<1x2x32xi1>
    %563 = vector.shape_cast %562 : vector<1x2x32xi1> to vector<2x32xi1>
    %564 = arith.select %563, %561, %541 : vector<2x32xi1>, vector<2x32xf32>
    %565 = arith.select %563, %559, %542 : vector<2x32xi1>, vector<2x32xf32>
    %566 = arith.truncf %564 : vector<2x32xf32> to vector<2x32xbf16>
    %cst_105 = arith.constant dense<0.000000e+00> : vector<2x128xf32>
    %567 = tpu.matmul %566, %45, %cst_105 {dimension_numbers = #tpu.dot_dimension_numbers<[1], [0], [0], [1], [0, 0, 1, 1], [], []>} : vector<2x32xbf16>, vector<32x128xbf16>, vector<2x128xf32> -> vector<2x128xf32>
    %568 = arith.addf %420, %567 : vector<2x128xf32>
    %569 = vector.extract_strided_slice %568 {offsets = [0, 0], sizes = [2, 96], strides = [1, 1]} : vector<2x128xf32> to vector<2x96xf32>
    %570 = arith.negf %569 : vector<2x96xf32>
    %571 = math.exp %570 : vector<2x96xf32>
    %cst_106 = arith.constant 1.000000e+00 : f32
    %572 = vector.broadcast %cst_106 : f32 to vector<2x96xf32>
    %573 = arith.addf %572, %571 : vector<2x96xf32>
    %574 = arith.divf %572, %573 : vector<2x96xf32>
    %575 = vector.extract_strided_slice %568 {offsets = [0, 96], sizes = [2, 32], strides = [1, 1]} : vector<2x128xf32> to vector<2x32xf32>
    %576 = math.tanh %575 : vector<2x32xf32>
    %577 = vector.extract_strided_slice %574 {offsets = [0, 0], sizes = [2, 32], strides = [1, 1]} : vector<2x96xf32> to vector<2x32xf32>
    %578 = vector.extract_strided_slice %574 {offsets = [0, 32], sizes = [2, 32], strides = [1, 1]} : vector<2x96xf32> to vector<2x32xf32>
    %579 = vector.extract_strided_slice %574 {offsets = [0, 64], sizes = [2, 32], strides = [1, 1]} : vector<2x96xf32> to vector<2x32xf32>
    %580 = arith.mulf %578, %565 : vector<2x32xf32>
    %581 = arith.mulf %577, %576 : vector<2x32xf32>
    %582 = arith.addf %580, %581 : vector<2x32xf32>
    %583 = math.tanh %582 : vector<2x32xf32>
    %584 = arith.mulf %579, %583 : vector<2x32xf32>
    %585 = vector.extract_strided_slice %12 {offsets = [6, 0, 0], sizes = [1, 2, 32], strides = [1, 1, 1]} : vector<8x2x32xi1> to vector<1x2x32xi1>
    %586 = vector.shape_cast %585 : vector<1x2x32xi1> to vector<2x32xi1>
    %587 = arith.select %586, %584, %564 : vector<2x32xi1>, vector<2x32xf32>
    %588 = arith.select %586, %582, %565 : vector<2x32xi1>, vector<2x32xf32>
    %589 = arith.truncf %587 : vector<2x32xf32> to vector<2x32xbf16>
    %cst_107 = arith.constant dense<0.000000e+00> : vector<2x128xf32>
    %590 = tpu.matmul %589, %45, %cst_107 {dimension_numbers = #tpu.dot_dimension_numbers<[1], [0], [0], [1], [0, 0, 1, 1], [], []>} : vector<2x32xbf16>, vector<32x128xbf16>, vector<2x128xf32> -> vector<2x128xf32>
    %591 = arith.addf %425, %590 : vector<2x128xf32>
    %592 = vector.extract_strided_slice %591 {offsets = [0, 0], sizes = [2, 96], strides = [1, 1]} : vector<2x128xf32> to vector<2x96xf32>
    %593 = arith.negf %592 : vector<2x96xf32>
    %594 = math.exp %593 : vector<2x96xf32>
    %cst_108 = arith.constant 1.000000e+00 : f32
    %595 = vector.broadcast %cst_108 : f32 to vector<2x96xf32>
    %596 = arith.addf %595, %594 : vector<2x96xf32>
    %597 = arith.divf %595, %596 : vector<2x96xf32>
    %598 = vector.extract_strided_slice %591 {offsets = [0, 96], sizes = [2, 32], strides = [1, 1]} : vector<2x128xf32> to vector<2x32xf32>
    %599 = math.tanh %598 : vector<2x32xf32>
    %600 = vector.extract_strided_slice %597 {offsets = [0, 0], sizes = [2, 32], strides = [1, 1]} : vector<2x96xf32> to vector<2x32xf32>
    %601 = vector.extract_strided_slice %597 {offsets = [0, 32], sizes = [2, 32], strides = [1, 1]} : vector<2x96xf32> to vector<2x32xf32>
    %602 = vector.extract_strided_slice %597 {offsets = [0, 64], sizes = [2, 32], strides = [1, 1]} : vector<2x96xf32> to vector<2x32xf32>
    %603 = arith.mulf %601, %588 : vector<2x32xf32>
    %604 = arith.mulf %600, %599 : vector<2x32xf32>
    %605 = arith.addf %603, %604 : vector<2x32xf32>
    %606 = math.tanh %605 : vector<2x32xf32>
    %607 = arith.mulf %602, %606 : vector<2x32xf32>
    %608 = vector.extract_strided_slice %12 {offsets = [7, 0, 0], sizes = [1, 2, 32], strides = [1, 1, 1]} : vector<8x2x32xi1> to vector<1x2x32xi1>
    %609 = vector.shape_cast %608 : vector<1x2x32xi1> to vector<2x32xi1>
    %610 = arith.select %609, %607, %587 : vector<2x32xi1>, vector<2x32xf32>
    %611 = vector.extract_strided_slice %356 {offsets = [0, 0], sizes = [2, 16], strides = [1, 1]} : vector<2x32xf32> to vector<2x16xf32>
    %612 = vector.extract_strided_slice %610 {offsets = [0, 0], sizes = [2, 16], strides = [1, 1]} : vector<2x32xf32> to vector<2x16xf32>
    %613 = vector.extract_strided_slice %356 {offsets = [0, 16], sizes = [2, 16], strides = [1, 1]} : vector<2x32xf32> to vector<2x16xf32>
    %614 = vector.extract_strided_slice %610 {offsets = [0, 16], sizes = [2, 16], strides = [1, 1]} : vector<2x32xf32> to vector<2x16xf32>
    %615 = tpu.concatenate %611, %612, %613, %614 in 1 : vector<2x16xf32>, vector<2x16xf32>, vector<2x16xf32>, vector<2x16xf32> -> vector<2x64xf32>
    %c0_109 = arith.constant 0 : index
    %c0_110 = arith.constant 0 : index
    %616 = vector.load %arg6[%c0_109, %c0_110] : memref<2x64xf32, #tpu.memory_space<vmem>>, vector<2x64xf32>
    tpu.vector_store %arg6[%c0_109, %c0_110], %615 {strides = array<i32>} : memref<2x64xf32, #tpu.memory_space<vmem>>, vector<2x64xf32>,
    %c0_111 = arith.constant 0 : index
    %c0_112 = arith.constant 0 : index
    %617 = vector.load %arg4[%c0_111, %c0_112] : memref<256x96xbf16, #tpu.memory_space<vmem>>, vector<64x96xbf16>
    %c64 = arith.constant 64 : index
    %c0_113 = arith.constant 0 : index
    %618 = vector.load %arg4[%c64, %c0_113] : memref<256x96xbf16, #tpu.memory_space<vmem>>, vector<96x64xbf16>
    %c160 = arith.constant 160 : index
    %c0_114 = arith.constant 0 : index
    %619 = vector.load %arg4[%c160, %c0_114] : memref<256x96xbf16, #tpu.memory_space<vmem>>, vector<64x32xbf16>
    %c224 = arith.constant 224 : index
    %c0_115 = arith.constant 0 : index
    %620 = vector.load %arg4[%c224, %c0_115] : memref<256x96xbf16, #tpu.memory_space<vmem>>, vector<32x4xbf16>
    %621 = arith.truncf %615 : vector<2x64xf32> to vector<2x64xbf16>
    %cst_116 = arith.constant dense<0.000000e+00> : vector<2x96xf32>
    %622 = tpu.matmul %621, %617, %cst_116 {dimension_numbers = #tpu.dot_dimension_numbers<[1], [0], [0], [1], [0, 0, 1, 1], [], []>} : vector<2x64xbf16>, vector<64x96xbf16>, vector<2x96xf32> -> vector<2x96xf32>
    %623 = vector.broadcast %38 : vector<1x96xf32> to vector<2x96xf32>
    %624 = arith.addf %622, %623 : vector<2x96xf32>
    %cst_117 = arith.constant 0.000000e+00 : f32
    %625 = vector.broadcast %cst_117 : f32 to vector<2x96xf32>
    %626 = arith.maximumf %624, %625 : vector<2x96xf32>
    %627 = arith.truncf %626 : vector<2x96xf32> to vector<2x96xbf16>
    %cst_118 = arith.constant dense<0.000000e+00> : vector<2x64xf32>
    %628 = tpu.matmul %627, %618, %cst_118 {dimension_numbers = #tpu.dot_dimension_numbers<[1], [0], [0], [1], [0, 0, 1, 1], [], []>} : vector<2x96xbf16>, vector<96x64xbf16>, vector<2x64xf32> -> vector<2x64xf32>
    %629 = vector.broadcast %39 : vector<1x64xf32> to vector<2x64xf32>
    %630 = arith.addf %628, %629 : vector<2x64xf32>
    %cst_119 = arith.constant 0.000000e+00 : f32
    %631 = vector.broadcast %cst_119 : f32 to vector<2x64xf32>
    %632 = arith.maximumf %630, %631 : vector<2x64xf32>
    %633 = arith.truncf %632 : vector<2x64xf32> to vector<2x64xbf16>
    %cst_120 = arith.constant dense<0.000000e+00> : vector<2x32xf32>
    %634 = tpu.matmul %633, %619, %cst_120 {dimension_numbers = #tpu.dot_dimension_numbers<[1], [0], [0], [1], [0, 0, 1, 1], [], []>} : vector<2x64xbf16>, vector<64x32xbf16>, vector<2x32xf32> -> vector<2x32xf32>
    %635 = vector.broadcast %40 : vector<1x32xf32> to vector<2x32xf32>
    %636 = arith.addf %634, %635 : vector<2x32xf32>
    %cst_121 = arith.constant 0.000000e+00 : f32
    %637 = vector.broadcast %cst_121 : f32 to vector<2x32xf32>
    %638 = arith.maximumf %636, %637 : vector<2x32xf32>
    %639 = arith.truncf %638 : vector<2x32xf32> to vector<2x32xbf16>
    %cst_122 = arith.constant dense<0.000000e+00> : vector<2x4xf32>
    %640 = tpu.matmul %639, %620, %cst_122 {dimension_numbers = #tpu.dot_dimension_numbers<[1], [0], [0], [1], [0, 0, 1, 1], [], []>} : vector<2x32xbf16>, vector<32x4xbf16>, vector<2x4xf32> -> vector<2x4xf32>
    %641 = vector.broadcast %41 : vector<1x4xf32> to vector<2x4xf32>
    %642 = arith.addf %640, %641 : vector<2x4xf32>
    %c0_123 = arith.constant 0 : index
    %c0_124 = arith.constant 0 : index
    %643 = vector.load %arg5[%c0_123, %c0_124] : memref<2x4xf32, #tpu.memory_space<vmem>>, vector<2x4xf32>
    tpu.vector_store %arg5[%c0_123, %c0_124], %642 {strides = array<i32>} : memref<2x4xf32, #tpu.memory_space<vmem>>, vector<2x4xf32>,
    return
  }
}

</mosaic_0001>

<llo_original>
// kernel: tpu_custom_call.1
$region0: #{tpu_custom_call.1}
  #allocation0 [shape = 'u32[]', space=smem, size = 0x4, offset = 0x4, fixed_abs, tag = 'smem constant byte address 0x4 - core index']
  #allocation1 [shape = 'u32[144,128]{1,0:T(1,128)}', space=vmem, size = 0x12000, scoped, tag = 'internal scratch']
  #allocation2 [shape = 'f32[8,2,32]{2,1,0:T(2,128)}', space=vmem, size = 0x2000, scoped, tag = 'scratch operand']
  %s0 = inlined_call_operand.vmem [shape: f32[8,2,16], index: 0, kind: input, shape index: {}]
  %s1 = inlined_call_operand.vmem [shape: s32[2,1], index: 1, kind: input, shape index: {}]
  %s2 = inlined_call_operand.vmem [shape: bf16[112,128], index: 2, kind: input, shape index: {}]
  %s3 = inlined_call_operand.vmem [shape: f32[8,128], index: 3, kind: input, shape index: {}]
  %s4 = inlined_call_operand.vmem [shape: bf16[256,96], index: 4, kind: input, shape index: {}]
  %s5 = inlined_call_operand.hbm [shape: f32[2,4], index: 5, kind: output, shape index: {0}]
  %s6 = inlined_call_operand.hbm [shape: f32[2,64], index: 6, kind: output, shape index: {1}]
  %7 = xla_tuple %s5, %s6
  %s8 = sld [smem:[#allocation0]]
  $region38: #{tpu_custom_call.1} parent=0
    _
  %s10 = ssub.s32 1, %s8
  %s11 = scalar_select 0, %s10, %s8
  $region1: #{tpu_custom_call.1} parent=0
    #allocation3 [shape = 'u8[1024]{0}', space=vmem, size = 0x400, scoped, tag = 'output window, operand 0, single buffered']
    #allocation4 [shape = 's32[1]{0}', space=sflag, size = 0x4, scoped, tag = 'scoped memory for tpu_custom_call.1']
    #allocation5 [shape = 'u8[1024]{0}', space=vmem, size = 0x400, scoped, tag = 'output window, operand 1, single buffered']
    #allocation6 [shape = 's32[1]{0}', space=sflag, size = 0x4, scoped, tag = 'scoped memory for tpu_custom_call.1']
    %12 = vsyncpa [#allocation4], 0
    %13 = vsyncpa [#allocation6], 0
    // Predicated region
    $region2: #{tpu_custom_call.1} parent=1 // pred_check
      _
    $region3: #{tpu_custom_call.1} parent=1 // pred_check_branch
      %15 = sbr.rel (0) target = $region5
    $region4: #{tpu_custom_call.1} parent=1 // pred_region
      _
    $region5: #{tpu_custom_call.1} parent=1 // pred_fallthru
      _
    // Predicated region
    $region6: #{tpu_custom_call.1} parent=1 // pred_check
      _
    $region7: #{tpu_custom_call.1} parent=1 // pred_check_branch
      %17 = sbr.rel (0) target = $region9
    $region8: #{tpu_custom_call.1} parent=1 // pred_region
      _
    $region9: #{tpu_custom_call.1} parent=1 // pred_fallthru
      _
    // Predicated region
    $region10: #{tpu_custom_call.1} parent=1 // pred_check
      _
    $region11: #{tpu_custom_call.1} parent=1 // pred_check_branch
      %19 = sbr.rel (0) target = $region13
    $region12: #{tpu_custom_call.1} parent=1 // pred_region
      _
    $region13: #{tpu_custom_call.1} parent=1 // pred_fallthru
      _
    // Predicated region
    $region14: #{tpu_custom_call.1} parent=1 // pred_check
      _
    $region15: #{tpu_custom_call.1} parent=1 // pred_check_branch
      %21 = sbr.rel (0) target = $region17
    $region16: #{tpu_custom_call.1} parent=1 // pred_region
      _
    $region17: #{tpu_custom_call.1} parent=1 // pred_fallthru
      _
    // Predicated region
    $region18: #{tpu_custom_call.1} parent=1 // pred_check
      _
    $region19: #{tpu_custom_call.1} parent=1 // pred_check_branch
      %23 = sbr.rel (0) target = $region21
    $region20: #{tpu_custom_call.1} parent=1 // pred_region
      _
    $region21: #{tpu_custom_call.1} parent=1 // pred_fallthru
      _
    %v25 = vld [vmem:[%s0] sm:$0x3]
    %v26 = vld [vmem:[%s0 + $0x2] sm:$0x3]
    %v27 = vld [vmem:[%s0 + $0x4] sm:$0x3]
    %v28 = vld [vmem:[%s0 + $0x6] sm:$0x3]
    %v29 = vld [vmem:[%s0 + $0x8] sm:$0x3]
    %v30 = vld [vmem:[%s0 + $0xa] sm:$0x3]
    %v31 = vld [vmem:[%s0 + $0xc] sm:$0x3]
    %v32 = vld [vmem:[%s0 + $0xe] sm:$0x3]
    %v33 = vld [vmem:[%s1] sm:$0x3]
    %v34 = vld [vmem:[%s3] sm:$0xff]
    %v35 = vlaneseq
    %v36 = vand.u32 %v35, 127
    %vm37 = vcmp.lt.s32.totalorder %v36, 16
    %v38 = vsel %vm37, 0, 7
    %v39 = vsel %vm37, 1, 6
    %v40 = vsel %vm37, 2, 5
    %v41 = vsel %vm37, 3, 4
    %v42 = vsel %vm37, 4, 3
    %v43 = vsel %vm37, 5, 2
    %v44 = vsel %vm37, 6, 1
    %v45 = vsel %vm37, 7, 0
    %46 = vset.pattern.permute.xlu0 0
    %47 = vperm.xlu0 %46, %v33
    %v48 = vpop.permute.xlu0 %47
    %vm49 = vcmp.lt.s32.totalorder %v38, %v48
    %vm50 = vcmp.lt.s32.totalorder %v39, %v48
    %vm51 = vcmp.lt.s32.totalorder %v40, %v48
    %vm52 = vcmp.lt.s32.totalorder %v41, %v48
    %vm53 = vcmp.lt.s32.totalorder %v42, %v48
    %vm54 = vcmp.lt.s32.totalorder %v43, %v48
    %vm55 = vcmp.lt.s32.totalorder %v44, %v48
    %vm56 = vcmp.lt.s32.totalorder %v45, %v48
    %vm57 = vcmp.lt.s32.totalorder %v36, 0
    %v58 = vsub.s32 0, %v36
    %v59 = vsel %vm57, %v58, %v36
    %v60 = vshrl.u32 %v59, 5
    %v61 = vand.u32 %v59, 31
    %v62 = vsub.s32 0, %v61
    %v63 = vsel %vm57, %v62, %v61
    %vm64 = vcmp.ne.s32.totalorder %v63, 0
    %vm65 = vcmp.lt.s32.totalorder %v63, 0
    %vm66 = vmand %vm65, %vm64
    %v67 = vadd.s32 %v63, 32
    %v68 = vsel %vm66, %v67, %v63
    %vm69 = vcmp.lt.s32.totalorder %v68, 16
    %v70 = vld [vmem:[%s2] sm:$0xf]
    %v71 = vld [vmem:[%s2 + $0x4] sm:$0xf]
    %v72 = vld [vmem:[%s2 + $0x8] sm:$0xf]
    %v73 = vld [vmem:[%s2 + $0xc] sm:$0xf]
    %v74 = vld [vmem:[%s2 + $0x10] sm:$0xf]
    %v75 = vld [vmem:[%s2 + $0x14] sm:$0xf]
    %v76 = vld [vmem:[%s2 + $0x18] sm:$0xf]
    %v77 = vld [vmem:[%s2 + $0x1c] sm:$0xf]
    %v78 = vld [vmem:[%s2 + $0x20] sm:$0xf]
    %v79 = vld [vmem:[%s2 + $0x24] sm:$0xf]
    %v80 = vld [vmem:[%s2 + $0x28] sm:$0xf]
    %v81 = vld [vmem:[%s2 + $0x2c] sm:$0xf]
    %v82 = vld [vmem:[%s2 + $0x30] sm:$0xf]
    %v83 = vld [vmem:[%s2 + $0x34] sm:$0xf]
    %v92 = vcombine.low %v25, %v26
    %v93 = vcombine.low %v27, %v28
    %v95 = vunpack.c.l.s4 1983009808
    %v96 = vunpack.c.0.s8 %v95
    %v97 = vlaneseq
    %v98 = vshrl.u32 %v97, 7
    %v99 = vsub.s32 %v96, %v98
    %v100 = vrot.slane %v92, %v99
    %v102 = vunpack.c.l.s4 1983009808
    %v103 = vunpack.c.0.s8 %v102
    %v104 = vlaneseq
    %v105 = vshrl.u32 %v104, 7
    %v106 = vsub.s32 %v103, %v105
    %v107 = vrot.slane %v93, %v106
    %v108 = vcombine.low %v100, %v107
    %v109 = vcombine.low %v29, %v30
    %v110 = vcombine.low %v31, %v32
    %v112 = vunpack.c.l.s4 1983009808
    %v113 = vunpack.c.0.s8 %v112
    %v114 = vlaneseq
    %v115 = vshrl.u32 %v114, 7
    %v116 = vsub.s32 %v113, %v115
    %v117 = vrot.slane %v109, %v116
    %v119 = vunpack.c.l.s4 1983009808
    %v120 = vunpack.c.0.s8 %v119
    %v121 = vlaneseq
    %v122 = vshrl.u32 %v121, 7
    %v123 = vsub.s32 %v120, %v122
    %v124 = vrot.slane %v110, %v123
    %v125 = vcombine.low %v117, %v124
    %v128 = vpack.c.bf16 %v125, %v108
    %v129 = vlaneseq
    %v130 = vshrl.u32 %v129, 7
    %v131 = vsub.s32 0, %v130
    %v132 = vrot.slane %v34, %v131
    %v135 = vunpack.c.l.b16 %v70
    %v136 = vunpack.c.l.b16 %v71
    %v137 = vpack.c.b16 %v136, %v135
    %vm139 = vcmask 130048
    %v141 = vsel %vm139, %v128, 0
    %143 = vmatprep.subr.bf16.mxu0 0
    %144 = vmatpush1.bf16.msra.mxu0 %v137
    %145 = vmatprep.subr.bf16.mxu0 0
    %146 = vmatpush1.bf16.msra.mxu0 0
    %147 = vmatprep.subr.bf16.mxu0 0
    %148 = vmatpush1.bf16.msra.mxu0 0
    %149 = vmatprep.subr.bf16.mxu0 0
    %150 = vmatpush1.bf16.msra.mxu0 0
    %151 = vmatprep.subr.bf16.mxu0 0
    %152 = vmatpush1.bf16.msra.mxu0 0
    %153 = vmatprep.subr.bf16.mxu0 0
    %154 = vmatpush1.bf16.msra.mxu0 0
    %155 = vmatprep.subr.bf16.mxu0 0
    %156 = vmatpush1.bf16.msra.mxu0 0
    %157 = vmatprep.subr.bf16.mxu0 0
    %158 = vmatpush1.bf16.msra.mxu0 0
    %159 = vmatprep.subr.bf16.mxu0 0
    %160 = vmatpush1.bf16.msra.mxu0 0
    %161 = vmatprep.subr.bf16.mxu0 0
    %162 = vmatpush1.bf16.msra.mxu0 0
    %163 = vmatprep.subr.bf16.mxu0 0
    %164 = vmatpush1.bf16.msra.mxu0 0
    %165 = vmatprep.subr.bf16.mxu0 0
    %166 = vmatpush1.bf16.msra.mxu0 0
    %167 = vmatprep.subr.bf16.mxu0 0
    %168 = vmatpush1.bf16.msra.mxu0 0
    %169 = vmatprep.subr.bf16.mxu0 0
    %170 = vmatpush1.bf16.msra.mxu0 0
    %171 = vmatprep.subr.bf16.mxu0 0
    %172 = vmatpush1.bf16.msra.mxu0 0
    %173 = vmatprep.subr.bf16.mxu0 0
    %174 = vmatpush1.bf16.msra.mxu0 0
    %175 = vmatprep.mubr.bf16.mxu0 0
    %176 = vmatmul.mubr.bf16.gmra.mrb[0].mxu0 %v141
    %v177 = vpop.f32.mrb[0].mxu0
    %v178 = vadd.f32 %v132, %v177
    %v179 = vpop.f32.mrb[0].mxu0
    %v180 = vpop.f32.mrb[0].mxu0
    %v181 = vadd.f32 %v132, %v180
    %v182 = vpop.f32.mrb[0].mxu0
    %183 = vdwg.mxu0
    %v186 = vcombine.high %v178, %v178
    %v188 = vunpack.c.l.s4 1983009808
    %v189 = vunpack.c.0.s8 %v188
    %v190 = vlaneseq
    %v191 = vshrl.u32 %v190, 7
    %v192 = vsub.s32 %v189, %v191
    %v193 = vrot.slane %v178, %v192
    %v195 = vunpack.c.l.s4 1983009808
    %v196 = vunpack.c.0.s8 %v195
    %v197 = vlaneseq
    %v198 = vshrl.u32 %v197, 7
    %v199 = vsub.s32 %v196, %v198
    %v200 = vrot.slane %v186, %v199
    %v201 = vcombine.high %v193, %v193
    %v202 = vcombine.high %v200, %v200
    %v203 = vcombine.high %v181, %v181
    %v205 = vunpack.c.l.s4 1983009808
    %v206 = vunpack.c.0.s8 %v205
    %v207 = vlaneseq
    %v208 = vshrl.u32 %v207, 7
    %v209 = vsub.s32 %v206, %v208
    %v210 = vrot.slane %v181, %v209
    %v212 = vunpack.c.l.s4 1983009808
    %v213 = vunpack.c.0.s8 %v212
    %v214 = vlaneseq
    %v215 = vshrl.u32 %v214, 7
    %v216 = vsub.s32 %v213, %v215
    %v217 = vrot.slane %v203, %v216
    %v218 = vcombine.high %v210, %v210
    %v219 = vcombine.high %v217, %v217
    %v228 = vsel %vm69, %v193, %v219
    %v229 = vsel %vm69, %v201, %v217
    %v230 = vsel %vm69, %v200, %v218
    %v231 = vsel %vm69, %v202, %v210
    %v232 = vsel %vm69, %v210, %v202
    %v233 = vsel %vm69, %v218, %v200
    %v234 = vsel %vm69, %v217, %v201
    %v235 = vsel %vm69, %v219, %v193
    %v240 = vunpack.c.l.b16 %v72
    %v241 = vunpack.c.l.b16 %v73
    %v242 = vunpack.c.l.b16 %v74
    %v243 = vunpack.c.l.b16 %v75
    %v244 = vpack.c.b16 %v241, %v240
    %v245 = vpack.c.b16 %v243, %v242
    %vm248 = vcmask 261120
    %v250 = vsel %vm248, 0, 0
    %252 = vmatprep.subr.bf16.mxu0 0
    %253 = vmatpush1.bf16.msra.mxu0 %v244
    %254 = vmatprep.subr.bf16.mxu0 0
    %255 = vmatpush1.bf16.msra.mxu0 %v245
    %256 = vmatprep.subr.bf16.mxu0 0
    %257 = vmatpush1.bf16.msra.mxu0 0
    %258 = vmatprep.subr.bf16.mxu0 0
    %259 = vmatpush1.bf16.msra.mxu0 0
    %260 = vmatprep.subr.bf16.mxu0 0
    %261 = vmatpush1.bf16.msra.mxu0 0
    %262 = vmatprep.subr.bf16.mxu0 0
    %263 = vmatpush1.bf16.msra.mxu0 0
    %264 = vmatprep.subr.bf16.mxu0 0
    %265 = vmatpush1.bf16.msra.mxu0 0
    %266 = vmatprep.subr.bf16.mxu0 0
    %267 = vmatpush1.bf16.msra.mxu0 0
    %268 = vmatprep.subr.bf16.mxu0 0
    %269 = vmatpush1.bf16.msra.mxu0 0
    %270 = vmatprep.subr.bf16.mxu0 0
    %271 = vmatpush1.bf16.msra.mxu0 0
    %272 = vmatprep.subr.bf16.mxu0 0
    %273 = vmatpush1.bf16.msra.mxu0 0
    %274 = vmatprep.subr.bf16.mxu0 0
    %275 = vmatpush1.bf16.msra.mxu0 0
    %276 = vmatprep.subr.bf16.mxu0 0
    %277 = vmatpush1.bf16.msra.mxu0 0
    %278 = vmatprep.subr.bf16.mxu0 0
    %279 = vmatpush1.bf16.msra.mxu0 0
    %280 = vmatprep.subr.bf16.mxu0 0
    %281 = vmatpush1.bf16.msra.mxu0 0
    %282 = vmatprep.subr.bf16.mxu0 0
    %283 = vmatpush1.bf16.msra.mxu0 0
    %284 = vmatprep.mubr.bf16.mxu0 0
    %285 = vmatmul.mubr.bf16.gmra.mrb[0].mxu0 %v250
    %v286 = vpop.f32.mrb[0].mxu0
    %v287 = vadd.f32 0.0, %v286
    %v288 = vpop.f32.mrb[0].mxu0
    %v289 = vpop.f32.mrb[0].mxu0
    %v290 = vpop.f32.mrb[0].mxu0
    %291 = vdwg.mxu0
    %v292 = vadd.f32 %v228, %v287
    %v293 = vxor.u32 %v292, 2147483648
    %v294 = vmul.f32 %v293, 1.442695
    %v295 = vpow.pop %v294
    %v296 = vadd.f32 %v295, 1.0
    %v297 = vrcp.pop %v296
    %v298 = vmul.f32 1.0, %v297
    %v299 = vtanh.pop %v292
    %v300 = vmul.f32 %v298, 0.0
    %302 = vrot.lane.b32.xlu0 %v299, 32
    %v303 = vpop.permute.xlu0 %302
    %v305 = vmul.f32 %v298, %v303
    %307 = vrot.lane.b32.xlu0 %v305, 32
    %v308 = vpop.permute.xlu0 %307
    %v310 = vadd.f32 %v300, %v308
    %v311 = vtanh.pop %v310
    %313 = vrot.lane.b32.xlu0 %v311, 32
    %v314 = vpop.permute.xlu0 %313
    %v316 = vmul.f32 %v298, %v314
    %318 = vrot.lane.b32.xlu0 %v316, 64
    %v319 = vpop.permute.xlu0 %318
    %v321 = vsel %vm49, %v319, 0.0
    %vm322 = vcmask 123904
    %323 = vst.msk [vmem:[#allocation2] sm:$0x3] %vm322, %v321
    %s324 = scalar_lea.vmem [#allocation2], 14
    %vm325 = vcmask 255104
    %326 = vst.msk [vmem:[%s324] sm:$0x3] %vm325, %v321
    %328 = vrot.lane.b32.xlu0 %v310, 96
    %v329 = vpop.permute.xlu0 %328
    %v331 = vsel %vm49, %v329, 0.0
    %v332 = vpack.c.bf16 %v321, %v321
    %v334 = vsel %vm248, %v332, 0
    %336 = vmatprep.subr.bf16.mxu0 0
    %337 = vmatpush1.bf16.msra.mxu0 %v244
    %338 = vmatprep.subr.bf16.mxu0 0
    %339 = vmatpush1.bf16.msra.mxu0 %v245
    %340 = vmatprep.subr.bf16.mxu0 0
    %341 = vmatpush1.bf16.msra.mxu0 0
    %342 = vmatprep.subr.bf16.mxu0 0
    %343 = vmatpush1.bf16.msra.mxu0 0
    %344 = vmatprep.subr.bf16.mxu0 0
    %345 = vmatpush1.bf16.msra.mxu0 0
    %346 = vmatprep.subr.bf16.mxu0 0
    %347 = vmatpush1.bf16.msra.mxu0 0
    %348 = vmatprep.subr.bf16.mxu0 0
    %349 = vmatpush1.bf16.msra.mxu0 0
    %350 = vmatprep.subr.bf16.mxu0 0
    %351 = vmatpush1.bf16.msra.mxu0 0
    %352 = vmatprep.subr.bf16.mxu0 0
    %353 = vmatpush1.bf16.msra.mxu0 0
    %354 = vmatprep.subr.bf16.mxu0 0
    %355 = vmatpush1.bf16.msra.mxu0 0
    %356 = vmatprep.subr.bf16.mxu0 0
    %357 = vmatpush1.bf16.msra.mxu0 0
    %358 = vmatprep.subr.bf16.mxu0 0
    %359 = vmatpush1.bf16.msra.mxu0 0
    %360 = vmatprep.subr.bf16.mxu0 0
    %361 = vmatpush1.bf16.msra.mxu0 0
    %362 = vmatprep.subr.bf16.mxu0 0
    %363 = vmatpush1.bf16.msra.mxu0 0
    %364 = vmatprep.subr.bf16.mxu0 0
    %365 = vmatpush1.bf16.msra.mxu0 0
    %366 = vmatprep.subr.bf16.mxu0 0
    %367 = vmatpush1.bf16.msra.mxu0 0
    %368 = vmatprep.mubr.bf16.mxu0 0
    %369 = vmatmul.mubr.bf16.gmra.mrb[0].mxu0 %v334
    %v370 = vpop.f32.mrb[0].mxu0
    %v371 = vadd.f32 0.0, %v370
    %v372 = vpop.f32.mrb[0].mxu0
    %v373 = vpop.f32.mrb[0].mxu0
    %v374 = vpop.f32.mrb[0].mxu0
    %375 = vdwg.mxu0
    %v376 = vadd.f32 %v229, %v371
    %v377 = vxor.u32 %v376, 2147483648
    %v378 = vmul.f32 %v377, 1.442695
    %v379 = vpow.pop %v378
    %v380 = vadd.f32 %v379, 1.0
    %v381 = vrcp.pop %v380
    %v382 = vmul.f32 1.0, %v381
    %v383 = vtanh.pop %v376
    %385 = vrot.lane.b32.xlu0 %v331, 32
    %v386 = vpop.permute.xlu0 %385
    %v388 = vmul.f32 %v382, %v386
    %390 = vrot.lane.b32.xlu0 %v383, 32
    %v391 = vpop.permute.xlu0 %390
    %v393 = vmul.f32 %v382, %v391
    %395 = vrot.lane.b32.xlu0 %v393, 32
    %v396 = vpop.permute.xlu0 %395
    %v398 = vadd.f32 %v388, %v396
    %v399 = vtanh.pop %v398
    %401 = vrot.lane.b32.xlu0 %v399, 32
    %v402 = vpop.permute.xlu0 %401
    %v404 = vmul.f32 %v382, %v402
    %406 = vrot.lane.b32.xlu0 %v404, 64
    %v407 = vpop.permute.xlu0 %406
    %v409 = vsel %vm50, %v407, 0.0
    %s410 = scalar_lea.vmem [#allocation2], 2
    %411 = vst.msk [vmem:[%s410] sm:$0x3] %vm322, %v409
    %s412 = scalar_lea.vmem [#allocation2], 12
    %413 = vst.msk [vmem:[%s412] sm:$0x3] %vm325, %v409
    %v414 = vsel %vm50, %v407, %v321
    %416 = vrot.lane.b32.xlu0 %v398, 96
    %v417 = vpop.permute.xlu0 %416
    %v419 = vsel %vm50, %v417, %v331
    %v420 = vpack.c.bf16 %v414, %v414
    %v422 = vsel %vm248, %v420, 0
    %424 = vmatprep.subr.bf16.mxu0 0
    %425 = vmatpush1.bf16.msra.mxu0 %v244
    %426 = vmatprep.subr.bf16.mxu0 0
    %427 = vmatpush1.bf16.msra.mxu0 %v245
    %428 = vmatprep.subr.bf16.mxu0 0
    %429 = vmatpush1.bf16.msra.mxu0 0
    %430 = vmatprep.subr.bf16.mxu0 0
    %431 = vmatpush1.bf16.msra.mxu0 0
    %432 = vmatprep.subr.bf16.mxu0 0
    %433 = vmatpush1.bf16.msra.mxu0 0
    %434 = vmatprep.subr.bf16.mxu0 0
    %435 = vmatpush1.bf16.msra.mxu0 0
    %436 = vmatprep.subr.bf16.mxu0 0
    %437 = vmatpush1.bf16.msra.mxu0 0
    %438 = vmatprep.subr.bf16.mxu0 0
    %439 = vmatpush1.bf16.msra.mxu0 0
    %440 = vmatprep.subr.bf16.mxu0 0
    %441 = vmatpush1.bf16.msra.mxu0 0
    %442 = vmatprep.subr.bf16.mxu0 0
    %443 = vmatpush1.bf16.msra.mxu0 0
    %444 = vmatprep.subr.bf16.mxu0 0
    %445 = vmatpush1.bf16.msra.mxu0 0
    %446 = vmatprep.subr.bf16.mxu0 0
    %447 = vmatpush1.bf16.msra.mxu0 0
    %448 = vmatprep.subr.bf16.mxu0 0
    %449 = vmatpush1.bf16.msra.mxu0 0
    %450 = vmatprep.subr.bf16.mxu0 0
    %451 = vmatpush1.bf16.msra.mxu0 0
    %452 = vmatprep.subr.bf16.mxu0 0
    %453 = vmatpush1.bf16.msra.mxu0 0
    %454 = vmatprep.subr.bf16.mxu0 0
    %455 = vmatpush1.bf16.msra.mxu0 0
    %456 = vmatprep.mubr.bf16.mxu0 0
    %457 = vmatmul.mubr.bf16.gmra.mrb[0].mxu0 %v422
    %v458 = vpop.f32.mrb[0].mxu0
    %v459 = vadd.f32 0.0, %v458
    %v460 = vpop.f32.mrb[0].mxu0
    %v461 = vpop.f32.mrb[0].mxu0
    %v462 = vpop.f32.mrb[0].mxu0
    %463 = vdwg.mxu0
    %v464 = vadd.f32 %v230, %v459
    %v465 = vxor.u32 %v464, 2147483648
    %v466 = vmul.f32 %v465, 1.442695
    %v467 = vpow.pop %v466
    %v468 = vadd.f32 %v467, 1.0
    %v469 = vrcp.pop %v468
    %v470 = vmul.f32 1.0, %v469
    %v471 = vtanh.pop %v464
    %473 = vrot.lane.b32.xlu0 %v419, 32
    %v474 = vpop.permute.xlu0 %473
    %v476 = vmul.f32 %v470, %v474
    %478 = vrot.lane.b32.xlu0 %v471, 32
    %v479 = vpop.permute.xlu0 %478
    %v481 = vmul.f32 %v470, %v479
    %483 = vrot.lane.b32.xlu0 %v481, 32
    %v484 = vpop.permute.xlu0 %483
    %v486 = vadd.f32 %v476, %v484
    %v487 = vtanh.pop %v486
    %489 = vrot.lane.b32.xlu0 %v487, 32
    %v490 = vpop.permute.xlu0 %489
    %v492 = vmul.f32 %v470, %v490
    %494 = vrot.lane.b32.xlu0 %v492, 64
    %v495 = vpop.permute.xlu0 %494
    %v497 = vsel %vm51, %v495, 0.0
    %s498 = scalar_lea.vmem [#allocation2], 4
    %499 = vst.msk [vmem:[%s498] sm:$0x3] %vm322, %v497
    %s500 = scalar_lea.vmem [#allocation2], 10
    %501 = vst.msk [vmem:[%s500] sm:$0x3] %vm325, %v497
    %v502 = vsel %vm51, %v495, %v414
    %504 = vrot.lane.b32.xlu0 %v486, 96
    %v505 = vpop.permute.xlu0 %504
    %v507 = vsel %vm51, %v505, %v419
    %v508 = vpack.c.bf16 %v502, %v502
    %v510 = vsel %vm248, %v508, 0
    %512 = vmatprep.subr.bf16.mxu0 0
    %513 = vmatpush1.bf16.msra.mxu0 %v244
    %514 = vmatprep.subr.bf16.mxu0 0
    %515 = vmatpush1.bf16.msra.mxu0 %v245
    %516 = vmatprep.subr.bf16.mxu0 0
    %517 = vmatpush1.bf16.msra.mxu0 0
    %518 = vmatprep.subr.bf16.mxu0 0
    %519 = vmatpush1.bf16.msra.mxu0 0
    %520 = vmatprep.subr.bf16.mxu0 0
    %521 = vmatpush1.bf16.msra.mxu0 0
    %522 = vmatprep.subr.bf16.mxu0 0
    %523 = vmatpush1.bf16.msra.mxu0 0
    %524 = vmatprep.subr.bf16.mxu0 0
    %525 = vmatpush1.bf16.msra.mxu0 0
    %526 = vmatprep.subr.bf16.mxu0 0
    %527 = vmatpush1.bf16.msra.mxu0 0
    %528 = vmatprep.subr.bf16.mxu0 0
    %529 = vmatpush1.bf16.msra.mxu0 0
    %530 = vmatprep.subr.bf16.mxu0 0
    %531 = vmatpush1.bf16.msra.mxu0 0
    %532 = vmatprep.subr.bf16.mxu0 0
    %533 = vmatpush1.bf16.msra.mxu0 0
    %534 = vmatprep.subr.bf16.mxu0 0
    %535 = vmatpush1.bf16.msra.mxu0 0
    %536 = vmatprep.subr.bf16.mxu0 0
    %537 = vmatpush1.bf16.msra.mxu0 0
    %538 = vmatprep.subr.bf16.mxu0 0
    %539 = vmatpush1.bf16.msra.mxu0 0
    %540 = vmatprep.subr.bf16.mxu0 0
    %541 = vmatpush1.bf16.msra.mxu0 0
    %542 = vmatprep.subr.bf16.mxu0 0
    %543 = vmatpush1.bf16.msra.mxu0 0
    %544 = vmatprep.mubr.bf16.mxu0 0
    %545 = vmatmul.mubr.bf16.gmra.mrb[0].mxu0 %v510
    %v546 = vpop.f32.mrb[0].mxu0
    %v547 = vadd.f32 0.0, %v546
    %v548 = vpop.f32.mrb[0].mxu0
    %v549 = vpop.f32.mrb[0].mxu0
    %v550 = vpop.f32.mrb[0].mxu0
    %551 = vdwg.mxu0
    %v552 = vadd.f32 %v231, %v547
    %v553 = vxor.u32 %v552, 2147483648
    %v554 = vmul.f32 %v553, 1.442695
    %v555 = vpow.pop %v554
    %v556 = vadd.f32 %v555, 1.0
    %v557 = vrcp.pop %v556
    %v558 = vmul.f32 1.0, %v557
    %v559 = vtanh.pop %v552
    %561 = vrot.lane.b32.xlu0 %v507, 32
    %v562 = vpop.permute.xlu0 %561
    %v564 = vmul.f32 %v558, %v562
    %566 = vrot.lane.b32.xlu0 %v559, 32
    %v567 = vpop.permute.xlu0 %566
    %v569 = vmul.f32 %v558, %v567
    %571 = vrot.lane.b32.xlu0 %v569, 32
    %v572 = vpop.permute.xlu0 %571
    %v574 = vadd.f32 %v564, %v572
    %v575 = vtanh.pop %v574
    %577 = vrot.lane.b32.xlu0 %v575, 32
    %v578 = vpop.permute.xlu0 %577
    %v580 = vmul.f32 %v558, %v578
    %582 = vrot.lane.b32.xlu0 %v580, 64
    %v583 = vpop.permute.xlu0 %582
    %v585 = vsel %vm52, %v583, 0.0
    %s586 = scalar_lea.vmem [#allocation2], 6
    %587 = vst.msk [vmem:[%s586] sm:$0x3] %vm322, %v585
    %s588 = scalar_lea.vmem [#allocation2], 8
    %589 = vst.msk [vmem:[%s588] sm:$0x3] %vm325, %v585
    %v590 = vsel %vm52, %v583, %v502
    %592 = vrot.lane.b32.xlu0 %v574, 96
    %v593 = vpop.permute.xlu0 %592
    %v595 = vsel %vm52, %v593, %v507
    %v596 = vpack.c.bf16 %v590, %v590
    %v598 = vsel %vm248, %v596, 0
    %600 = vmatprep.subr.bf16.mxu0 0
    %601 = vmatpush1.bf16.msra.mxu0 %v244
    %602 = vmatprep.subr.bf16.mxu0 0
    %603 = vmatpush1.bf16.msra.mxu0 %v245
    %604 = vmatprep.subr.bf16.mxu0 0
    %605 = vmatpush1.bf16.msra.mxu0 0
    %606 = vmatprep.subr.bf16.mxu0 0
    %607 = vmatpush1.bf16.msra.mxu0 0
    %608 = vmatprep.subr.bf16.mxu0 0
    %609 = vmatpush1.bf16.msra.mxu0 0
    %610 = vmatprep.subr.bf16.mxu0 0
    %611 = vmatpush1.bf16.msra.mxu0 0
    %612 = vmatprep.subr.bf16.mxu0 0
    %613 = vmatpush1.bf16.msra.mxu0 0
    %614 = vmatprep.subr.bf16.mxu0 0
    %615 = vmatpush1.bf16.msra.mxu0 0
    %616 = vmatprep.subr.bf16.mxu0 0
    %617 = vmatpush1.bf16.msra.mxu0 0
    %618 = vmatprep.subr.bf16.mxu0 0
    %619 = vmatpush1.bf16.msra.mxu0 0
    %620 = vmatprep.subr.bf16.mxu0 0
    %621 = vmatpush1.bf16.msra.mxu0 0
    %622 = vmatprep.subr.bf16.mxu0 0
    %623 = vmatpush1.bf16.msra.mxu0 0
    %624 = vmatprep.subr.bf16.mxu0 0
    %625 = vmatpush1.bf16.msra.mxu0 0
    %626 = vmatprep.subr.bf16.mxu0 0
    %627 = vmatpush1.bf16.msra.mxu0 0
    %628 = vmatprep.subr.bf16.mxu0 0
    %629 = vmatpush1.bf16.msra.mxu0 0
    %630 = vmatprep.subr.bf16.mxu0 0
    %631 = vmatpush1.bf16.msra.mxu0 0
    %632 = vmatprep.mubr.bf16.mxu0 0
    %633 = vmatmul.mubr.bf16.gmra.mrb[0].mxu0 %v598
    %v634 = vpop.f32.mrb[0].mxu0
    %v635 = vadd.f32 0.0, %v634
    %v636 = vpop.f32.mrb[0].mxu0
    %v637 = vpop.f32.mrb[0].mxu0
    %v638 = vpop.f32.mrb[0].mxu0
    %639 = vdwg.mxu0
    %v640 = vadd.f32 %v232, %v635
    %v641 = vxor.u32 %v640, 2147483648
    %v642 = vmul.f32 %v641, 1.442695
    %v643 = vpow.pop %v642
    %v644 = vadd.f32 %v643, 1.0
    %v645 = vrcp.pop %v644
    %v646 = vmul.f32 1.0, %v645
    %v647 = vtanh.pop %v640
    %649 = vrot.lane.b32.xlu0 %v595, 32
    %v650 = vpop.permute.xlu0 %649
    %v652 = vmul.f32 %v646, %v650
    %654 = vrot.lane.b32.xlu0 %v647, 32
    %v655 = vpop.permute.xlu0 %654
    %v657 = vmul.f32 %v646, %v655
    %659 = vrot.lane.b32.xlu0 %v657, 32
    %v660 = vpop.permute.xlu0 %659
    %v662 = vadd.f32 %v652, %v660
    %v663 = vtanh.pop %v662
    %665 = vrot.lane.b32.xlu0 %v663, 32
    %v666 = vpop.permute.xlu0 %665
    %v668 = vmul.f32 %v646, %v666
    %670 = vrot.lane.b32.xlu0 %v668, 64
    %v671 = vpop.permute.xlu0 %670
    %v673 = vsel %vm53, %v671, 0.0
    %674 = vst.msk [vmem:[%s588] sm:$0x3] %vm322, %v673
    %675 = vst.msk [vmem:[%s586] sm:$0x3] %vm325, %v673
    %v676 = vsel %vm53, %v671, %v590
    %678 = vrot.lane.b32.xlu0 %v662, 96
    %v679 = vpop.permute.xlu0 %678
    %v681 = vsel %vm53, %v679, %v595
    %v682 = vpack.c.bf16 %v676, %v676
    %v684 = vsel %vm248, %v682, 0
    %686 = vmatprep.subr.bf16.mxu0 0
    %687 = vmatpush1.bf16.msra.mxu0 %v244
    %688 = vmatprep.subr.bf16.mxu0 0
    %689 = vmatpush1.bf16.msra.mxu0 %v245
    %690 = vmatprep.subr.bf16.mxu0 0
    %691 = vmatpush1.bf16.msra.mxu0 0
    %692 = vmatprep.subr.bf16.mxu0 0
    %693 = vmatpush1.bf16.msra.mxu0 0
    %694 = vmatprep.subr.bf16.mxu0 0
    %695 = vmatpush1.bf16.msra.mxu0 0
    %696 = vmatprep.subr.bf16.mxu0 0
    %697 = vmatpush1.bf16.msra.mxu0 0
    %698 = vmatprep.subr.bf16.mxu0 0
    %699 = vmatpush1.bf16.msra.mxu0 0
    %700 = vmatprep.subr.bf16.mxu0 0
    %701 = vmatpush1.bf16.msra.mxu0 0
    %702 = vmatprep.subr.bf16.mxu0 0
    %703 = vmatpush1.bf16.msra.mxu0 0
    %704 = vmatprep.subr.bf16.mxu0 0
    %705 = vmatpush1.bf16.msra.mxu0 0
    %706 = vmatprep.subr.bf16.mxu0 0
    %707 = vmatpush1.bf16.msra.mxu0 0
    %708 = vmatprep.subr.bf16.mxu0 0
    %709 = vmatpush1.bf16.msra.mxu0 0
    %710 = vmatprep.subr.bf16.mxu0 0
    %711 = vmatpush1.bf16.msra.mxu0 0
    %712 = vmatprep.subr.bf16.mxu0 0
    %713 = vmatpush1.bf16.msra.mxu0 0
    %714 = vmatprep.subr.bf16.mxu0 0
    %715 = vmatpush1.bf16.msra.mxu0 0
    %716 = vmatprep.subr.bf16.mxu0 0
    %717 = vmatpush1.bf16.msra.mxu0 0
    %718 = vmatprep.mubr.bf16.mxu0 0
    %719 = vmatmul.mubr.bf16.gmra.mrb[0].mxu0 %v684
    %v720 = vpop.f32.mrb[0].mxu0
    %v721 = vadd.f32 0.0, %v720
    %v722 = vpop.f32.mrb[0].mxu0
    %v723 = vpop.f32.mrb[0].mxu0
    %v724 = vpop.f32.mrb[0].mxu0
    %725 = vdwg.mxu0
    %v726 = vadd.f32 %v233, %v721
    %v727 = vxor.u32 %v726, 2147483648
    %v728 = vmul.f32 %v727, 1.442695
    %v729 = vpow.pop %v728
    %v730 = vadd.f32 %v729, 1.0
    %v731 = vrcp.pop %v730
    %v732 = vmul.f32 1.0, %v731
    %v733 = vtanh.pop %v726
    %735 = vrot.lane.b32.xlu0 %v681, 32
    %v736 = vpop.permute.xlu0 %735
    %v738 = vmul.f32 %v732, %v736
    %740 = vrot.lane.b32.xlu0 %v733, 32
    %v741 = vpop.permute.xlu0 %740
    %v743 = vmul.f32 %v732, %v741
    %745 = vrot.lane.b32.xlu0 %v743, 32
    %v746 = vpop.permute.xlu0 %745
    %v748 = vadd.f32 %v738, %v746
    %v749 = vtanh.pop %v748
    %751 = vrot.lane.b32.xlu0 %v749, 32
    %v752 = vpop.permute.xlu0 %751
    %v754 = vmul.f32 %v732, %v752
    %756 = vrot.lane.b32.xlu0 %v754, 64
    %v757 = vpop.permute.xlu0 %756
    %v759 = vsel %vm54, %v757, 0.0
    %760 = vst.msk [vmem:[%s500] sm:$0x3] %vm322, %v759
    %761 = vst.msk [vmem:[%s498] sm:$0x3] %vm325, %v759
    %v762 = vsel %vm54, %v757, %v676
    %764 = vrot.lane.b32.xlu0 %v748, 96
    %v765 = vpop.permute.xlu0 %764
    %v767 = vsel %vm54, %v765, %v681
    %v768 = vpack.c.bf16 %v762, %v762
    %v770 = vsel %vm248, %v768, 0
    %772 = vmatprep.subr.bf16.mxu0 0
    %773 = vmatpush1.bf16.msra.mxu0 %v244
    %774 = vmatprep.subr.bf16.mxu0 0
    %775 = vmatpush1.bf16.msra.mxu0 %v245
    %776 = vmatprep.subr.bf16.mxu0 0
    %777 = vmatpush1.bf16.msra.mxu0 0
    %778 = vmatprep.subr.bf16.mxu0 0
    %779 = vmatpush1.bf16.msra.mxu0 0
    %780 = vmatprep.subr.bf16.mxu0 0
    %781 = vmatpush1.bf16.msra.mxu0 0
    %782 = vmatprep.subr.bf16.mxu0 0
    %783 = vmatpush1.bf16.msra.mxu0 0
    %784 = vmatprep.subr.bf16.mxu0 0
    %785 = vmatpush1.bf16.msra.mxu0 0
    %786 = vmatprep.subr.bf16.mxu0 0
    %787 = vmatpush1.bf16.msra.mxu0 0
    %788 = vmatprep.subr.bf16.mxu0 0
    %789 = vmatpush1.bf16.msra.mxu0 0
    %790 = vmatprep.subr.bf16.mxu0 0
    %791 = vmatpush1.bf16.msra.mxu0 0
    %792 = vmatprep.subr.bf16.mxu0 0
    %793 = vmatpush1.bf16.msra.mxu0 0
    %794 = vmatprep.subr.bf16.mxu0 0
    %795 = vmatpush1.bf16.msra.mxu0 0
    %796 = vmatprep.subr.bf16.mxu0 0
    %797 = vmatpush1.bf16.msra.mxu0 0
    %798 = vmatprep.subr.bf16.mxu0 0
    %799 = vmatpush1.bf16.msra.mxu0 0
    %800 = vmatprep.subr.bf16.mxu0 0
    %801 = vmatpush1.bf16.msra.mxu0 0
    %802 = vmatprep.subr.bf16.mxu0 0
    %803 = vmatpush1.bf16.msra.mxu0 0
    %804 = vmatprep.mubr.bf16.mxu0 0
    %805 = vmatmul.mubr.bf16.gmra.mrb[0].mxu0 %v770
    %v806 = vpop.f32.mrb[0].mxu0
    %v807 = vadd.f32 0.0, %v806
    %v808 = vpop.f32.mrb[0].mxu0
    %v809 = vpop.f32.mrb[0].mxu0
    %v810 = vpop.f32.mrb[0].mxu0
    %811 = vdwg.mxu0
    %v812 = vadd.f32 %v234, %v807
    %v813 = vxor.u32 %v812, 2147483648
    %v814 = vmul.f32 %v813, 1.442695
    %v815 = vpow.pop %v814
    %v816 = vadd.f32 %v815, 1.0
    %v817 = vrcp.pop %v816
    %v818 = vmul.f32 1.0, %v817
    %v819 = vtanh.pop %v812
    %821 = vrot.lane.b32.xlu0 %v767, 32
    %v822 = vpop.permute.xlu0 %821
    %v824 = vmul.f32 %v818, %v822
    %826 = vrot.lane.b32.xlu0 %v819, 32
    %v827 = vpop.permute.xlu0 %826
    %v829 = vmul.f32 %v818, %v827
    %831 = vrot.lane.b32.xlu0 %v829, 32
    %v832 = vpop.permute.xlu0 %831
    %v834 = vadd.f32 %v824, %v832
    %v835 = vtanh.pop %v834
    %837 = vrot.lane.b32.xlu0 %v835, 32
    %v838 = vpop.permute.xlu0 %837
    %v840 = vmul.f32 %v818, %v838
    %842 = vrot.lane.b32.xlu0 %v840, 64
    %v843 = vpop.permute.xlu0 %842
    %v845 = vsel %vm55, %v843, 0.0
    %846 = vst.msk [vmem:[%s412] sm:$0x3] %vm322, %v845
    %847 = vst.msk [vmem:[%s410] sm:$0x3] %vm325, %v845
    %v848 = vsel %vm55, %v843, %v762
    %850 = vrot.lane.b32.xlu0 %v834, 96
    %v851 = vpop.permute.xlu0 %850
    %v853 = vsel %vm55, %v851, %v767
    %v854 = vpack.c.bf16 %v848, %v848
    %v856 = vsel %vm248, %v854, 0
    %858 = vmatprep.subr.bf16.mxu0 0
    %859 = vmatpush1.bf16.msra.mxu0 %v244
    %860 = vmatprep.subr.bf16.mxu0 0
    %861 = vmatpush1.bf16.msra.mxu0 %v245
    %862 = vmatprep.subr.bf16.mxu0 0
    %863 = vmatpush1.bf16.msra.mxu0 0
    %864 = vmatprep.subr.bf16.mxu0 0
    %865 = vmatpush1.bf16.msra.mxu0 0
    %866 = vmatprep.subr.bf16.mxu0 0
    %867 = vmatpush1.bf16.msra.mxu0 0
    %868 = vmatprep.subr.bf16.mxu0 0
    %869 = vmatpush1.bf16.msra.mxu0 0
    %870 = vmatprep.subr.bf16.mxu0 0
    %871 = vmatpush1.bf16.msra.mxu0 0
    %872 = vmatprep.subr.bf16.mxu0 0
    %873 = vmatpush1.bf16.msra.mxu0 0
    %874 = vmatprep.subr.bf16.mxu0 0
    %875 = vmatpush1.bf16.msra.mxu0 0
    %876 = vmatprep.subr.bf16.mxu0 0
    %877 = vmatpush1.bf16.msra.mxu0 0
    %878 = vmatprep.subr.bf16.mxu0 0
    %879 = vmatpush1.bf16.msra.mxu0 0
    %880 = vmatprep.subr.bf16.mxu0 0
    %881 = vmatpush1.bf16.msra.mxu0 0
    %882 = vmatprep.subr.bf16.mxu0 0
    %883 = vmatpush1.bf16.msra.mxu0 0
    %884 = vmatprep.subr.bf16.mxu0 0
    %885 = vmatpush1.bf16.msra.mxu0 0
    %886 = vmatprep.subr.bf16.mxu0 0
    %887 = vmatpush1.bf16.msra.mxu0 0
    %888 = vmatprep.subr.bf16.mxu0 0
    %889 = vmatpush1.bf16.msra.mxu0 0
    %890 = vmatprep.mubr.bf16.mxu0 0
    %891 = vmatmul.mubr.bf16.gmra.mrb[0].mxu0 %v856
    %v892 = vpop.f32.mrb[0].mxu0
    %v893 = vadd.f32 0.0, %v892
    %v894 = vpop.f32.mrb[0].mxu0
    %v895 = vpop.f32.mrb[0].mxu0
    %v896 = vpop.f32.mrb[0].mxu0
    %897 = vdwg.mxu0
    %v898 = vadd.f32 %v235, %v893
    %v899 = vxor.u32 %v898, 2147483648
    %v900 = vmul.f32 %v899, 1.442695
    %v901 = vpow.pop %v900
    %v902 = vadd.f32 %v901, 1.0
    %v903 = vrcp.pop %v902
    %v904 = vmul.f32 1.0, %v903
    %v905 = vtanh.pop %v898
    %907 = vrot.lane.b32.xlu0 %v853, 32
    %v908 = vpop.permute.xlu0 %907
    %v910 = vmul.f32 %v904, %v908
    %912 = vrot.lane.b32.xlu0 %v905, 32
    %v913 = vpop.permute.xlu0 %912
    %v915 = vmul.f32 %v904, %v913
    %917 = vrot.lane.b32.xlu0 %v915, 32
    %v918 = vpop.permute.xlu0 %917
    %v920 = vadd.f32 %v910, %v918
    %v921 = vtanh.pop %v920
    %923 = vrot.lane.b32.xlu0 %v921, 32
    %v924 = vpop.permute.xlu0 %923
    %v926 = vmul.f32 %v904, %v924
    %928 = vrot.lane.b32.xlu0 %v926, 64
    %v929 = vpop.permute.xlu0 %928
    %v931 = vsel %vm56, %v929, 0.0
    %932 = vst.msk [vmem:[%s324] sm:$0x3] %vm322, %v931
    %933 = vst.msk [vmem:[#allocation2] sm:$0x3] %vm325, %v931
    %v934 = vsel %vm56, %v929, %v848
    %v935 = vld [vmem:[#allocation2] sm:$0x3]
    %v936 = vld [vmem:[#allocation2 + $0x2] sm:$0x3]
    %v937 = vld [vmem:[#allocation2 + $0x4] sm:$0x3]
    %v938 = vld [vmem:[#allocation2 + $0x6] sm:$0x3]
    %v939 = vld [vmem:[#allocation2 + $0x8] sm:$0x3]
    %v940 = vld [vmem:[#allocation2 + $0xa] sm:$0x3]
    %v941 = vld [vmem:[#allocation2 + $0xc] sm:$0x3]
    %v942 = vld [vmem:[#allocation2 + $0xe] sm:$0x3]
    %vm943 = vcmask 254976
    %v944 = vsel %vm943, %v935, 0.0
    %945 = vadd.xlane.f32.xlu0 %v944
    %v946 = vpop.xlane.xlu0 %945
    %v947 = vsel %vm943, %v936, 0.0
    %948 = vadd.xlane.f32.xlu0 %v947
    %v949 = vpop.xlane.xlu0 %948
    %v950 = vsel %vm943, %v937, 0.0
    %951 = vadd.xlane.f32.xlu0 %v950
    %v952 = vpop.xlane.xlu0 %951
    %v953 = vsel %vm943, %v938, 0.0
    %954 = vadd.xlane.f32.xlu0 %v953
    %v955 = vpop.xlane.xlu0 %954
    %v956 = vsel %vm943, %v939, 0.0
    %957 = vadd.xlane.f32.xlu0 %v956
    %v958 = vpop.xlane.xlu0 %957
    %v959 = vsel %vm943, %v940, 0.0
    %960 = vadd.xlane.f32.xlu0 %v959
    %v961 = vpop.xlane.xlu0 %960
    %v962 = vsel %vm943, %v941, 0.0
    %963 = vadd.xlane.f32.xlu0 %v962
    %v964 = vpop.xlane.xlu0 %963
    %v965 = vsel %vm943, %v942, 0.0
    %966 = vadd.xlane.f32.xlu0 %v965
    %v967 = vpop.xlane.xlu0 %966
    %v968 = vrcp.pop 32.0
    %v969 = vmul.f32 %v946, %v968
    %v970 = vmul.f32 %v949, %v968
    %v971 = vmul.f32 %v952, %v968
    %v972 = vmul.f32 %v955, %v968
    %v973 = vmul.f32 %v958, %v968
    %v974 = vmul.f32 %v961, %v968
    %v975 = vmul.f32 %v964, %v968
    %v976 = vmul.f32 %v967, %v968
    %v977 = vsub.f32 %v935, %v969
    %v978 = vsub.f32 %v936, %v970
    %v979 = vsub.f32 %v937, %v971
    %v980 = vsub.f32 %v938, %v972
    %v981 = vsub.f32 %v939, %v973
    %v982 = vsub.f32 %v940, %v974
    %v983 = vsub.f32 %v941, %v975
    %v984 = vsub.f32 %v942, %v976
    %v985 = vmul.f32 %v977, %v977
    %v986 = vmul.f32 %v978, %v978
    %v987 = vmul.f32 %v979, %v979
    %v988 = vmul.f32 %v980, %v980
    %v989 = vmul.f32 %v981, %v981
    %v990 = vmul.f32 %v982, %v982
    %v991 = vmul.f32 %v983, %v983
    %v992 = vmul.f32 %v984, %v984
    %v993 = vsel %vm943, %v985, 0.0
    %994 = vadd.xlane.f32.xlu0 %v993
    %v995 = vpop.xlane.xlu0 %994
    %v996 = vsel %vm943, %v986, 0.0
    %997 = vadd.xlane.f32.xlu0 %v996
    %v998 = vpop.xlane.xlu0 %997
    %v999 = vsel %vm943, %v987, 0.0
    %1000 = vadd.xlane.f32.xlu0 %v999
    %v1001 = vpop.xlane.xlu0 %1000
    %v1002 = vsel %vm943, %v988, 0.0
    %1003 = vadd.xlane.f32.xlu0 %v1002
    %v1004 = vpop.xlane.xlu0 %1003
    %v1005 = vsel %vm943, %v989, 0.0
    %1006 = vadd.xlane.f32.xlu0 %v1005
    %v1007 = vpop.xlane.xlu0 %1006
    %v1008 = vsel %vm943, %v990, 0.0
    %1009 = vadd.xlane.f32.xlu0 %v1008
    %v1010 = vpop.xlane.xlu0 %1009
    %v1011 = vsel %vm943, %v991, 0.0
    %1012 = vadd.xlane.f32.xlu0 %v1011
    %v1013 = vpop.xlane.xlu0 %1012
    %v1014 = vsel %vm943, %v992, 0.0
    %1015 = vadd.xlane.f32.xlu0 %v1014
    %v1016 = vpop.xlane.xlu0 %1015
    %v1017 = vmul.f32 %v995, %v968
    %v1018 = vmul.f32 %v998, %v968
    %v1019 = vmul.f32 %v1001, %v968
    %v1020 = vmul.f32 %v1004, %v968
    %v1021 = vmul.f32 %v1007, %v968
    %v1022 = vmul.f32 %v1010, %v968
    %v1023 = vmul.f32 %v1013, %v968
    %v1024 = vmul.f32 %v1016, %v968
    %v1025 = vadd.f32 %v1017, 1e-05
    %v1026 = vadd.f32 %v1018, 1e-05
    %v1027 = vadd.f32 %v1019, 1e-05
    %v1028 = vadd.f32 %v1020, 1e-05
    %v1029 = vadd.f32 %v1021, 1e-05
    %v1030 = vadd.f32 %v1022, 1e-05
    %v1031 = vadd.f32 %v1023, 1e-05
    %v1032 = vadd.f32 %v1024, 1e-05
    %v1033 = vrsqrt.pop %v1025
    %v1034 = vrsqrt.pop %v1026
    %v1035 = vrsqrt.pop %v1027
    %v1036 = vrsqrt.pop %v1028
    %v1037 = vrsqrt.pop %v1029
    %v1038 = vrsqrt.pop %v1030
    %v1039 = vrsqrt.pop %v1031
    %v1040 = vrsqrt.pop %v1032
    %v1041 = vmul.f32 %v977, %v1033
    %v1042 = vmul.f32 %v978, %v1034
    %v1043 = vmul.f32 %v979, %v1035
    %v1044 = vmul.f32 %v980, %v1036
    %v1045 = vmul.f32 %v981, %v1037
    %v1046 = vmul.f32 %v982, %v1038
    %v1047 = vmul.f32 %v983, %v1039
    %v1048 = vmul.f32 %v984, %v1040
    %v1049 = vlaneseq
    %v1050 = vshrl.u32 %v1049, 7
    %v1051 = vsub.s32 2, %v1050
    %v1052 = vrot.slane %v34, %v1051
    %v1053 = vmul.f32 %v1041, %v1052
    %v1054 = vmul.f32 %v1042, %v1052
    %v1055 = vmul.f32 %v1043, %v1052
    %v1056 = vmul.f32 %v1044, %v1052
    %v1057 = vmul.f32 %v1045, %v1052
    %v1058 = vmul.f32 %v1046, %v1052
    %v1059 = vmul.f32 %v1047, %v1052
    %v1060 = vmul.f32 %v1048, %v1052
    %v1061 = vlaneseq
    %v1062 = vshrl.u32 %v1061, 7
    %v1063 = vsub.s32 3, %v1062
    %v1064 = vrot.slane %v34, %v1063
    %v1065 = vadd.f32 %v1053, %v1064
    %v1066 = vadd.f32 %v1054, %v1064
    %v1067 = vadd.f32 %v1055, %v1064
    %v1068 = vadd.f32 %v1056, %v1064
    %v1069 = vadd.f32 %v1057, %v1064
    %v1070 = vadd.f32 %v1058, %v1064
    %v1071 = vadd.f32 %v1059, %v1064
    %v1072 = vadd.f32 %v1060, %v1064
    %v1081 = vcombine.low %v1065, %v1066
    %v1082 = vcombine.low %v1067, %v1068
    %v1084 = vunpack.c.l.s4 1983009808
    %v1085 = vunpack.c.0.s8 %v1084
    %v1086 = vlaneseq
    %v1087 = vshrl.u32 %v1086, 7
    %v1088 = vsub.s32 %v1085, %v1087
    %v1089 = vrot.slane %v1081, %v1088
    %v1091 = vunpack.c.l.s4 1983009808
    %v1092 = vunpack.c.0.s8 %v1091
    %v1093 = vlaneseq
    %v1094 = vshrl.u32 %v1093, 7
    %v1095 = vsub.s32 %v1092, %v1094
    %v1096 = vrot.slane %v1082, %v1095
    %v1097 = vcombine.low %v1089, %v1096
    %v1098 = vcombine.low %v1069, %v1070
    %v1099 = vcombine.low %v1071, %v1072
    %v1101 = vunpack.c.l.s4 1983009808
    %v1102 = vunpack.c.0.s8 %v1101
    %v1103 = vlaneseq
    %v1104 = vshrl.u32 %v1103, 7
    %v1105 = vsub.s32 %v1102, %v1104
    %v1106 = vrot.slane %v1098, %v1105
    %v1108 = vunpack.c.l.s4 1983009808
    %v1109 = vunpack.c.0.s8 %v1108
    %v1110 = vlaneseq
    %v1111 = vshrl.u32 %v1110, 7
    %v1112 = vsub.s32 %v1109, %v1111
    %v1113 = vrot.slane %v1099, %v1112
    %v1114 = vcombine.low %v1106, %v1113
    %v1117 = vpack.c.bf16 %v1114, %v1097
    %v1118 = vlaneseq
    %v1119 = vshrl.u32 %v1118, 7
    %v1120 = vsub.s32 1, %v1119
    %v1121 = vrot.slane %v34, %v1120
    %v1126 = vunpack.c.l.b16 %v76
    %v1127 = vunpack.c.l.b16 %v77
    %v1128 = vunpack.c.l.b16 %v78
    %v1129 = vunpack.c.l.b16 %v79
    %v1130 = vpack.c.b16 %v1127, %v1126
    %v1131 = vpack.c.b16 %v1129, %v1128
    %v1135 = vsel %vm248, %v1117, 0
    %1137 = vmatprep.subr.bf16.mxu0 0
    %1138 = vmatpush1.bf16.msra.mxu0 %v1130
    %1139 = vmatprep.subr.bf16.mxu0 0
    %1140 = vmatpush1.bf16.msra.mxu0 %v1131
    %1141 = vmatprep.subr.bf16.mxu0 0
    %1142 = vmatpush1.bf16.msra.mxu0 0
    %1143 = vmatprep.subr.bf16.mxu0 0
    %1144 = vmatpush1.bf16.msra.mxu0 0
    %1145 = vmatprep.subr.bf16.mxu0 0
    %1146 = vmatpush1.bf16.msra.mxu0 0
    %1147 = vmatprep.subr.bf16.mxu0 0
    %1148 = vmatpush1.bf16.msra.mxu0 0
    %1149 = vmatprep.subr.bf16.mxu0 0
    %1150 = vmatpush1.bf16.msra.mxu0 0
    %1151 = vmatprep.subr.bf16.mxu0 0
    %1152 = vmatpush1.bf16.msra.mxu0 0
    %1153 = vmatprep.subr.bf16.mxu0 0
    %1154 = vmatpush1.bf16.msra.mxu0 0
    %1155 = vmatprep.subr.bf16.mxu0 0
    %1156 = vmatpush1.bf16.msra.mxu0 0
    %1157 = vmatprep.subr.bf16.mxu0 0
    %1158 = vmatpush1.bf16.msra.mxu0 0
    %1159 = vmatprep.subr.bf16.mxu0 0
    %1160 = vmatpush1.bf16.msra.mxu0 0
    %1161 = vmatprep.subr.bf16.mxu0 0
    %1162 = vmatpush1.bf16.msra.mxu0 0
    %1163 = vmatprep.subr.bf16.mxu0 0
    %1164 = vmatpush1.bf16.msra.mxu0 0
    %1165 = vmatprep.subr.bf16.mxu0 0
    %1166 = vmatpush1.bf16.msra.mxu0 0
    %1167 = vmatprep.subr.bf16.mxu0 0
    %1168 = vmatpush1.bf16.msra.mxu0 0
    %1169 = vmatprep.mubr.bf16.mxu0 0
    %1170 = vmatmul.mubr.bf16.gmra.mrb[0].mxu0 %v1135
    %v1171 = vpop.f32.mrb[0].mxu0
    %v1172 = vadd.f32 %v1121, %v1171
    %v1173 = vpop.f32.mrb[0].mxu0
    %v1174 = vpop.f32.mrb[0].mxu0
    %v1175 = vadd.f32 %v1121, %v1174
    %v1176 = vpop.f32.mrb[0].mxu0
    %1177 = vdwg.mxu0
    %v1180 = vcombine.high %v1172, %v1172
    %v1182 = vunpack.c.l.s4 1983009808
    %v1183 = vunpack.c.0.s8 %v1182
    %v1184 = vlaneseq
    %v1185 = vshrl.u32 %v1184, 7
    %v1186 = vsub.s32 %v1183, %v1185
    %v1187 = vrot.slane %v1172, %v1186
    %v1189 = vunpack.c.l.s4 1983009808
    %v1190 = vunpack.c.0.s8 %v1189
    %v1191 = vlaneseq
    %v1192 = vshrl.u32 %v1191, 7
    %v1193 = vsub.s32 %v1190, %v1192
    %v1194 = vrot.slane %v1180, %v1193
    %v1195 = vcombine.high %v1187, %v1187
    %v1196 = vcombine.high %v1194, %v1194
    %v1197 = vcombine.high %v1175, %v1175
    %v1199 = vunpack.c.l.s4 1983009808
    %v1200 = vunpack.c.0.s8 %v1199
    %v1201 = vlaneseq
    %v1202 = vshrl.u32 %v1201, 7
    %v1203 = vsub.s32 %v1200, %v1202
    %v1204 = vrot.slane %v1175, %v1203
    %v1206 = vunpack.c.l.s4 1983009808
    %v1207 = vunpack.c.0.s8 %v1206
    %v1208 = vlaneseq
    %v1209 = vshrl.u32 %v1208, 7
    %v1210 = vsub.s32 %v1207, %v1209
    %v1211 = vrot.slane %v1197, %v1210
    %v1212 = vcombine.high %v1204, %v1204
    %v1213 = vcombine.high %v1211, %v1211
    %v1222 = vsel %vm69, %v1187, %v1213
    %v1223 = vsel %vm69, %v1195, %v1211
    %v1224 = vsel %vm69, %v1194, %v1212
    %v1225 = vsel %vm69, %v1196, %v1204
    %v1226 = vsel %vm69, %v1204, %v1196
    %v1227 = vsel %vm69, %v1212, %v1194
    %v1228 = vsel %vm69, %v1211, %v1195
    %v1229 = vsel %vm69, %v1213, %v1187
    %v1234 = vunpack.c.l.b16 %v80
    %v1235 = vunpack.c.l.b16 %v81
    %v1236 = vunpack.c.l.b16 %v82
    %v1237 = vunpack.c.l.b16 %v83
    %v1238 = vpack.c.b16 %v1235, %v1234
    %v1239 = vpack.c.b16 %v1237, %v1236
    %1242 = vmatprep.subr.bf16.mxu0 0
    %1243 = vmatpush1.bf16.msra.mxu0 %v1238
    %1244 = vmatprep.subr.bf16.mxu0 0
    %1245 = vmatpush1.bf16.msra.mxu0 %v1239
    %1246 = vmatprep.subr.bf16.mxu0 0
    %1247 = vmatpush1.bf16.msra.mxu0 0
    %1248 = vmatprep.subr.bf16.mxu0 0
    %1249 = vmatpush1.bf16.msra.mxu0 0
    %1250 = vmatprep.subr.bf16.mxu0 0
    %1251 = vmatpush1.bf16.msra.mxu0 0
    %1252 = vmatprep.subr.bf16.mxu0 0
    %1253 = vmatpush1.bf16.msra.mxu0 0
    %1254 = vmatprep.subr.bf16.mxu0 0
    %1255 = vmatpush1.bf16.msra.mxu0 0
    %1256 = vmatprep.subr.bf16.mxu0 0
    %1257 = vmatpush1.bf16.msra.mxu0 0
    %1258 = vmatprep.subr.bf16.mxu0 0
    %1259 = vmatpush1.bf16.msra.mxu0 0
    %1260 = vmatprep.subr.bf16.mxu0 0
    %1261 = vmatpush1.bf16.msra.mxu0 0
    %1262 = vmatprep.subr.bf16.mxu0 0
    %1263 = vmatpush1.bf16.msra.mxu0 0
    %1264 = vmatprep.subr.bf16.mxu0 0
    %1265 = vmatpush1.bf16.msra.mxu0 0
    %1266 = vmatprep.subr.bf16.mxu0 0
    %1267 = vmatpush1.bf16.msra.mxu0 0
    %1268 = vmatprep.subr.bf16.mxu0 0
    %1269 = vmatpush1.bf16.msra.mxu0 0
    %1270 = vmatprep.subr.bf16.mxu0 0
    %1271 = vmatpush1.bf16.msra.mxu0 0
    %1272 = vmatprep.subr.bf16.mxu0 0
    %1273 = vmatpush1.bf16.msra.mxu0 0
    %1274 = vmatprep.mubr.bf16.mxu0 0
    %1275 = vmatmul.mubr.bf16.gmra.mrb[0].mxu0 %v250
    %v1276 = vpop.f32.mrb[0].mxu0
    %v1277 = vadd.f32 0.0, %v1276
    %v1278 = vpop.f32.mrb[0].mxu0
    %v1279 = vpop.f32.mrb[0].mxu0
    %v1280 = vpop.f32.mrb[0].mxu0
    %1281 = vdwg.mxu0
    %v1282 = vadd.f32 %v1222, %v1277
    %v1283 = vxor.u32 %v1282, 2147483648
    %v1284 = vmul.f32 %v1283, 1.442695
    %v1285 = vpow.pop %v1284
    %v1286 = vadd.f32 %v1285, 1.0
    %v1287 = vrcp.pop %v1286
    %v1288 = vmul.f32 1.0, %v1287
    %v1289 = vtanh.pop %v1282
    %v1290 = vmul.f32 %v1288, 0.0
    %1292 = vrot.lane.b32.xlu0 %v1289, 32
    %v1293 = vpop.permute.xlu0 %1292
    %v1295 = vmul.f32 %v1288, %v1293
    %1297 = vrot.lane.b32.xlu0 %v1295, 32
    %v1298 = vpop.permute.xlu0 %1297
    %v1300 = vadd.f32 %v1290, %v1298
    %v1301 = vtanh.pop %v1300
    %1303 = vrot.lane.b32.xlu0 %v1301, 32
    %v1304 = vpop.permute.xlu0 %1303
    %v1306 = vmul.f32 %v1288, %v1304
    %1308 = vrot.lane.b32.xlu0 %v1306, 64
    %v1309 = vpop.permute.xlu0 %1308
    %v1311 = vsel %vm49, %v1309, 0.0
    %1313 = vrot.lane.b32.xlu0 %v1300, 96
    %v1314 = vpop.permute.xlu0 %1313
    %v1316 = vsel %vm49, %v1314, 0.0
    %v1317 = vpack.c.bf16 %v1311, %v1311
    %v1319 = vsel %vm248, %v1317, 0
    %1321 = vmatprep.subr.bf16.mxu0 0
    %1322 = vmatpush1.bf16.msra.mxu0 %v1238
    %1323 = vmatprep.subr.bf16.mxu0 0
    %1324 = vmatpush1.bf16.msra.mxu0 %v1239
    %1325 = vmatprep.subr.bf16.mxu0 0
    %1326 = vmatpush1.bf16.msra.mxu0 0
    %1327 = vmatprep.subr.bf16.mxu0 0
    %1328 = vmatpush1.bf16.msra.mxu0 0
    %1329 = vmatprep.subr.bf16.mxu0 0
    %1330 = vmatpush1.bf16.msra.mxu0 0
    %1331 = vmatprep.subr.bf16.mxu0 0
    %1332 = vmatpush1.bf16.msra.mxu0 0
    %1333 = vmatprep.subr.bf16.mxu0 0
    %1334 = vmatpush1.bf16.msra.mxu0 0
    %1335 = vmatprep.subr.bf16.mxu0 0
    %1336 = vmatpush1.bf16.msra.mxu0 0
    %1337 = vmatprep.subr.bf16.mxu0 0
    %1338 = vmatpush1.bf16.msra.mxu0 0
    %1339 = vmatprep.subr.bf16.mxu0 0
    %1340 = vmatpush1.bf16.msra.mxu0 0
    %1341 = vmatprep.subr.bf16.mxu0 0
    %1342 = vmatpush1.bf16.msra.mxu0 0
    %1343 = vmatprep.subr.bf16.mxu0 0
    %1344 = vmatpush1.bf16.msra.mxu0 0
    %1345 = vmatprep.subr.bf16.mxu0 0
    %1346 = vmatpush1.bf16.msra.mxu0 0
    %1347 = vmatprep.subr.bf16.mxu0 0
    %1348 = vmatpush1.bf16.msra.mxu0 0
    %1349 = vmatprep.subr.bf16.mxu0 0
    %1350 = vmatpush1.bf16.msra.mxu0 0
    %1351 = vmatprep.subr.bf16.mxu0 0
    %1352 = vmatpush1.bf16.msra.mxu0 0
    %1353 = vmatprep.mubr.bf16.mxu0 0
    %1354 = vmatmul.mubr.bf16.gmra.mrb[0].mxu0 %v1319
    %v1355 = vpop.f32.mrb[0].mxu0
    %v1356 = vadd.f32 0.0, %v1355
    %v1357 = vpop.f32.mrb[0].mxu0
    %v1358 = vpop.f32.mrb[0].mxu0
    %v1359 = vpop.f32.mrb[0].mxu0
    %1360 = vdwg.mxu0
    %v1361 = vadd.f32 %v1223, %v1356
    %v1362 = vxor.u32 %v1361, 2147483648
    %v1363 = vmul.f32 %v1362, 1.442695
    %v1364 = vpow.pop %v1363
    %v1365 = vadd.f32 %v1364, 1.0
    %v1366 = vrcp.pop %v1365
    %v1367 = vmul.f32 1.0, %v1366
    %v1368 = vtanh.pop %v1361
    %1370 = vrot.lane.b32.xlu0 %v1316, 32
    %v1371 = vpop.permute.xlu0 %1370
    %v1373 = vmul.f32 %v1367, %v1371
    %1375 = vrot.lane.b32.xlu0 %v1368, 32
    %v1376 = vpop.permute.xlu0 %1375
    %v1378 = vmul.f32 %v1367, %v1376
    %1380 = vrot.lane.b32.xlu0 %v1378, 32
    %v1381 = vpop.permute.xlu0 %1380
    %v1383 = vadd.f32 %v1373, %v1381
    %v1384 = vtanh.pop %v1383
    %1386 = vrot.lane.b32.xlu0 %v1384, 32
    %v1387 = vpop.permute.xlu0 %1386
    %v1389 = vmul.f32 %v1367, %v1387
    %1391 = vrot.lane.b32.xlu0 %v1389, 64
    %v1392 = vpop.permute.xlu0 %1391
    %v1394 = vsel %vm50, %v1392, %v1311
    %1396 = vrot.lane.b32.xlu0 %v1383, 96
    %v1397 = vpop.permute.xlu0 %1396
    %v1399 = vsel %vm50, %v1397, %v1316
    %v1400 = vpack.c.bf16 %v1394, %v1394
    %v1402 = vsel %vm248, %v1400, 0
    %1404 = vmatprep.subr.bf16.mxu0 0
    %1405 = vmatpush1.bf16.msra.mxu0 %v1238
    %1406 = vmatprep.subr.bf16.mxu0 0
    %1407 = vmatpush1.bf16.msra.mxu0 %v1239
    %1408 = vmatprep.subr.bf16.mxu0 0
    %1409 = vmatpush1.bf16.msra.mxu0 0
    %1410 = vmatprep.subr.bf16.mxu0 0
    %1411 = vmatpush1.bf16.msra.mxu0 0
    %1412 = vmatprep.subr.bf16.mxu0 0
    %1413 = vmatpush1.bf16.msra.mxu0 0
    %1414 = vmatprep.subr.bf16.mxu0 0
    %1415 = vmatpush1.bf16.msra.mxu0 0
    %1416 = vmatprep.subr.bf16.mxu0 0
    %1417 = vmatpush1.bf16.msra.mxu0 0
    %1418 = vmatprep.subr.bf16.mxu0 0
    %1419 = vmatpush1.bf16.msra.mxu0 0
    %1420 = vmatprep.subr.bf16.mxu0 0
    %1421 = vmatpush1.bf16.msra.mxu0 0
    %1422 = vmatprep.subr.bf16.mxu0 0
    %1423 = vmatpush1.bf16.msra.mxu0 0
    %1424 = vmatprep.subr.bf16.mxu0 0
    %1425 = vmatpush1.bf16.msra.mxu0 0
    %1426 = vmatprep.subr.bf16.mxu0 0
    %1427 = vmatpush1.bf16.msra.mxu0 0
    %1428 = vmatprep.subr.bf16.mxu0 0
    %1429 = vmatpush1.bf16.msra.mxu0 0
    %1430 = vmatprep.subr.bf16.mxu0 0
    %1431 = vmatpush1.bf16.msra.mxu0 0
    %1432 = vmatprep.subr.bf16.mxu0 0
    %1433 = vmatpush1.bf16.msra.mxu0 0
    %1434 = vmatprep.subr.bf16.mxu0 0
    %1435 = vmatpush1.bf16.msra.mxu0 0
    %1436 = vmatprep.mubr.bf16.mxu0 0
    %1437 = vmatmul.mubr.bf16.gmra.mrb[0].mxu0 %v1402
    %v1438 = vpop.f32.mrb[0].mxu0
    %v1439 = vadd.f32 0.0, %v1438
    %v1440 = vpop.f32.mrb[0].mxu0
    %v1441 = vpop.f32.mrb[0].mxu0
    %v1442 = vpop.f32.mrb[0].mxu0
    %1443 = vdwg.mxu0
    %v1444 = vadd.f32 %v1224, %v1439
    %v1445 = vxor.u32 %v1444, 2147483648
    %v1446 = vmul.f32 %v1445, 1.442695
    %v1447 = vpow.pop %v1446
    %v1448 = vadd.f32 %v1447, 1.0
    %v1449 = vrcp.pop %v1448
    %v1450 = vmul.f32 1.0, %v1449
    %v1451 = vtanh.pop %v1444
    %1453 = vrot.lane.b32.xlu0 %v1399, 32
    %v1454 = vpop.permute.xlu0 %1453
    %v1456 = vmul.f32 %v1450, %v1454
    %1458 = vrot.lane.b32.xlu0 %v1451, 32
    %v1459 = vpop.permute.xlu0 %1458
    %v1461 = vmul.f32 %v1450, %v1459
    %1463 = vrot.lane.b32.xlu0 %v1461, 32
    %v1464 = vpop.permute.xlu0 %1463
    %v1466 = vadd.f32 %v1456, %v1464
    %v1467 = vtanh.pop %v1466
    %1469 = vrot.lane.b32.xlu0 %v1467, 32
    %v1470 = vpop.permute.xlu0 %1469
    %v1472 = vmul.f32 %v1450, %v1470
    %1474 = vrot.lane.b32.xlu0 %v1472, 64
    %v1475 = vpop.permute.xlu0 %1474
    %v1477 = vsel %vm51, %v1475, %v1394
    %1479 = vrot.lane.b32.xlu0 %v1466, 96
    %v1480 = vpop.permute.xlu0 %1479
    %v1482 = vsel %vm51, %v1480, %v1399
    %v1483 = vpack.c.bf16 %v1477, %v1477
    %v1485 = vsel %vm248, %v1483, 0
    %1487 = vmatprep.subr.bf16.mxu0 0
    %1488 = vmatpush1.bf16.msra.mxu0 %v1238
    %1489 = vmatprep.subr.bf16.mxu0 0
    %1490 = vmatpush1.bf16.msra.mxu0 %v1239
    %1491 = vmatprep.subr.bf16.mxu0 0
    %1492 = vmatpush1.bf16.msra.mxu0 0
    %1493 = vmatprep.subr.bf16.mxu0 0
    %1494 = vmatpush1.bf16.msra.mxu0 0
    %1495 = vmatprep.subr.bf16.mxu0 0
    %1496 = vmatpush1.bf16.msra.mxu0 0
    %1497 = vmatprep.subr.bf16.mxu0 0
    %1498 = vmatpush1.bf16.msra.mxu0 0
    %1499 = vmatprep.subr.bf16.mxu0 0
    %1500 = vmatpush1.bf16.msra.mxu0 0
    %1501 = vmatprep.subr.bf16.mxu0 0
    %1502 = vmatpush1.bf16.msra.mxu0 0
    %1503 = vmatprep.subr.bf16.mxu0 0
    %1504 = vmatpush1.bf16.msra.mxu0 0
    %1505 = vmatprep.subr.bf16.mxu0 0
    %1506 = vmatpush1.bf16.msra.mxu0 0
    %1507 = vmatprep.subr.bf16.mxu0 0
    %1508 = vmatpush1.bf16.msra.mxu0 0
    %1509 = vmatprep.subr.bf16.mxu0 0
    %1510 = vmatpush1.bf16.msra.mxu0 0
    %1511 = vmatprep.subr.bf16.mxu0 0
    %1512 = vmatpush1.bf16.msra.mxu0 0
    %1513 = vmatprep.subr.bf16.mxu0 0
    %1514 = vmatpush1.bf16.msra.mxu0 0
    %1515 = vmatprep.subr.bf16.mxu0 0
    %1516 = vmatpush1.bf16.msra.mxu0 0
    %1517 = vmatprep.subr.bf16.mxu0 0
    %1518 = vmatpush1.bf16.msra.mxu0 0
    %1519 = vmatprep.mubr.bf16.mxu0 0
    %1520 = vmatmul.mubr.bf16.gmra.mrb[0].mxu0 %v1485
    %v1521 = vpop.f32.mrb[0].mxu0
    %v1522 = vadd.f32 0.0, %v1521
    %v1523 = vpop.f32.mrb[0].mxu0
    %v1524 = vpop.f32.mrb[0].mxu0
    %v1525 = vpop.f32.mrb[0].mxu0
    %1526 = vdwg.mxu0
    %v1527 = vadd.f32 %v1225, %v1522
    %v1528 = vxor.u32 %v1527, 2147483648
    %v1529 = vmul.f32 %v1528, 1.442695
    %v1530 = vpow.pop %v1529
    %v1531 = vadd.f32 %v1530, 1.0
    %v1532 = vrcp.pop %v1531
    %v1533 = vmul.f32 1.0, %v1532
    %v1534 = vtanh.pop %v1527
    %1536 = vrot.lane.b32.xlu0 %v1482, 32
    %v1537 = vpop.permute.xlu0 %1536
    %v1539 = vmul.f32 %v1533, %v1537
    %1541 = vrot.lane.b32.xlu0 %v1534, 32
    %v1542 = vpop.permute.xlu0 %1541
    %v1544 = vmul.f32 %v1533, %v1542
    %1546 = vrot.lane.b32.xlu0 %v1544, 32
    %v1547 = vpop.permute.xlu0 %1546
    %v1549 = vadd.f32 %v1539, %v1547
    %v1550 = vtanh.pop %v1549
    %1552 = vrot.lane.b32.xlu0 %v1550, 32
    %v1553 = vpop.permute.xlu0 %1552
    %v1555 = vmul.f32 %v1533, %v1553
    %1557 = vrot.lane.b32.xlu0 %v1555, 64
    %v1558 = vpop.permute.xlu0 %1557
    %v1560 = vsel %vm52, %v1558, %v1477
    %1562 = vrot.lane.b32.xlu0 %v1549, 96
    %v1563 = vpop.permute.xlu0 %1562
    %v1565 = vsel %vm52, %v1563, %v1482
    %v1566 = vpack.c.bf16 %v1560, %v1560
    %v1568 = vsel %vm248, %v1566, 0
    %1570 = vmatprep.subr.bf16.mxu0 0
    %1571 = vmatpush1.bf16.msra.mxu0 %v1238
    %1572 = vmatprep.subr.bf16.mxu0 0
    %1573 = vmatpush1.bf16.msra.mxu0 %v1239
    %1574 = vmatprep.subr.bf16.mxu0 0
    %1575 = vmatpush1.bf16.msra.mxu0 0
    %1576 = vmatprep.subr.bf16.mxu0 0
    %1577 = vmatpush1.bf16.msra.mxu0 0
    %1578 = vmatprep.subr.bf16.mxu0 0
    %1579 = vmatpush1.bf16.msra.mxu0 0
    %1580 = vmatprep.subr.bf16.mxu0 0
    %1581 = vmatpush1.bf16.msra.mxu0 0
    %1582 = vmatprep.subr.bf16.mxu0 0
    %1583 = vmatpush1.bf16.msra.mxu0 0
    %1584 = vmatprep.subr.bf16.mxu0 0
    %1585 = vmatpush1.bf16.msra.mxu0 0
    %1586 = vmatprep.subr.bf16.mxu0 0
    %1587 = vmatpush1.bf16.msra.mxu0 0
    %1588 = vmatprep.subr.bf16.mxu0 0
    %1589 = vmatpush1.bf16.msra.mxu0 0
    %1590 = vmatprep.subr.bf16.mxu0 0
    %1591 = vmatpush1.bf16.msra.mxu0 0
    %1592 = vmatprep.subr.bf16.mxu0 0
    %1593 = vmatpush1.bf16.msra.mxu0 0
    %1594 = vmatprep.subr.bf16.mxu0 0
    %1595 = vmatpush1.bf16.msra.mxu0 0
    %1596 = vmatprep.subr.bf16.mxu0 0
    %1597 = vmatpush1.bf16.msra.mxu0 0
    %1598 = vmatprep.subr.bf16.mxu0 0
    %1599 = vmatpush1.bf16.msra.mxu0 0
    %1600 = vmatprep.subr.bf16.mxu0 0
    %1601 = vmatpush1.bf16.msra.mxu0 0
    %1602 = vmatprep.mubr.bf16.mxu0 0
    %1603 = vmatmul.mubr.bf16.gmra.mrb[0].mxu0 %v1568
    %v1604 = vpop.f32.mrb[0].mxu0
    %v1605 = vadd.f32 0.0, %v1604
    %v1606 = vpop.f32.mrb[0].mxu0
    %v1607 = vpop.f32.mrb[0].mxu0
    %v1608 = vpop.f32.mrb[0].mxu0
    %1609 = vdwg.mxu0
    %v1610 = vadd.f32 %v1226, %v1605
    %v1611 = vxor.u32 %v1610, 2147483648
    %v1612 = vmul.f32 %v1611, 1.442695
    %v1613 = vpow.pop %v1612
    %v1614 = vadd.f32 %v1613, 1.0
    %v1615 = vrcp.pop %v1614
    %v1616 = vmul.f32 1.0, %v1615
    %v1617 = vtanh.pop %v1610
    %1619 = vrot.lane.b32.xlu0 %v1565, 32
    %v1620 = vpop.permute.xlu0 %1619
    %v1622 = vmul.f32 %v1616, %v1620
    %1624 = vrot.lane.b32.xlu0 %v1617, 32
    %v1625 = vpop.permute.xlu0 %1624
    %v1627 = vmul.f32 %v1616, %v1625
    %1629 = vrot.lane.b32.xlu0 %v1627, 32
    %v1630 = vpop.permute.xlu0 %1629
    %v1632 = vadd.f32 %v1622, %v1630
    %v1633 = vtanh.pop %v1632
    %1635 = vrot.lane.b32.xlu0 %v1633, 32
    %v1636 = vpop.permute.xlu0 %1635
    %v1638 = vmul.f32 %v1616, %v1636
    %1640 = vrot.lane.b32.xlu0 %v1638, 64
    %v1641 = vpop.permute.xlu0 %1640
    %v1643 = vsel %vm53, %v1641, %v1560
    %1645 = vrot.lane.b32.xlu0 %v1632, 96
    %v1646 = vpop.permute.xlu0 %1645
    %v1648 = vsel %vm53, %v1646, %v1565
    %v1649 = vpack.c.bf16 %v1643, %v1643
    %v1651 = vsel %vm248, %v1649, 0
    %1653 = vmatprep.subr.bf16.mxu0 0
    %1654 = vmatpush1.bf16.msra.mxu0 %v1238
    %1655 = vmatprep.subr.bf16.mxu0 0
    %1656 = vmatpush1.bf16.msra.mxu0 %v1239
    %1657 = vmatprep.subr.bf16.mxu0 0
    %1658 = vmatpush1.bf16.msra.mxu0 0
    %1659 = vmatprep.subr.bf16.mxu0 0
    %1660 = vmatpush1.bf16.msra.mxu0 0
    %1661 = vmatprep.subr.bf16.mxu0 0
    %1662 = vmatpush1.bf16.msra.mxu0 0
    %1663 = vmatprep.subr.bf16.mxu0 0
    %1664 = vmatpush1.bf16.msra.mxu0 0
    %1665 = vmatprep.subr.bf16.mxu0 0
    %1666 = vmatpush1.bf16.msra.mxu0 0
    %1667 = vmatprep.subr.bf16.mxu0 0
    %1668 = vmatpush1.bf16.msra.mxu0 0
    %1669 = vmatprep.subr.bf16.mxu0 0
    %1670 = vmatpush1.bf16.msra.mxu0 0
    %1671 = vmatprep.subr.bf16.mxu0 0
    %1672 = vmatpush1.bf16.msra.mxu0 0
    %1673 = vmatprep.subr.bf16.mxu0 0
    %1674 = vmatpush1.bf16.msra.mxu0 0
    %1675 = vmatprep.subr.bf16.mxu0 0
    %1676 = vmatpush1.bf16.msra.mxu0 0
    %1677 = vmatprep.subr.bf16.mxu0 0
    %1678 = vmatpush1.bf16.msra.mxu0 0
    %1679 = vmatprep.subr.bf16.mxu0 0
    %1680 = vmatpush1.bf16.msra.mxu0 0
    %1681 = vmatprep.subr.bf16.mxu0 0
    %1682 = vmatpush1.bf16.msra.mxu0 0
    %1683 = vmatprep.subr.bf16.mxu0 0
    %1684 = vmatpush1.bf16.msra.mxu0 0
    %1685 = vmatprep.mubr.bf16.mxu0 0
    %1686 = vmatmul.mubr.bf16.gmra.mrb[0].mxu0 %v1651
    %v1687 = vpop.f32.mrb[0].mxu0
    %v1688 = vadd.f32 0.0, %v1687
    %v1689 = vpop.f32.mrb[0].mxu0
    %v1690 = vpop.f32.mrb[0].mxu0
    %v1691 = vpop.f32.mrb[0].mxu0
    %1692 = vdwg.mxu0
    %v1693 = vadd.f32 %v1227, %v1688
    %v1694 = vxor.u32 %v1693, 2147483648
    %v1695 = vmul.f32 %v1694, 1.442695
    %v1696 = vpow.pop %v1695
    %v1697 = vadd.f32 %v1696, 1.0
    %v1698 = vrcp.pop %v1697
    %v1699 = vmul.f32 1.0, %v1698
    %v1700 = vtanh.pop %v1693
    %1702 = vrot.lane.b32.xlu0 %v1648, 32
    %v1703 = vpop.permute.xlu0 %1702
    %v1705 = vmul.f32 %v1699, %v1703
    %1707 = vrot.lane.b32.xlu0 %v1700, 32
    %v1708 = vpop.permute.xlu0 %1707
    %v1710 = vmul.f32 %v1699, %v1708
    %1712 = vrot.lane.b32.xlu0 %v1710, 32
    %v1713 = vpop.permute.xlu0 %1712
    %v1715 = vadd.f32 %v1705, %v1713
    %v1716 = vtanh.pop %v1715
    %1718 = vrot.lane.b32.xlu0 %v1716, 32
    %v1719 = vpop.permute.xlu0 %1718
    %v1721 = vmul.f32 %v1699, %v1719
    %1723 = vrot.lane.b32.xlu0 %v1721, 64
    %v1724 = vpop.permute.xlu0 %1723
    %v1726 = vsel %vm54, %v1724, %v1643
    %1728 = vrot.lane.b32.xlu0 %v1715, 96
    %v1729 = vpop.permute.xlu0 %1728
    %v1731 = vsel %vm54, %v1729, %v1648
    %v1732 = vpack.c.bf16 %v1726, %v1726
    %v1734 = vsel %vm248, %v1732, 0
    %1736 = vmatprep.subr.bf16.mxu0 0
    %1737 = vmatpush1.bf16.msra.mxu0 %v1238
    %1738 = vmatprep.subr.bf16.mxu0 0
    %1739 = vmatpush1.bf16.msra.mxu0 %v1239
    %1740 = vmatprep.subr.bf16.mxu0 0
    %1741 = vmatpush1.bf16.msra.mxu0 0
    %1742 = vmatprep.subr.bf16.mxu0 0
    %1743 = vmatpush1.bf16.msra.mxu0 0
    %1744 = vmatprep.subr.bf16.mxu0 0
    %1745 = vmatpush1.bf16.msra.mxu0 0
    %1746 = vmatprep.subr.bf16.mxu0 0
    %1747 = vmatpush1.bf16.msra.mxu0 0
    %1748 = vmatprep.subr.bf16.mxu0 0
    %1749 = vmatpush1.bf16.msra.mxu0 0
    %1750 = vmatprep.subr.bf16.mxu0 0
    %1751 = vmatpush1.bf16.msra.mxu0 0
    %1752 = vmatprep.subr.bf16.mxu0 0
    %1753 = vmatpush1.bf16.msra.mxu0 0
    %1754 = vmatprep.subr.bf16.mxu0 0
    %1755 = vmatpush1.bf16.msra.mxu0 0
    %1756 = vmatprep.subr.bf16.mxu0 0
    %1757 = vmatpush1.bf16.msra.mxu0 0
    %1758 = vmatprep.subr.bf16.mxu0 0
    %1759 = vmatpush1.bf16.msra.mxu0 0
    %1760 = vmatprep.subr.bf16.mxu0 0
    %1761 = vmatpush1.bf16.msra.mxu0 0
    %1762 = vmatprep.subr.bf16.mxu0 0
    %1763 = vmatpush1.bf16.msra.mxu0 0
    %1764 = vmatprep.subr.bf16.mxu0 0
    %1765 = vmatpush1.bf16.msra.mxu0 0
    %1766 = vmatprep.subr.bf16.mxu0 0
    %1767 = vmatpush1.bf16.msra.mxu0 0
    %1768 = vmatprep.mubr.bf16.mxu0 0
    %1769 = vmatmul.mubr.bf16.gmra.mrb[0].mxu0 %v1734
    %v1770 = vpop.f32.mrb[0].mxu0
    %v1771 = vadd.f32 0.0, %v1770
    %v1772 = vpop.f32.mrb[0].mxu0
    %v1773 = vpop.f32.mrb[0].mxu0
    %v1774 = vpop.f32.mrb[0].mxu0
    %1775 = vdwg.mxu0
    %v1776 = vadd.f32 %v1228, %v1771
    %v1777 = vxor.u32 %v1776, 2147483648
    %v1778 = vmul.f32 %v1777, 1.442695
    %v1779 = vpow.pop %v1778
    %v1780 = vadd.f32 %v1779, 1.0
    %v1781 = vrcp.pop %v1780
    %v1782 = vmul.f32 1.0, %v1781
    %v1783 = vtanh.pop %v1776
    %1785 = vrot.lane.b32.xlu0 %v1731, 32
    %v1786 = vpop.permute.xlu0 %1785
    %v1788 = vmul.f32 %v1782, %v1786
    %1790 = vrot.lane.b32.xlu0 %v1783, 32
    %v1791 = vpop.permute.xlu0 %1790
    %v1793 = vmul.f32 %v1782, %v1791
    %1795 = vrot.lane.b32.xlu0 %v1793, 32
    %v1796 = vpop.permute.xlu0 %1795
    %v1798 = vadd.f32 %v1788, %v1796
    %v1799 = vtanh.pop %v1798
    %1801 = vrot.lane.b32.xlu0 %v1799, 32
    %v1802 = vpop.permute.xlu0 %1801
    %v1804 = vmul.f32 %v1782, %v1802
    %1806 = vrot.lane.b32.xlu0 %v1804, 64
    %v1807 = vpop.permute.xlu0 %1806
    %v1809 = vsel %vm55, %v1807, %v1726
    %1811 = vrot.lane.b32.xlu0 %v1798, 96
    %v1812 = vpop.permute.xlu0 %1811
    %v1814 = vsel %vm55, %v1812, %v1731
    %v1815 = vpack.c.bf16 %v1809, %v1809
    %v1817 = vsel %vm248, %v1815, 0
    %1819 = vmatprep.subr.bf16.mxu0 0
    %1820 = vmatpush1.bf16.msra.mxu0 %v1238
    %1821 = vmatprep.subr.bf16.mxu0 0
    %1822 = vmatpush1.bf16.msra.mxu0 %v1239
    %1823 = vmatprep.subr.bf16.mxu0 0
    %1824 = vmatpush1.bf16.msra.mxu0 0
    %1825 = vmatprep.subr.bf16.mxu0 0
    %1826 = vmatpush1.bf16.msra.mxu0 0
    %1827 = vmatprep.subr.bf16.mxu0 0
    %1828 = vmatpush1.bf16.msra.mxu0 0
    %1829 = vmatprep.subr.bf16.mxu0 0
    %1830 = vmatpush1.bf16.msra.mxu0 0
    %1831 = vmatprep.subr.bf16.mxu0 0
    %1832 = vmatpush1.bf16.msra.mxu0 0
    %1833 = vmatprep.subr.bf16.mxu0 0
    %1834 = vmatpush1.bf16.msra.mxu0 0
    %1835 = vmatprep.subr.bf16.mxu0 0
    %1836 = vmatpush1.bf16.msra.mxu0 0
    %1837 = vmatprep.subr.bf16.mxu0 0
    %1838 = vmatpush1.bf16.msra.mxu0 0
    %1839 = vmatprep.subr.bf16.mxu0 0
    %1840 = vmatpush1.bf16.msra.mxu0 0
    %1841 = vmatprep.subr.bf16.mxu0 0
    %1842 = vmatpush1.bf16.msra.mxu0 0
    %1843 = vmatprep.subr.bf16.mxu0 0
    %1844 = vmatpush1.bf16.msra.mxu0 0
    %1845 = vmatprep.subr.bf16.mxu0 0
    %1846 = vmatpush1.bf16.msra.mxu0 0
    %1847 = vmatprep.subr.bf16.mxu0 0
    %1848 = vmatpush1.bf16.msra.mxu0 0
    %1849 = vmatprep.subr.bf16.mxu0 0
    %1850 = vmatpush1.bf16.msra.mxu0 0
    %1851 = vmatprep.mubr.bf16.mxu0 0
    %1852 = vmatmul.mubr.bf16.gmra.mrb[0].mxu0 %v1817
    %v1853 = vpop.f32.mrb[0].mxu0
    %v1854 = vadd.f32 0.0, %v1853
    %v1855 = vpop.f32.mrb[0].mxu0
    %v1856 = vpop.f32.mrb[0].mxu0
    %v1857 = vpop.f32.mrb[0].mxu0
    %1858 = vdwg.mxu0
    %v1859 = vadd.f32 %v1229, %v1854
    %v1860 = vxor.u32 %v1859, 2147483648
    %v1861 = vmul.f32 %v1860, 1.442695
    %v1862 = vpow.pop %v1861
    %v1863 = vadd.f32 %v1862, 1.0
    %v1864 = vrcp.pop %v1863
    %v1865 = vmul.f32 1.0, %v1864
    %v1866 = vtanh.pop %v1859
    %1868 = vrot.lane.b32.xlu0 %v1814, 32
    %v1869 = vpop.permute.xlu0 %1868
    %v1871 = vmul.f32 %v1865, %v1869
    %1873 = vrot.lane.b32.xlu0 %v1866, 32
    %v1874 = vpop.permute.xlu0 %1873
    %v1876 = vmul.f32 %v1865, %v1874
    %1878 = vrot.lane.b32.xlu0 %v1876, 32
    %v1879 = vpop.permute.xlu0 %1878
    %v1881 = vadd.f32 %v1871, %v1879
    %v1882 = vtanh.pop %v1881
    %1884 = vrot.lane.b32.xlu0 %v1882, 32
    %v1885 = vpop.permute.xlu0 %1884
    %v1887 = vmul.f32 %v1865, %v1885
    %1889 = vrot.lane.b32.xlu0 %v1887, 64
    %v1890 = vpop.permute.xlu0 %1889
    %v1892 = vsel %vm56, %v1890, %v1809
    %1894 = vrot.lane.b32.xlu0 %v1892, 16
    %v1895 = vpop.permute.xlu0 %1894
    %1898 = vrot.lane.b32.xlu0 %v934, 16
    %v1899 = vpop.permute.xlu0 %1898
    %1901 = vrot.lane.b32.xlu0 %v1892, 32
    %v1902 = vpop.permute.xlu0 %1901
    %v1904 = vsel %vm139, %v934, %v1895
    %v1905 = vsel %vm248, %v1904, %v1899
    %vm1906 = vcmask 392192
    %v1907 = vsel %vm1906, %v1905, %v1902
    %vm1908 = vcmask 517120
    %1909 = vst.msk [vmem:[#allocation5] sm:$0x3] %vm1908, %v1907
    %v1910 = vld [vmem:[%s4] sm:$0xf]
    %v1911 = vld [vmem:[%s4 + $0x4] sm:$0xf]
    %v1912 = vld [vmem:[%s4 + $0x8] sm:$0xf]
    %v1913 = vld [vmem:[%s4 + $0xc] sm:$0xf]
    %v1914 = vld [vmem:[%s4 + $0x10] sm:$0xf]
    %v1915 = vld [vmem:[%s4 + $0x14] sm:$0xf]
    %v1916 = vld [vmem:[%s4 + $0x18] sm:$0xf]
    %v1917 = vld [vmem:[%s4 + $0x1c] sm:$0xf]
    %v1918 = vld [vmem:[%s4 + $0x20] sm:$0xf]
    %v1919 = vld [vmem:[%s4 + $0x24] sm:$0xf]
    %v1920 = vld [vmem:[%s4 + $0x28] sm:$0xf]
    %v1921 = vld [vmem:[%s4 + $0x2c] sm:$0xf]
    %v1922 = vld [vmem:[%s4 + $0x30] sm:$0xf]
    %v1923 = vld [vmem:[%s4 + $0x34] sm:$0xf]
    %v1924 = vld [vmem:[%s4 + $0x38] sm:$0xf]
    %v1925 = vld [vmem:[%s4 + $0x3c] sm:$0xf]
    %v1926 = vld [vmem:[%s4 + $0x40] sm:$0xf]
    %v1927 = vld [vmem:[%s4 + $0x44] sm:$0xf]
    %v1928 = vld [vmem:[%s4 + $0x48] sm:$0xf]
    %v1929 = vld [vmem:[%s4 + $0x4c] sm:$0xf]
    %v1930 = vld [vmem:[%s4 + $0x50] sm:$0xf]
    %v1931 = vld [vmem:[%s4 + $0x54] sm:$0xf]
    %v1932 = vld [vmem:[%s4 + $0x58] sm:$0xf]
    %v1933 = vld [vmem:[%s4 + $0x5c] sm:$0xf]
    %v1934 = vld [vmem:[%s4 + $0x60] sm:$0xf]
    %v1935 = vld [vmem:[%s4 + $0x64] sm:$0xf]
    %v1936 = vld [vmem:[%s4 + $0x68] sm:$0xf]
    %v1937 = vld [vmem:[%s4 + $0x6c] sm:$0xf]
    %v1938 = vld [vmem:[%s4 + $0x70] sm:$0xf]
    %v1939 = vld [vmem:[%s4 + $0x74] sm:$0xf]
    %v1940 = vld [vmem:[%s4 + $0x78] sm:$0xf]
    %v1941 = vld [vmem:[%s4 + $0x7c] sm:$0xf]
    %v1942 = vpack.c.bf16 %v1907, %v1907
    %v1943 = vlaneseq
    %v1944 = vshrl.u32 %v1943, 7
    %v1945 = vsub.s32 4, %v1944
    %v1946 = vrot.slane %v34, %v1945
    %v1955 = vunpack.c.l.b16 %v1910
    %v1956 = vunpack.c.l.b16 %v1911
    %v1957 = vunpack.c.l.b16 %v1912
    %v1958 = vunpack.c.l.b16 %v1913
    %v1959 = vunpack.c.l.b16 %v1914
    %v1960 = vunpack.c.l.b16 %v1915
    %v1961 = vunpack.c.l.b16 %v1916
    %v1962 = vunpack.c.l.b16 %v1917
    %v1963 = vpack.c.b16 %v1956, %v1955
    %v1964 = vpack.c.b16 %v1958, %v1957
    %v1965 = vpack.c.b16 %v1960, %v1959
    %v1966 = vpack.c.b16 %v1962, %v1961
    %vm1971 = vcmask 523264
    %v1973 = vsel %vm1971, %v1942, 0
    %1975 = vmatprep.subr.bf16.mxu0 0
    %1976 = vmatpush1.bf16.msra.mxu0 %v1963
    %1977 = vmatprep.subr.bf16.mxu0 0
    %1978 = vmatpush1.bf16.msra.mxu0 %v1964
    %1979 = vmatprep.subr.bf16.mxu0 0
    %1980 = vmatpush1.bf16.msra.mxu0 %v1965
    %1981 = vmatprep.subr.bf16.mxu0 0
    %1982 = vmatpush1.bf16.msra.mxu0 %v1966
    %1983 = vmatprep.subr.bf16.mxu0 0
    %1984 = vmatpush1.bf16.msra.mxu0 0
    %1985 = vmatprep.subr.bf16.mxu0 0
    %1986 = vmatpush1.bf16.msra.mxu0 0
    %1987 = vmatprep.subr.bf16.mxu0 0
    %1988 = vmatpush1.bf16.msra.mxu0 0
    %1989 = vmatprep.subr.bf16.mxu0 0
    %1990 = vmatpush1.bf16.msra.mxu0 0
    %1991 = vmatprep.subr.bf16.mxu0 0
    %1992 = vmatpush1.bf16.msra.mxu0 0
    %1993 = vmatprep.subr.bf16.mxu0 0
    %1994 = vmatpush1.bf16.msra.mxu0 0
    %1995 = vmatprep.subr.bf16.mxu0 0
    %1996 = vmatpush1.bf16.msra.mxu0 0
    %1997 = vmatprep.subr.bf16.mxu0 0
    %1998 = vmatpush1.bf16.msra.mxu0 0
    %1999 = vmatprep.subr.bf16.mxu0 0
    %2000 = vmatpush1.bf16.msra.mxu0 0
    %2001 = vmatprep.subr.bf16.mxu0 0
    %2002 = vmatpush1.bf16.msra.mxu0 0
    %2003 = vmatprep.subr.bf16.mxu0 0
    %2004 = vmatpush1.bf16.msra.mxu0 0
    %2005 = vmatprep.subr.bf16.mxu0 0
    %2006 = vmatpush1.bf16.msra.mxu0 0
    %2007 = vmatprep.mubr.bf16.mxu0 0
    %2008 = vmatmul.mubr.bf16.gmra.mrb[0].mxu0 %v1973
    %v2009 = vpop.f32.mrb[0].mxu0
    %v2010 = vadd.f32 %v1946, %v2009
    %v2011 = vpop.f32.mrb[0].mxu0
    %v2012 = vpop.f32.mrb[0].mxu0
    %v2013 = vpop.f32.mrb[0].mxu0
    %2014 = vdwg.mxu0
    %v2015 = vmax.f32 %v2010, 0.0
    %v2016 = vpack.c.bf16 %v2015, %v2015
    %v2017 = vlaneseq
    %v2018 = vshrl.u32 %v2017, 7
    %v2019 = vsub.s32 5, %v2018
    %v2020 = vrot.slane %v34, %v2019
    %v2033 = vunpack.c.l.b16 %v1918
    %v2034 = vunpack.c.l.b16 %v1919
    %v2035 = vunpack.c.l.b16 %v1920
    %v2036 = vunpack.c.l.b16 %v1921
    %v2037 = vunpack.c.l.b16 %v1922
    %v2038 = vunpack.c.l.b16 %v1923
    %v2039 = vunpack.c.l.b16 %v1924
    %v2040 = vunpack.c.l.b16 %v1925
    %v2041 = vunpack.c.l.b16 %v1926
    %v2042 = vunpack.c.l.b16 %v1927
    %v2043 = vunpack.c.l.b16 %v1928
    %v2044 = vunpack.c.l.b16 %v1929
    %v2045 = vpack.c.b16 %v2034, %v2033
    %v2046 = vpack.c.b16 %v2036, %v2035
    %v2047 = vpack.c.b16 %v2038, %v2037
    %v2048 = vpack.c.b16 %v2040, %v2039
    %v2049 = vpack.c.b16 %v2042, %v2041
    %v2050 = vpack.c.b16 %v2044, %v2043
    %vm2057 = vcmask 785408
    %v2059 = vsel %vm2057, %v2016, 0
    %2061 = vmatprep.subr.bf16.mxu0 0
    %2062 = vmatpush1.bf16.msra.mxu0 %v2045
    %2063 = vmatprep.subr.bf16.mxu0 0
    %2064 = vmatpush1.bf16.msra.mxu0 %v2046
    %2065 = vmatprep.subr.bf16.mxu0 0
    %2066 = vmatpush1.bf16.msra.mxu0 %v2047
    %2067 = vmatprep.subr.bf16.mxu0 0
    %2068 = vmatpush1.bf16.msra.mxu0 %v2048
    %2069 = vmatprep.subr.bf16.mxu0 0
    %2070 = vmatpush1.bf16.msra.mxu0 %v2049
    %2071 = vmatprep.subr.bf16.mxu0 0
    %2072 = vmatpush1.bf16.msra.mxu0 %v2050
    %2073 = vmatprep.subr.bf16.mxu0 0
    %2074 = vmatpush1.bf16.msra.mxu0 0
    %2075 = vmatprep.subr.bf16.mxu0 0
    %2076 = vmatpush1.bf16.msra.mxu0 0
    %2077 = vmatprep.subr.bf16.mxu0 0
    %2078 = vmatpush1.bf16.msra.mxu0 0
    %2079 = vmatprep.subr.bf16.mxu0 0
    %2080 = vmatpush1.bf16.msra.mxu0 0
    %2081 = vmatprep.subr.bf16.mxu0 0
    %2082 = vmatpush1.bf16.msra.mxu0 0
    %2083 = vmatprep.subr.bf16.mxu0 0
    %2084 = vmatpush1.bf16.msra.mxu0 0
    %2085 = vmatprep.subr.bf16.mxu0 0
    %2086 = vmatpush1.bf16.msra.mxu0 0
    %2087 = vmatprep.subr.bf16.mxu0 0
    %2088 = vmatpush1.bf16.msra.mxu0 0
    %2089 = vmatprep.subr.bf16.mxu0 0
    %2090 = vmatpush1.bf16.msra.mxu0 0
    %2091 = vmatprep.subr.bf16.mxu0 0
    %2092 = vmatpush1.bf16.msra.mxu0 0
    %2093 = vmatprep.mubr.bf16.mxu0 0
    %2094 = vmatmul.mubr.bf16.gmra.mrb[0].mxu0 %v2059
    %v2095 = vpop.f32.mrb[0].mxu0
    %v2096 = vadd.f32 %v2020, %v2095
    %v2097 = vpop.f32.mrb[0].mxu0
    %v2098 = vpop.f32.mrb[0].mxu0
    %v2099 = vpop.f32.mrb[0].mxu0
    %2100 = vdwg.mxu0
    %v2101 = vmax.f32 %v2096, 0.0
    %v2102 = vpack.c.bf16 %v2101, %v2101
    %v2103 = vlaneseq
    %v2104 = vshrl.u32 %v2103, 7
    %v2105 = vsub.s32 6, %v2104
    %v2106 = vrot.slane %v34, %v2105
    %v2115 = vunpack.c.l.b16 %v1930
    %v2116 = vunpack.c.l.b16 %v1931
    %v2117 = vunpack.c.l.b16 %v1932
    %v2118 = vunpack.c.l.b16 %v1933
    %v2119 = vunpack.c.l.b16 %v1934
    %v2120 = vunpack.c.l.b16 %v1935
    %v2121 = vunpack.c.l.b16 %v1936
    %v2122 = vunpack.c.l.b16 %v1937
    %v2123 = vpack.c.b16 %v2116, %v2115
    %v2124 = vpack.c.b16 %v2118, %v2117
    %v2125 = vpack.c.b16 %v2120, %v2119
    %v2126 = vpack.c.b16 %v2122, %v2121
    %v2132 = vsel %vm1971, %v2102, 0
    %2134 = vmatprep.subr.bf16.mxu0 0
    %2135 = vmatpush1.bf16.msra.mxu0 %v2123
    %2136 = vmatprep.subr.bf16.mxu0 0
    %2137 = vmatpush1.bf16.msra.mxu0 %v2124
    %2138 = vmatprep.subr.bf16.mxu0 0
    %2139 = vmatpush1.bf16.msra.mxu0 %v2125
    %2140 = vmatprep.subr.bf16.mxu0 0
    %2141 = vmatpush1.bf16.msra.mxu0 %v2126
    %2142 = vmatprep.subr.bf16.mxu0 0
    %2143 = vmatpush1.bf16.msra.mxu0 0
    %2144 = vmatprep.subr.bf16.mxu0 0
    %2145 = vmatpush1.bf16.msra.mxu0 0
    %2146 = vmatprep.subr.bf16.mxu0 0
    %2147 = vmatpush1.bf16.msra.mxu0 0
    %2148 = vmatprep.subr.bf16.mxu0 0
    %2149 = vmatpush1.bf16.msra.mxu0 0
    %2150 = vmatprep.subr.bf16.mxu0 0
    %2151 = vmatpush1.bf16.msra.mxu0 0
    %2152 = vmatprep.subr.bf16.mxu0 0
    %2153 = vmatpush1.bf16.msra.mxu0 0
    %2154 = vmatprep.subr.bf16.mxu0 0
    %2155 = vmatpush1.bf16.msra.mxu0 0
    %2156 = vmatprep.subr.bf16.mxu0 0
    %2157 = vmatpush1.bf16.msra.mxu0 0
    %2158 = vmatprep.subr.bf16.mxu0 0
    %2159 = vmatpush1.bf16.msra.mxu0 0
    %2160 = vmatprep.subr.bf16.mxu0 0
    %2161 = vmatpush1.bf16.msra.mxu0 0
    %2162 = vmatprep.subr.bf16.mxu0 0
    %2163 = vmatpush1.bf16.msra.mxu0 0
    %2164 = vmatprep.subr.bf16.mxu0 0
    %2165 = vmatpush1.bf16.msra.mxu0 0
    %2166 = vmatprep.mubr.bf16.mxu0 0
    %2167 = vmatmul.mubr.bf16.gmra.mrb[0].mxu0 %v2132
    %v2168 = vpop.f32.mrb[0].mxu0
    %v2169 = vadd.f32 %v2106, %v2168
    %v2170 = vpop.f32.mrb[0].mxu0
    %v2171 = vpop.f32.mrb[0].mxu0
    %v2172 = vpop.f32.mrb[0].mxu0
    %2173 = vdwg.mxu0
    %v2174 = vmax.f32 %v2169, 0.0
    %v2175 = vpack.c.bf16 %v2174, %v2174
    %v2176 = vlaneseq
    %v2177 = vshrl.u32 %v2176, 7
    %v2178 = vsub.s32 7, %v2177
    %v2179 = vrot.slane %v34, %v2178
    %v2184 = vunpack.c.l.b16 %v1938
    %v2185 = vunpack.c.l.b16 %v1939
    %v2186 = vunpack.c.l.b16 %v1940
    %v2187 = vunpack.c.l.b16 %v1941
    %v2188 = vpack.c.b16 %v2185, %v2184
    %v2189 = vpack.c.b16 %v2187, %v2186
    %v2193 = vsel %vm248, %v2175, 0
    %2195 = vmatprep.subr.bf16.mxu0 0
    %2196 = vmatpush1.bf16.msra.mxu0 %v2188
    %2197 = vmatprep.subr.bf16.mxu0 0
    %2198 = vmatpush1.bf16.msra.mxu0 %v2189
    %2199 = vmatprep.subr.bf16.mxu0 0
    %2200 = vmatpush1.bf16.msra.mxu0 0
    %2201 = vmatprep.subr.bf16.mxu0 0
    %2202 = vmatpush1.bf16.msra.mxu0 0
    %2203 = vmatprep.subr.bf16.mxu0 0
    %2204 = vmatpush1.bf16.msra.mxu0 0
    %2205 = vmatprep.subr.bf16.mxu0 0
    %2206 = vmatpush1.bf16.msra.mxu0 0
    %2207 = vmatprep.subr.bf16.mxu0 0
    %2208 = vmatpush1.bf16.msra.mxu0 0
    %2209 = vmatprep.subr.bf16.mxu0 0
    %2210 = vmatpush1.bf16.msra.mxu0 0
    %2211 = vmatprep.subr.bf16.mxu0 0
    %2212 = vmatpush1.bf16.msra.mxu0 0
    %2213 = vmatprep.subr.bf16.mxu0 0
    %2214 = vmatpush1.bf16.msra.mxu0 0
    %2215 = vmatprep.subr.bf16.mxu0 0
    %2216 = vmatpush1.bf16.msra.mxu0 0
    %2217 = vmatprep.subr.bf16.mxu0 0
    %2218 = vmatpush1.bf16.msra.mxu0 0
    %2219 = vmatprep.subr.bf16.mxu0 0
    %2220 = vmatpush1.bf16.msra.mxu0 0
    %2221 = vmatprep.subr.bf16.mxu0 0
    %2222 = vmatpush1.bf16.msra.mxu0 0
    %2223 = vmatprep.subr.bf16.mxu0 0
    %2224 = vmatpush1.bf16.msra.mxu0 0
    %2225 = vmatprep.subr.bf16.mxu0 0
    %2226 = vmatpush1.bf16.msra.mxu0 0
    %2227 = vmatprep.mubr.bf16.mxu0 0
    %2228 = vmatmul.mubr.bf16.gmra.mrb[0].mxu0 %v2193
    %v2229 = vpop.f32.mrb[0].mxu0
    %v2230 = vadd.f32 %v2179, %v2229
    %v2231 = vpop.f32.mrb[0].mxu0
    %v2232 = vpop.f32.mrb[0].mxu0
    %v2233 = vpop.f32.mrb[0].mxu0
    %2234 = vdwg.mxu0
    %vm2235 = vcmask 25600
    %2236 = vst.msk [vmem:[#allocation3] sm:$0x3] %vm2235, %v2230
    // Predicated region
    $region22: #{tpu_custom_call.1} parent=1 // pred_check
      _
    $region23: #{tpu_custom_call.1} parent=1 // pred_check_branch
      %2238 = sbr.rel (0) target = $region25
    $region24: #{tpu_custom_call.1} parent=1 // pred_region
      %s2240 = ssub.s32 32, 32
      %2241 = vsyncadd [#allocation4], %s2240
      %s2243 = sshll.u32 [#allocation3], 4
      %s2244 = int_to_ptr.vmem [resolvable:$true] %s2243
      %2246 = dma.vmem_to_hbm [thread:$0]  %s2244, 32, %s5, [#allocation4]
    $region25: #{tpu_custom_call.1} parent=1 // pred_fallthru
      _
    // Predicated region
    $region26: #{tpu_custom_call.1} parent=1 // pred_check
      _
    $region27: #{tpu_custom_call.1} parent=1 // pred_check_branch
      %2248 = sbr.rel (0) target = $region29
    $region28: #{tpu_custom_call.1} parent=1 // pred_region
      %s2250 = ssub.s32 32, 32
      %2251 = vsyncadd [#allocation6], %s2250
      %s2253 = sshll.u32 [#allocation5], 4
      %s2254 = int_to_ptr.vmem [resolvable:$true] %s2253
      %2256 = dma.vmem_to_hbm [thread:$0]  %s2254, 32, %s6, [#allocation6]
    $region29: #{tpu_custom_call.1} parent=1 // pred_fallthru
      _
    // Predicated region
    $region30: #{tpu_custom_call.1} parent=1 // pred_check
      _
    $region31: #{tpu_custom_call.1} parent=1 // pred_check_branch
      %2258 = sbr.rel (0) target = $region33
    $region32: #{tpu_custom_call.1} parent=1 // pred_region
      %2259 = dma.done [#allocation4], 32
    $region33: #{tpu_custom_call.1} parent=1 // pred_fallthru
      _
    // Predicated region
    $region34: #{tpu_custom_call.1} parent=1 // pred_check
      _
    $region35: #{tpu_custom_call.1} parent=1 // pred_check_branch
      %2261 = sbr.rel (0) target = $region37
    $region36: #{tpu_custom_call.1} parent=1 // pred_region
      %2262 = dma.done [#allocation6], 32
    $region37: #{tpu_custom_call.1} parent=1 // pred_fallthru
      _
    %2263 = vsyncpa [#allocation4], 1
    %2264 = vsyncpa [#allocation6], 1

</llo_original>
